<compile_context>
chip_gen: v7x
topology: tpu7x:2x2x1
jax: 0.10.0
libtpu: 0.0.40
codegen_flags: <defaults>
</compile_context>

<pallas_src>
import math
import numpy as np
import jax
import jax.numpy as jnp
from jax.experimental import pallas as pl
from jax.experimental.pallas import tpu as pltpu

# ----- hyperparameters: DWN(width=32, block_num=2, fc_num=1, fc_channel=32) -----
WIDTH = 32
BLOCK_NUM = 2
FC_NUM = 1
FC_CHANNEL = 32
IN_TS_FE = 3
TS_LEN = 46
IN_CHANNEL = 18 + 12                      # 18 tabular + flattened conv out (4*3)
FC_IN = BLOCK_NUM * WIDTH + IN_CHANNEL    # 94
BN_EPS = 1e-5
K = 5                                     # conv kernel size
PAD = 2                                   # replicate padding
FILTERS = [32, 16, 4]
POOL_WIN = [2, 2, 4]

FEAT_PAD = 128                            # lane-padded activation scratch width
BASE_OFF = BLOCK_NUM * WIDTH              # 64: where the base features live in scratch
OUT_PAD = 128                             # lane-padded output width


# ============================ folded-operator construction ============================

def conv_operator(w, L):
    """Dense operator for Conv1d(k=5, pad=2, padding_mode='replicate').

    w: (Cout, Cin, K) numpy.  Channel-major flattening (feature index = c*L + l):
      (x_flat @ M)[co*L + lo] = sum_{ci,k} w[co,ci,k] * x[ci, clip(lo + k - PAD, 0, L-1)]
    """
    cout, cin, kk = w.shape
    M = np.zeros((cin * L, cout * L), np.float32)
    for co in range(cout):
        for ci in range(cin):
            for k in range(kk):
                for lo in range(L):
                    li = min(max(lo + k - PAD, 0), L - 1)
                    M[ci * L + li, co * L + lo] += w[co, ci, k]
    return M


def pool_operator(c, L, win, ceil_mode=False):
    """Block-diagonal avg_pool1d operator (C*L, C*Lout), channel-major flattening.

    ceil_mode: last (clipped) window is divided by its true element count, matching
    PyTorch avg_pool1d with padding=0.
    """
    lout = math.ceil(L / win) if ceil_mode else L // win
    P = np.zeros((c * L, c * lout), np.float32)
    for ch in range(c):
        for j in range(lout):
            s = j * win
            e = min(s + win, L)
            P[ch * L + s:ch * L + e, ch * lout + j] = 1.0 / (e - s)
    return P, lout


# ============================ fused Pallas kernel ============================

def make_dwn_kernel(block_num, fc_num):
    """Kernel over one batch tile.  Ref order:
       x, M1, b1, M2, b2, M3, b3, P3', pb3, nsc1, nsh1,
       [dense: (W1pad, b1, W2, b2, W3, b3)] * block_num,
       [fc: (Wpad/W, b)] * fc_num,
       ow_pad, ob_pad, o_ref, feat_scratch
    """
    def kernel(*refs):
        (x_ref, m1, b1, m2, b2, m3, b3, p3, pb3, nsc1, nsh1) = refs[:11]
        idx = 11
        dense = [refs[idx + 6 * j: idx + 6 * (j + 1)] for j in range(block_num)]
        idx += 6 * block_num
        fc = [refs[idx + 2 * j: idx + 2 * (j + 1)] for j in range(fc_num)]
        idx += 2 * fc_num
        ow, ob = refs[idx], refs[idx + 1]
        o_ref = refs[idx + 2]
        feat = refs[idx + 3]                      # VMEM scratch (TB, FEAT_PAD) f32

        def mm(a, w_ref):
            # bf16 MXU operands, f32 accumulation.
            return jnp.dot(a.astype(jnp.bfloat16), w_ref[...],
                           preferred_element_type=jnp.float32)

        x = x_ref[...]                            # (TB, 156) f32
        x1 = x[:, :18]                            # tabular features
        x2 = x[:, 18:18 + IN_TS_FE * TS_LEN]      # (TB, 138) == (B,3,46) row-major

        # ---- ConvBlock: conv+BN+ReLU folded, pools folded into next conv / P3 ----
        # Intermediates kept bf16 after ReLU (they feed a bf16 matmul anyway).
        h = jnp.maximum(mm(x2, m1) + b1[...], 0.0).astype(jnp.bfloat16)   # (TB, 1472)
        h = jnp.maximum(mm(h, m2) + b2[...], 0.0).astype(jnp.bfloat16)    # (TB, 368)
        h = jnp.maximum(mm(h, m3) + b3[...], 0.0).astype(jnp.bfloat16)    # (TB, 44)
        # pool3 with top-level BN (conv half) folded in: conv_out already normalized.
        convn = mm(h, p3) + pb3[...]                                      # (TB, 12)

        # ---- base features: x1 half of the top-level BatchNorm1d(30) ----
        x1n = x1 * nsc1[...] + nsh1[...]                                  # (TB, 18)

        # ---- write the full lane-padded scratch in ONE full-width store ----
        # Layout: [blockN_out | ... | block1_out | base (x1n, convn) | zero pad]
        # Zero columns are written explicitly (never stale VMEM -> no NaN hazard).
        tb = x_ref.shape[0]
        feat[...] = jnp.concatenate(
            [jnp.zeros((tb, BASE_OFF), jnp.float32),
             x1n, convn,
             jnp.zeros((tb, FEAT_PAD - BASE_OFF - IN_CHANNEL), jnp.float32)],
            axis=1)

        # ---- DenseBlocks: relu(bn(linear)) x3 then cat((block_out, block_in)) ----
        # First-layer weights are zero-padded to FEAT_PAD input rows, so each block
        # reads the scratch full-width (no lane-offset reads / masked loads).
        for bk, (w1, c1, w2, c2, w3, c3) in enumerate(dense):
            hh = jnp.maximum(mm(feat[...], w1) + c1[...], 0.0)
            hh = jnp.maximum(mm(hh, w2) + c2[...], 0.0)
            hh = jnp.maximum(mm(hh, w3) + c3[...], 0.0)
            off = (block_num - 1 - bk) * WIDTH
            feat[:, off:off + WIDTH] = hh

        # ---- SingleFcBlock(s): relu(linear(x)); post-ReLU BN folded into next linear ----
        out = feat[...]                                   # (TB, FEAT_PAD)
        for (w, c) in fc:
            out = jnp.maximum(mm(out, w) + c[...], 0.0)

        # ---- final Linear(fc_channel, 1), lane-padded to OUT_PAD columns ----
        o_ref[...] = mm(out, ow) + ob[...]
        # TODO(synk): Dropout is identity (eval mode); BatchNorm uses running stats only.
    return kernel


def _round_up(x, m):
    return ((x + m - 1) // m) * m


def dwn_forward(x, params, batch_tile=512, min_steps=2):
    """x: (B, 156) float32 -> (B, 1) float32.

    batch_tile: max rows per grid step.  512 is safe on all generations (v7x has
    64 MiB VMEM); on v5e/v6e (128 MiB) large batches can use 1024-2048.
    min_steps: lower bound on grid steps so v7x's 2 TensorCores both get work
    (2 minimum, 4-8 also hides the one-time weight DMA).
    """
    B = x.shape[0]
    flat = params["flat"]

    # Sublane-aligned tile derived from B (not a fixed 512) -> padding waste < 1 tile.
    tb = min(batch_tile, max(8, _round_up(pl.cdiv(B, min_steps), 8)))
    b_pad = _round_up(B, tb)
    if b_pad != B:
        x = jnp.pad(x, ((0, b_pad - B), (0, 0)))

    in_specs = [pl.BlockSpec((tb, x.shape[1]), lambda i: (i, 0))]
    for w in flat:  # weights: full blocks, constant index_map -> VMEM-resident
        in_specs.append(pl.BlockSpec(w.shape, lambda i, n=w.ndim: (0,) * n))
    out_specs = pl.BlockSpec((tb, OUT_PAD), lambda i: (i, 0))

    y = pl.pallas_call(
        make_dwn_kernel(BLOCK_NUM, FC_NUM),
        grid=(b_pad // tb,),
        in_specs=in_specs,
        out_specs=out_specs,
        out_shape=jax.ShapeDtypeStruct((b_pad, OUT_PAD), jnp.float32),
        scratch_shapes=[pltpu.VMEM((tb, FEAT_PAD), jnp.float32)],
        compiler_params=pltpu.CompilerParams(
            dimension_semantics=("parallel",),           # shard batch tiles across TCs (v7x)
            vmem_limit_bytes=min(100 * 1024 * 1024,
                                 32 * 1024 * 1024 + tb * 8192)),
    )(x, *flat)
    return y[:B, :1]


# ============================ parameter setup ============================

def make_params():
    key = jax.random.PRNGKey(0)
    keys = iter(jax.random.split(key, 256))
    nk = lambda: next(keys)

    def nrm(shape, s=0.1):
        return np.asarray(s * jax.random.normal(nk(), shape, dtype=jnp.float32))

    def init_bn(c):
        gamma = 1.0 + nrm((c,))
        beta = nrm((c,))
        mean = nrm((c,))
        var = 1.0 + np.abs(nrm((c,)))
        scale = (gamma / np.sqrt(var + BN_EPS)).astype(np.float32)
        shift = (beta - mean * scale).astype(np.float32)
        return scale, shift

    W_DT = jnp.bfloat16                      # matmul operands
    raw = {"conv": [], "dense": [], "fc": []}
    flat = []

    # ---- ConvBlock folded: M_i = (prev_pool o conv_i) * bn_scale, bias folded too ----
    chans = [IN_TS_FE] + FILTERS
    L = TS_LEN
    prev_pool = None
    for i in range(3):
        cin, cout = chans[i], chans[i + 1]
        w = nrm((cout, cin, K))               # PyTorch Conv1d weight layout (O, C, K)
        b = nrm((cout,))
        scale, shift = init_bn(cout)
        raw["conv"].append((jnp.asarray(w), jnp.asarray(b),
                            jnp.asarray(scale), jnp.asarray(shift)))

        op = conv_operator(w, L)              # (cin*L, cout*L)
        if prev_pool is not None:
            op = prev_pool @ op               # fold preceding avg_pool into this conv
        scale_f = np.repeat(scale, L)
        shift_f = np.repeat(shift, L)
        bias_f = np.repeat(b, L)
        flat.append(jnp.asarray(op * scale_f[None, :], W_DT))                           # M_i
        flat.append(jnp.asarray((bias_f * scale_f + shift_f)[None, :], jnp.float32))    # b_i
        prev_pool, L = pool_operator(cout, L, POOL_WIN[i], ceil_mode=(i == 2))

    # ---- top-level BatchNorm1d(30): conv half folded into P3, x1 half kept affine ----
    nsc, nsh = init_bn(IN_CHANNEL)
    raw["norm"] = (jnp.asarray(nsc), jnp.asarray(nsh))
    flat.append(jnp.asarray(prev_pool * nsc[18:][None, :], W_DT))        # P3' (44, 12)
    flat.append(jnp.asarray(nsh[18:].reshape(1, -1), jnp.float32))       # pb3 (1, 12)
    flat.append(jnp.asarray(nsc[:18].reshape(1, -1), jnp.float32))       # nsc1 (1, 18)
    flat.append(jnp.asarray(nsh[:18].reshape(1, -1), jnp.float32))       # nsh1 (1, 18)

    # ---- Dense blocks: relu(bn(linear(x))) x3, BN folded into W/b ----
    # First layer's weight is zero-padded to FEAT_PAD input rows at the block's input
    # offset in the feat scratch, so the kernel reads feat full-width.
    for bk in range(BLOCK_NUM):
        din0 = bk * WIDTH + IN_CHANNEL
        in_off = (BLOCK_NUM - bk) * WIDTH
        block_raw = []
        for li, (di, do) in enumerate([(din0, WIDTH), (WIDTH, WIDTH), (WIDTH, WIDTH)]):
            w = nrm((do, di))
            b = nrm((do,))
            scale, shift = init_bn(do)
            block_raw.append((jnp.asarray(w), jnp.asarray(b),
                              jnp.asarray(scale), jnp.asarray(shift)))
            wt = (w.T * scale[None, :]).astype(np.float32)          # (di, do)
            bt = (b * scale + shift).reshape(1, -1).astype(np.float32)
            if li == 0:
                wpad = np.zeros((FEAT_PAD, do), np.float32)
                wpad[in_off:in_off + di, :] = wt
                wt = wpad
            flat.append(jnp.asarray(wt, W_DT))
            flat.append(jnp.asarray(bt, jnp.float32))
        raw["dense"].append(block_raw)

    # ---- fc layers: bn(relu(linear(x))); each post-ReLU BN folded into the NEXT linear ----
    prev_sc = None
    prev_sh = None
    din = FC_IN
    for bk in range(FC_NUM):
        if bk > 0:
            din = FC_CHANNEL
        w = nrm((FC_CHANNEL, din))
        b = nrm((FC_CHANNEL,))
        scale, shift = init_bn(FC_CHANNEL)
        raw["fc"].append((jnp.asarray(w), jnp.asarray(b),
                          jnp.asarray(scale), jnp.asarray(shift)))
        wt = w.T.astype(np.float32)                              # (din, FC_CHANNEL)
        bt = b.astype(np.float32)
        if prev_sc is not None:                                  # absorb previous fc's BN
            bt = bt + prev_sh @ wt
            wt = prev_sc[:, None] * wt
        if bk == 0:                                              # pad to feat scratch width
            wpad = np.zeros((FEAT_PAD, FC_CHANNEL), np.float32)
            wpad[:din, :] = wt
            wt = wpad
        flat.append(jnp.asarray(wt, W_DT))
        flat.append(jnp.asarray(bt.reshape(1, -1), jnp.float32))
        prev_sc, prev_sh = scale, shift

    # ---- final Linear(fc_channel, 1), absorbing the last fc's BN; lane-padded output ----
    w = nrm((1, FC_CHANNEL))
    b = nrm((1,))
    raw["out"] = (jnp.asarray(w), jnp.asarray(b))
    wt = w.T.astype(np.float32)                                  # (FC_CHANNEL, 1)
    bt = b.astype(np.float32)                                    # (1,)
    if prev_sc is not None:
        bt = bt + prev_sh @ wt
        wt = prev_sc[:, None] * wt
    ow = np.zeros((FC_CHANNEL, OUT_PAD), np.float32)
    ow[:, 0:1] = wt
    ob = np.zeros((1, OUT_PAD), np.float32)
    ob[0, 0] = float(np.asarray(bt).reshape(-1)[0])
    flat.append(jnp.asarray(ow, W_DT))
    flat.append(jnp.asarray(ob, jnp.float32))

    return {"flat": flat, "raw": raw}


# ============================ pure-JAX reference (unfolded graph) ============================

def dwn_reference(x, raw):
    HI = jax.lax.Precision.HIGHEST
    B = x.shape[0]
    x1 = x[:, :18]
    h = x[:, 18:18 + IN_TS_FE * TS_LEN].reshape(B, IN_TS_FE, TS_LEN)

    for i, (w, b, sc, sh) in enumerate(raw["conv"]):
        L = h.shape[2]
        hp = jnp.pad(h, ((0, 0), (0, 0), (PAD, PAD)), mode="edge")
        y = sum(jnp.einsum("oc,bcl->bol", w[:, :, k], hp[:, :, k:k + L], precision=HI)
                for k in range(K))
        y = y + b[None, :, None]
        y = jnp.maximum(y * sc[None, :, None] + sh[None, :, None], 0.0)
        win = POOL_WIN[i]
        if i < 2:
            lout = L // win
            y = y[:, :, :lout * win].reshape(B, y.shape[1], lout, win).mean(-1)
        else:
            lout = math.ceil(L / win)
            y = jnp.concatenate(
                [y[:, :, j * win:min((j + 1) * win, L)].mean(-1, keepdims=True)
                 for j in range(lout)], axis=-1)
        h = y

    out = jnp.concatenate([x1, h.reshape(B, -1)], axis=1)
    nsc, nsh = raw["norm"]
    out = out * nsc[None, :] + nsh[None, :]

    for block in raw["dense"]:
        hh = out
        for (w, b, sc, sh) in block:
            hh = jnp.maximum(
                (jnp.matmul(hh, w.T, precision=HI) + b[None, :]) * sc[None, :] + sh[None, :],
                0.0)
        out = jnp.concatenate([hh, out], axis=1)

    for (w, b, sc, sh) in raw["fc"]:
        out = jnp.maximum(jnp.matmul(out, w.T, precision=HI) + b[None, :], 0.0)
        out = out * sc[None, :] + sh[None, :]

    w, b = raw["out"]
    return jnp.matmul(out, w.T, precision=HI) + b[None, :]


# ============================ main ============================

if __name__ == "__main__":
    B = 4
    x = jax.random.normal(jax.random.PRNGKey(0), (B, 156), dtype=jnp.float32)

    params = make_params()
    y = dwn_forward(x, params)
    y = jax.block_until_ready(y)
    assert y.shape == (B, 1) and y.dtype == jnp.float32

    # Numerical sanity check of the folded/fused bf16-MXU kernel against the unfolded
    # f32 graph (bf16 operands + f32 accumulation -> a few-percent tolerance).
    y_ref = jax.block_until_ready(dwn_reference(x, params["raw"]))
    np.testing.assert_allclose(np.asarray(y), np.asarray(y_ref), rtol=6e-2, atol=2.5e-2)

    print("KERNEL_OK")
</pallas_src>

<mosaic_0001>
module attributes {stable_mosaic.version = 11 : i64} {
  func.func @kernel(%arg0: i32, %arg1: memref<8x156xf32, #tpu.memory_space<vmem>>, %arg2: memref<138x1472xbf16, #tpu.memory_space<vmem>>, %arg3: memref<1x1472xf32, #tpu.memory_space<vmem>>, %arg4: memref<1472x368xbf16, #tpu.memory_space<vmem>>, %arg5: memref<1x368xf32, #tpu.memory_space<vmem>>, %arg6: memref<368x44xbf16, #tpu.memory_space<vmem>>, %arg7: memref<1x44xf32, #tpu.memory_space<vmem>>, %arg8: memref<44x12xbf16, #tpu.memory_space<vmem>>, %arg9: memref<1x12xf32, #tpu.memory_space<vmem>>, %arg10: memref<1x18xf32, #tpu.memory_space<vmem>>, %arg11: memref<1x18xf32, #tpu.memory_space<vmem>>, %arg12: memref<128x32xbf16, #tpu.memory_space<vmem>>, %arg13: memref<1x32xf32, #tpu.memory_space<vmem>>, %arg14: memref<32x32xbf16, #tpu.memory_space<vmem>>, %arg15: memref<1x32xf32, #tpu.memory_space<vmem>>, %arg16: memref<32x32xbf16, #tpu.memory_space<vmem>>, %arg17: memref<1x32xf32, #tpu.memory_space<vmem>>, %arg18: memref<128x32xbf16, #tpu.memory_space<vmem>>, %arg19: memref<1x32xf32, #tpu.memory_space<vmem>>, %arg20: memref<32x32xbf16, #tpu.memory_space<vmem>>, %arg21: memref<1x32xf32, #tpu.memory_space<vmem>>, %arg22: memref<32x32xbf16, #tpu.memory_space<vmem>>, %arg23: memref<1x32xf32, #tpu.memory_space<vmem>>, %arg24: memref<128x32xbf16, #tpu.memory_space<vmem>>, %arg25: memref<1x32xf32, #tpu.memory_space<vmem>>, %arg26: memref<32x128xbf16, #tpu.memory_space<vmem>>, %arg27: memref<1x128xf32, #tpu.memory_space<vmem>>, %arg28: memref<8x128xf32, #tpu.memory_space<vmem>>, %arg29: memref<8x128xf32, #tpu.memory_space<vmem>>) attributes {dimension_semantics = [#tpu.dimension_semantics<parallel>], iteration_bounds = array<i64: 1>, scalar_prefetch = 0 : i64, scratch_operands = 1 : i64, tpu.core_type = #tpu.core_type<tc>, window_params = [{transform_indices = @transform_0, window_bounds = array<i64: 8, 156>}, {pipeline_mode = #tpu.pipeline_mode<synchronous>, transform_indices = @transform_1, window_bounds = array<i64: 138, 1472>}, {pipeline_mode = #tpu.pipeline_mode<synchronous>, transform_indices = @transform_2, window_bounds = array<i64: 1, 1472>}, {pipeline_mode = #tpu.pipeline_mode<synchronous>, transform_indices = @transform_3, window_bounds = array<i64: 1472, 368>}, {pipeline_mode = #tpu.pipeline_mode<synchronous>, transform_indices = @transform_4, window_bounds = array<i64: 1, 368>}, {pipeline_mode = #tpu.pipeline_mode<synchronous>, transform_indices = @transform_5, window_bounds = array<i64: 368, 44>}, {pipeline_mode = #tpu.pipeline_mode<synchronous>, transform_indices = @transform_6, window_bounds = array<i64: 1, 44>}, {pipeline_mode = #tpu.pipeline_mode<synchronous>, transform_indices = @transform_7, window_bounds = array<i64: 44, 12>}, {pipeline_mode = #tpu.pipeline_mode<synchronous>, transform_indices = @transform_8, window_bounds = array<i64: 1, 12>}, {pipeline_mode = #tpu.pipeline_mode<synchronous>, transform_indices = @transform_9, window_bounds = array<i64: 1, 18>}, {pipeline_mode = #tpu.pipeline_mode<synchronous>, transform_indices = @transform_10, window_bounds = array<i64: 1, 18>}, {pipeline_mode = #tpu.pipeline_mode<synchronous>, transform_indices = @transform_11, window_bounds = array<i64: 128, 32>}, {pipeline_mode = #tpu.pipeline_mode<synchronous>, transform_indices = @transform_12, window_bounds = array<i64: 1, 32>}, {pipeline_mode = #tpu.pipeline_mode<synchronous>, transform_indices = @transform_13, window_bounds = array<i64: 32, 32>}, {pipeline_mode = #tpu.pipeline_mode<synchronous>, transform_indices = @transform_14, window_bounds = array<i64: 1, 32>}, {pipeline_mode = #tpu.pipeline_mode<synchronous>, transform_indices = @transform_15, window_bounds = array<i64: 32, 32>}, {pipeline_mode = #tpu.pipeline_mode<synchronous>, transform_indices = @transform_16, window_bounds = array<i64: 1, 32>}, {pipeline_mode = #tpu.pipeline_mode<synchronous>, transform_indices = @transform_17, window_bounds = array<i64: 128, 32>}, {pipeline_mode = #tpu.pipeline_mode<synchronous>, transform_indices = @transform_18, window_bounds = array<i64: 1, 32>}, {pipeline_mode = #tpu.pipeline_mode<synchronous>, transform_indices = @transform_19, window_bounds = array<i64: 32, 32>}, {pipeline_mode = #tpu.pipeline_mode<synchronous>, transform_indices = @transform_20, window_bounds = array<i64: 1, 32>}, {pipeline_mode = #tpu.pipeline_mode<synchronous>, transform_indices = @transform_21, window_bounds = array<i64: 32, 32>}, {pipeline_mode = #tpu.pipeline_mode<synchronous>, transform_indices = @transform_22, window_bounds = array<i64: 1, 32>}, {pipeline_mode = #tpu.pipeline_mode<synchronous>, transform_indices = @transform_23, window_bounds = array<i64: 128, 32>}, {pipeline_mode = #tpu.pipeline_mode<synchronous>, transform_indices = @transform_24, window_bounds = array<i64: 1, 32>}, {pipeline_mode = #tpu.pipeline_mode<synchronous>, transform_indices = @transform_25, window_bounds = array<i64: 32, 128>}, {pipeline_mode = #tpu.pipeline_mode<synchronous>, transform_indices = @transform_26, window_bounds = array<i64: 1, 128>}, {transform_indices = @transform_27, window_bounds = array<i64: 8, 128>}]} {
    %c0 = arith.constant 0 : index
    %c0_0 = arith.constant 0 : index
    %0 = vector.load %arg1[%c0, %c0_0] : memref<8x156xf32, #tpu.memory_space<vmem>>, vector<8x156xf32>
    %1 = vector.extract_strided_slice %0 {offsets = [0, 0], sizes = [8, 18], strides = [1, 1]} : vector<8x156xf32> to vector<8x18xf32>
    %2 = vector.extract_strided_slice %0 {offsets = [0, 18], sizes = [8, 138], strides = [1, 1]} : vector<8x156xf32> to vector<8x138xf32>
    %3 = arith.truncf %2 : vector<8x138xf32> to vector<8x138xbf16>
    %c0_1 = arith.constant 0 : index
    %c0_2 = arith.constant 0 : index
    %4 = vector.load %arg2[%c0_1, %c0_2] : memref<138x1472xbf16, #tpu.memory_space<vmem>>, vector<138x1472xbf16>
    %cst = arith.constant dense<0.000000e+00> : vector<8x1472xf32>
    %5 = tpu.matmul %3, %4, %cst {dimension_numbers = #tpu.dot_dimension_numbers<[1], [0], [0], [1], [0, 0, 1, 1], [], []>} : vector<8x138xbf16>, vector<138x1472xbf16>, vector<8x1472xf32> -> vector<8x1472xf32>
    %c0_3 = arith.constant 0 : index
    %c0_4 = arith.constant 0 : index
    %6 = vector.load %arg3[%c0_3, %c0_4] : memref<1x1472xf32, #tpu.memory_space<vmem>>, vector<1x1472xf32>
    %7 = vector.broadcast %6 : vector<1x1472xf32> to vector<8x1472xf32>
    %8 = arith.addf %5, %7 : vector<8x1472xf32>
    %cst_5 = arith.constant 0.000000e+00 : f32
    %9 = vector.broadcast %cst_5 : f32 to vector<8x1472xf32>
    %10 = arith.maximumf %8, %9 : vector<8x1472xf32>
    %11 = arith.truncf %10 : vector<8x1472xf32> to vector<8x1472xbf16>
    %c0_6 = arith.constant 0 : index
    %c0_7 = arith.constant 0 : index
    %12 = vector.load %arg4[%c0_6, %c0_7] : memref<1472x368xbf16, #tpu.memory_space<vmem>>, vector<1472x368xbf16>
    %cst_8 = arith.constant dense<0.000000e+00> : vector<8x368xf32>
    %13 = tpu.matmul %11, %12, %cst_8 {dimension_numbers = #tpu.dot_dimension_numbers<[1], [0], [0], [1], [0, 0, 1, 1], [], []>} : vector<8x1472xbf16>, vector<1472x368xbf16>, vector<8x368xf32> -> vector<8x368xf32>
    %c0_9 = arith.constant 0 : index
    %c0_10 = arith.constant 0 : index
    %14 = vector.load %arg5[%c0_9, %c0_10] : memref<1x368xf32, #tpu.memory_space<vmem>>, vector<1x368xf32>
    %15 = vector.broadcast %14 : vector<1x368xf32> to vector<8x368xf32>
    %16 = arith.addf %13, %15 : vector<8x368xf32>
    %cst_11 = arith.constant 0.000000e+00 : f32
    %17 = vector.broadcast %cst_11 : f32 to vector<8x368xf32>
    %18 = arith.maximumf %16, %17 : vector<8x368xf32>
    %19 = arith.truncf %18 : vector<8x368xf32> to vector<8x368xbf16>
    %c0_12 = arith.constant 0 : index
    %c0_13 = arith.constant 0 : index
    %20 = vector.load %arg6[%c0_12, %c0_13] : memref<368x44xbf16, #tpu.memory_space<vmem>>, vector<368x44xbf16>
    %cst_14 = arith.constant dense<0.000000e+00> : vector<8x44xf32>
    %21 = tpu.matmul %19, %20, %cst_14 {dimension_numbers = #tpu.dot_dimension_numbers<[1], [0], [0], [1], [0, 0, 1, 1], [], []>} : vector<8x368xbf16>, vector<368x44xbf16>, vector<8x44xf32> -> vector<8x44xf32>
    %c0_15 = arith.constant 0 : index
    %c0_16 = arith.constant 0 : index
    %22 = vector.load %arg7[%c0_15, %c0_16] : memref<1x44xf32, #tpu.memory_space<vmem>>, vector<1x44xf32>
    %23 = vector.broadcast %22 : vector<1x44xf32> to vector<8x44xf32>
    %24 = arith.addf %21, %23 : vector<8x44xf32>
    %cst_17 = arith.constant 0.000000e+00 : f32
    %25 = vector.broadcast %cst_17 : f32 to vector<8x44xf32>
    %26 = arith.maximumf %24, %25 : vector<8x44xf32>
    %27 = arith.truncf %26 : vector<8x44xf32> to vector<8x44xbf16>
    %c0_18 = arith.constant 0 : index
    %c0_19 = arith.constant 0 : index
    %28 = vector.load %arg8[%c0_18, %c0_19] : memref<44x12xbf16, #tpu.memory_space<vmem>>, vector<44x12xbf16>
    %cst_20 = arith.constant dense<0.000000e+00> : vector<8x12xf32>
    %29 = tpu.matmul %27, %28, %cst_20 {dimension_numbers = #tpu.dot_dimension_numbers<[1], [0], [0], [1], [0, 0, 1, 1], [], []>} : vector<8x44xbf16>, vector<44x12xbf16>, vector<8x12xf32> -> vector<8x12xf32>
    %c0_21 = arith.constant 0 : index
    %c0_22 = arith.constant 0 : index
    %30 = vector.load %arg9[%c0_21, %c0_22] : memref<1x12xf32, #tpu.memory_space<vmem>>, vector<1x12xf32>
    %31 = vector.broadcast %30 : vector<1x12xf32> to vector<8x12xf32>
    %32 = arith.addf %29, %31 : vector<8x12xf32>
    %c0_23 = arith.constant 0 : index
    %c0_24 = arith.constant 0 : index
    %33 = vector.load %arg10[%c0_23, %c0_24] : memref<1x18xf32, #tpu.memory_space<vmem>>, vector<1x18xf32>
    %34 = vector.broadcast %33 : vector<1x18xf32> to vector<8x18xf32>
    %35 = arith.mulf %1, %34 : vector<8x18xf32>
    %c0_25 = arith.constant 0 : index
    %c0_26 = arith.constant 0 : index
    %36 = vector.load %arg11[%c0_25, %c0_26] : memref<1x18xf32, #tpu.memory_space<vmem>>, vector<1x18xf32>
    %37 = vector.broadcast %36 : vector<1x18xf32> to vector<8x18xf32>
    %38 = arith.addf %35, %37 : vector<8x18xf32>
    %cst_27 = arith.constant 0.000000e+00 : f32
    %39 = vector.broadcast %cst_27 : f32 to vector<8x64xf32>
    %cst_28 = arith.constant 0.000000e+00 : f32
    %40 = vector.broadcast %cst_28 : f32 to vector<8x34xf32>
    %41 = tpu.concatenate %39, %38, %32, %40 in 1 : vector<8x64xf32>, vector<8x18xf32>, vector<8x12xf32>, vector<8x34xf32> -> vector<8x128xf32>
    %c0_29 = arith.constant 0 : index
    %c0_30 = arith.constant 0 : index
    %42 = vector.load %arg29[%c0_29, %c0_30] : memref<8x128xf32, #tpu.memory_space<vmem>>, vector<8x128xf32>
    tpu.vector_store %arg29[%c0_29, %c0_30], %41 {strides = array<i32>} : memref<8x128xf32, #tpu.memory_space<vmem>>, vector<8x128xf32>,
    %c0_31 = arith.constant 0 : index
    %c0_32 = arith.constant 0 : index
    %43 = vector.load %arg29[%c0_31, %c0_32] : memref<8x128xf32, #tpu.memory_space<vmem>>, vector<8x128xf32>
    %44 = arith.truncf %43 : vector<8x128xf32> to vector<8x128xbf16>
    %c0_33 = arith.constant 0 : index
    %c0_34 = arith.constant 0 : index
    %45 = vector.load %arg12[%c0_33, %c0_34] : memref<128x32xbf16, #tpu.memory_space<vmem>>, vector<128x32xbf16>
    %cst_35 = arith.constant dense<0.000000e+00> : vector<8x32xf32>
    %46 = tpu.matmul %44, %45, %cst_35 {dimension_numbers = #tpu.dot_dimension_numbers<[1], [0], [0], [1], [0, 0, 1, 1], [], []>} : vector<8x128xbf16>, vector<128x32xbf16>, vector<8x32xf32> -> vector<8x32xf32>
    %c0_36 = arith.constant 0 : index
    %c0_37 = arith.constant 0 : index
    %47 = vector.load %arg13[%c0_36, %c0_37] : memref<1x32xf32, #tpu.memory_space<vmem>>, vector<1x32xf32>
    %48 = vector.broadcast %47 : vector<1x32xf32> to vector<8x32xf32>
    %49 = arith.addf %46, %48 : vector<8x32xf32>
    %cst_38 = arith.constant 0.000000e+00 : f32
    %50 = vector.broadcast %cst_38 : f32 to vector<8x32xf32>
    %51 = arith.maximumf %49, %50 : vector<8x32xf32>
    %52 = arith.truncf %51 : vector<8x32xf32> to vector<8x32xbf16>
    %c0_39 = arith.constant 0 : index
    %c0_40 = arith.constant 0 : index
    %53 = vector.load %arg14[%c0_39, %c0_40] : memref<32x32xbf16, #tpu.memory_space<vmem>>, vector<32x32xbf16>
    %cst_41 = arith.constant dense<0.000000e+00> : vector<8x32xf32>
    %54 = tpu.matmul %52, %53, %cst_41 {dimension_numbers = #tpu.dot_dimension_numbers<[1], [0], [0], [1], [0, 0, 1, 1], [], []>} : vector<8x32xbf16>, vector<32x32xbf16>, vector<8x32xf32> -> vector<8x32xf32>
    %c0_42 = arith.constant 0 : index
    %c0_43 = arith.constant 0 : index
    %55 = vector.load %arg15[%c0_42, %c0_43] : memref<1x32xf32, #tpu.memory_space<vmem>>, vector<1x32xf32>
    %56 = vector.broadcast %55 : vector<1x32xf32> to vector<8x32xf32>
    %57 = arith.addf %54, %56 : vector<8x32xf32>
    %cst_44 = arith.constant 0.000000e+00 : f32
    %58 = vector.broadcast %cst_44 : f32 to vector<8x32xf32>
    %59 = arith.maximumf %57, %58 : vector<8x32xf32>
    %60 = arith.truncf %59 : vector<8x32xf32> to vector<8x32xbf16>
    %c0_45 = arith.constant 0 : index
    %c0_46 = arith.constant 0 : index
    %61 = vector.load %arg16[%c0_45, %c0_46] : memref<32x32xbf16, #tpu.memory_space<vmem>>, vector<32x32xbf16>
    %cst_47 = arith.constant dense<0.000000e+00> : vector<8x32xf32>
    %62 = tpu.matmul %60, %61, %cst_47 {dimension_numbers = #tpu.dot_dimension_numbers<[1], [0], [0], [1], [0, 0, 1, 1], [], []>} : vector<8x32xbf16>, vector<32x32xbf16>, vector<8x32xf32> -> vector<8x32xf32>
    %c0_48 = arith.constant 0 : index
    %c0_49 = arith.constant 0 : index
    %63 = vector.load %arg17[%c0_48, %c0_49] : memref<1x32xf32, #tpu.memory_space<vmem>>, vector<1x32xf32>
    %64 = vector.broadcast %63 : vector<1x32xf32> to vector<8x32xf32>
    %65 = arith.addf %62, %64 : vector<8x32xf32>
    %cst_50 = arith.constant 0.000000e+00 : f32
    %66 = vector.broadcast %cst_50 : f32 to vector<8x32xf32>
    %67 = arith.maximumf %65, %66 : vector<8x32xf32>
    %c0_51 = arith.constant 0 : index
    %c32 = arith.constant 32 : index
    %68 = vector.load %arg29[%c0_51, %c32] : memref<8x128xf32, #tpu.memory_space<vmem>>, vector<8x32xf32>
    tpu.vector_store %arg29[%c0_51, %c32], %67 {strides = array<i32>} : memref<8x128xf32, #tpu.memory_space<vmem>>, vector<8x32xf32>,
    %c0_52 = arith.constant 0 : index
    %c0_53 = arith.constant 0 : index
    %69 = vector.load %arg29[%c0_52, %c0_53] : memref<8x128xf32, #tpu.memory_space<vmem>>, vector<8x128xf32>
    %70 = arith.truncf %69 : vector<8x128xf32> to vector<8x128xbf16>
    %c0_54 = arith.constant 0 : index
    %c0_55 = arith.constant 0 : index
    %71 = vector.load %arg18[%c0_54, %c0_55] : memref<128x32xbf16, #tpu.memory_space<vmem>>, vector<128x32xbf16>
    %cst_56 = arith.constant dense<0.000000e+00> : vector<8x32xf32>
    %72 = tpu.matmul %70, %71, %cst_56 {dimension_numbers = #tpu.dot_dimension_numbers<[1], [0], [0], [1], [0, 0, 1, 1], [], []>} : vector<8x128xbf16>, vector<128x32xbf16>, vector<8x32xf32> -> vector<8x32xf32>
    %c0_57 = arith.constant 0 : index
    %c0_58 = arith.constant 0 : index
    %73 = vector.load %arg19[%c0_57, %c0_58] : memref<1x32xf32, #tpu.memory_space<vmem>>, vector<1x32xf32>
    %74 = vector.broadcast %73 : vector<1x32xf32> to vector<8x32xf32>
    %75 = arith.addf %72, %74 : vector<8x32xf32>
    %cst_59 = arith.constant 0.000000e+00 : f32
    %76 = vector.broadcast %cst_59 : f32 to vector<8x32xf32>
    %77 = arith.maximumf %75, %76 : vector<8x32xf32>
    %78 = arith.truncf %77 : vector<8x32xf32> to vector<8x32xbf16>
    %c0_60 = arith.constant 0 : index
    %c0_61 = arith.constant 0 : index
    %79 = vector.load %arg20[%c0_60, %c0_61] : memref<32x32xbf16, #tpu.memory_space<vmem>>, vector<32x32xbf16>
    %cst_62 = arith.constant dense<0.000000e+00> : vector<8x32xf32>
    %80 = tpu.matmul %78, %79, %cst_62 {dimension_numbers = #tpu.dot_dimension_numbers<[1], [0], [0], [1], [0, 0, 1, 1], [], []>} : vector<8x32xbf16>, vector<32x32xbf16>, vector<8x32xf32> -> vector<8x32xf32>
    %c0_63 = arith.constant 0 : index
    %c0_64 = arith.constant 0 : index
    %81 = vector.load %arg21[%c0_63, %c0_64] : memref<1x32xf32, #tpu.memory_space<vmem>>, vector<1x32xf32>
    %82 = vector.broadcast %81 : vector<1x32xf32> to vector<8x32xf32>
    %83 = arith.addf %80, %82 : vector<8x32xf32>
    %cst_65 = arith.constant 0.000000e+00 : f32
    %84 = vector.broadcast %cst_65 : f32 to vector<8x32xf32>
    %85 = arith.maximumf %83, %84 : vector<8x32xf32>
    %86 = arith.truncf %85 : vector<8x32xf32> to vector<8x32xbf16>
    %c0_66 = arith.constant 0 : index
    %c0_67 = arith.constant 0 : index
    %87 = vector.load %arg22[%c0_66, %c0_67] : memref<32x32xbf16, #tpu.memory_space<vmem>>, vector<32x32xbf16>
    %cst_68 = arith.constant dense<0.000000e+00> : vector<8x32xf32>
    %88 = tpu.matmul %86, %87, %cst_68 {dimension_numbers = #tpu.dot_dimension_numbers<[1], [0], [0], [1], [0, 0, 1, 1], [], []>} : vector<8x32xbf16>, vector<32x32xbf16>, vector<8x32xf32> -> vector<8x32xf32>
    %c0_69 = arith.constant 0 : index
    %c0_70 = arith.constant 0 : index
    %89 = vector.load %arg23[%c0_69, %c0_70] : memref<1x32xf32, #tpu.memory_space<vmem>>, vector<1x32xf32>
    %90 = vector.broadcast %89 : vector<1x32xf32> to vector<8x32xf32>
    %91 = arith.addf %88, %90 : vector<8x32xf32>
    %cst_71 = arith.constant 0.000000e+00 : f32
    %92 = vector.broadcast %cst_71 : f32 to vector<8x32xf32>
    %93 = arith.maximumf %91, %92 : vector<8x32xf32>
    %c0_72 = arith.constant 0 : index
    %c0_73 = arith.constant 0 : index
    %94 = vector.load %arg29[%c0_72, %c0_73] : memref<8x128xf32, #tpu.memory_space<vmem>>, vector<8x32xf32>
    tpu.vector_store %arg29[%c0_72, %c0_73], %93 {strides = array<i32>} : memref<8x128xf32, #tpu.memory_space<vmem>>, vector<8x32xf32>,
    %c0_74 = arith.constant 0 : index
    %c0_75 = arith.constant 0 : index
    %95 = vector.load %arg29[%c0_74, %c0_75] : memref<8x128xf32, #tpu.memory_space<vmem>>, vector<8x128xf32>
    %96 = arith.truncf %95 : vector<8x128xf32> to vector<8x128xbf16>
    %c0_76 = arith.constant 0 : index
    %c0_77 = arith.constant 0 : index
    %97 = vector.load %arg24[%c0_76, %c0_77] : memref<128x32xbf16, #tpu.memory_space<vmem>>, vector<128x32xbf16>
    %cst_78 = arith.constant dense<0.000000e+00> : vector<8x32xf32>
    %98 = tpu.matmul %96, %97, %cst_78 {dimension_numbers = #tpu.dot_dimension_numbers<[1], [0], [0], [1], [0, 0, 1, 1], [], []>} : vector<8x128xbf16>, vector<128x32xbf16>, vector<8x32xf32> -> vector<8x32xf32>
    %c0_79 = arith.constant 0 : index
    %c0_80 = arith.constant 0 : index
    %99 = vector.load %arg25[%c0_79, %c0_80] : memref<1x32xf32, #tpu.memory_space<vmem>>, vector<1x32xf32>
    %100 = vector.broadcast %99 : vector<1x32xf32> to vector<8x32xf32>
    %101 = arith.addf %98, %100 : vector<8x32xf32>
    %cst_81 = arith.constant 0.000000e+00 : f32
    %102 = vector.broadcast %cst_81 : f32 to vector<8x32xf32>
    %103 = arith.maximumf %101, %102 : vector<8x32xf32>
    %104 = arith.truncf %103 : vector<8x32xf32> to vector<8x32xbf16>
    %c0_82 = arith.constant 0 : index
    %c0_83 = arith.constant 0 : index
    %105 = vector.load %arg26[%c0_82, %c0_83] : memref<32x128xbf16, #tpu.memory_space<vmem>>, vector<32x128xbf16>
    %cst_84 = arith.constant dense<0.000000e+00> : vector<8x128xf32>
    %106 = tpu.matmul %104, %105, %cst_84 {dimension_numbers = #tpu.dot_dimension_numbers<[1], [0], [0], [1], [0, 0, 1, 1], [], []>} : vector<8x32xbf16>, vector<32x128xbf16>, vector<8x128xf32> -> vector<8x128xf32>
    %c0_85 = arith.constant 0 : index
    %c0_86 = arith.constant 0 : index
    %107 = vector.load %arg27[%c0_85, %c0_86] : memref<1x128xf32, #tpu.memory_space<vmem>>, vector<1x128xf32>
    %108 = vector.broadcast %107 : vector<1x128xf32> to vector<8x128xf32>
    %109 = arith.addf %106, %108 : vector<8x128xf32>
    %c0_87 = arith.constant 0 : index
    %c0_88 = arith.constant 0 : index
    %110 = vector.load %arg28[%c0_87, %c0_88] : memref<8x128xf32, #tpu.memory_space<vmem>>, vector<8x128xf32>
    tpu.vector_store %arg28[%c0_87, %c0_88], %109 {strides = array<i32>} : memref<8x128xf32, #tpu.memory_space<vmem>>, vector<8x128xf32>,
    return
  }
  func.func @transform_0(%arg0: i32) -> (i32, i32) {
    %c0_i32 = arith.constant 0 : i32
    %c0_i32_0 = arith.constant 0 : i32
    return %arg0, %c0_i32 : i32, i32
  }
  func.func @transform_1(%arg0: i32) -> (i32, i32) {
    %c0_i32 = arith.constant 0 : i32
    %c0_i32_0 = arith.constant 0 : i32
    %c0_i32_1 = arith.constant 0 : i32
    return %c0_i32, %c0_i32_0 : i32, i32
  }
  func.func @transform_2(%arg0: i32) -> (i32, i32) {
    %c0_i32 = arith.constant 0 : i32
    %c0_i32_0 = arith.constant 0 : i32
    %c0_i32_1 = arith.constant 0 : i32
    return %c0_i32, %c0_i32_0 : i32, i32
  }
  func.func @transform_3(%arg0: i32) -> (i32, i32) {
    %c0_i32 = arith.constant 0 : i32
    %c0_i32_0 = arith.constant 0 : i32
    %c0_i32_1 = arith.constant 0 : i32
    return %c0_i32, %c0_i32_0 : i32, i32
  }
  func.func @transform_4(%arg0: i32) -> (i32, i32) {
    %c0_i32 = arith.constant 0 : i32
    %c0_i32_0 = arith.constant 0 : i32
    %c0_i32_1 = arith.constant 0 : i32
    return %c0_i32, %c0_i32_0 : i32, i32
  }
  func.func @transform_5(%arg0: i32) -> (i32, i32) {
    %c0_i32 = arith.constant 0 : i32
    %c0_i32_0 = arith.constant 0 : i32
    %c0_i32_1 = arith.constant 0 : i32
    return %c0_i32, %c0_i32_0 : i32, i32
  }
  func.func @transform_6(%arg0: i32) -> (i32, i32) {
    %c0_i32 = arith.constant 0 : i32
    %c0_i32_0 = arith.constant 0 : i32
    %c0_i32_1 = arith.constant 0 : i32
    return %c0_i32, %c0_i32_0 : i32, i32
  }
  func.func @transform_7(%arg0: i32) -> (i32, i32) {
    %c0_i32 = arith.constant 0 : i32
    %c0_i32_0 = arith.constant 0 : i32
    %c0_i32_1 = arith.constant 0 : i32
    return %c0_i32, %c0_i32_0 : i32, i32
  }
  func.func @transform_8(%arg0: i32) -> (i32, i32) {
    %c0_i32 = arith.constant 0 : i32
    %c0_i32_0 = arith.constant 0 : i32
    %c0_i32_1 = arith.constant 0 : i32
    return %c0_i32, %c0_i32_0 : i32, i32
  }
  func.func @transform_9(%arg0: i32) -> (i32, i32) {
    %c0_i32 = arith.constant 0 : i32
    %c0_i32_0 = arith.constant 0 : i32
    %c0_i32_1 = arith.constant 0 : i32
    return %c0_i32, %c0_i32_0 : i32, i32
  }
  func.func @transform_10(%arg0: i32) -> (i32, i32) {
    %c0_i32 = arith.constant 0 : i32
    %c0_i32_0 = arith.constant 0 : i32
    %c0_i32_1 = arith.constant 0 : i32
    return %c0_i32, %c0_i32_0 : i32, i32
  }
  func.func @transform_11(%arg0: i32) -> (i32, i32) {
    %c0_i32 = arith.constant 0 : i32
    %c0_i32_0 = arith.constant 0 : i32
    %c0_i32_1 = arith.constant 0 : i32
    return %c0_i32, %c0_i32_0 : i32, i32
  }
  func.func @transform_12(%arg0: i32) -> (i32, i32) {
    %c0_i32 = arith.constant 0 : i32
    %c0_i32_0 = arith.constant 0 : i32
    %c0_i32_1 = arith.constant 0 : i32
    return %c0_i32, %c0_i32_0 : i32, i32
  }
  func.func @transform_13(%arg0: i32) -> (i32, i32) {
    %c0_i32 = arith.constant 0 : i32
    %c0_i32_0 = arith.constant 0 : i32
    %c0_i32_1 = arith.constant 0 : i32
    return %c0_i32, %c0_i32_0 : i32, i32
  }
  func.func @transform_14(%arg0: i32) -> (i32, i32) {
    %c0_i32 = arith.constant 0 : i32
    %c0_i32_0 = arith.constant 0 : i32
    %c0_i32_1 = arith.constant 0 : i32
    return %c0_i32, %c0_i32_0 : i32, i32
  }
  func.func @transform_15(%arg0: i32) -> (i32, i32) {
    %c0_i32 = arith.constant 0 : i32
    %c0_i32_0 = arith.constant 0 : i32
    %c0_i32_1 = arith.constant 0 : i32
    return %c0_i32, %c0_i32_0 : i32, i32
  }
  func.func @transform_16(%arg0: i32) -> (i32, i32) {
    %c0_i32 = arith.constant 0 : i32
    %c0_i32_0 = arith.constant 0 : i32
    %c0_i32_1 = arith.constant 0 : i32
    return %c0_i32, %c0_i32_0 : i32, i32
  }
  func.func @transform_17(%arg0: i32) -> (i32, i32) {
    %c0_i32 = arith.constant 0 : i32
    %c0_i32_0 = arith.constant 0 : i32
    %c0_i32_1 = arith.constant 0 : i32
    return %c0_i32, %c0_i32_0 : i32, i32
  }
  func.func @transform_18(%arg0: i32) -> (i32, i32) {
    %c0_i32 = arith.constant 0 : i32
    %c0_i32_0 = arith.constant 0 : i32
    %c0_i32_1 = arith.constant 0 : i32
    return %c0_i32, %c0_i32_0 : i32, i32
  }
  func.func @transform_19(%arg0: i32) -> (i32, i32) {
    %c0_i32 = arith.constant 0 : i32
    %c0_i32_0 = arith.constant 0 : i32
    %c0_i32_1 = arith.constant 0 : i32
    return %c0_i32, %c0_i32_0 : i32, i32
  }
  func.func @transform_20(%arg0: i32) -> (i32, i32) {
    %c0_i32 = arith.constant 0 : i32
    %c0_i32_0 = arith.constant 0 : i32
    %c0_i32_1 = arith.constant 0 : i32
    return %c0_i32, %c0_i32_0 : i32, i32
  }
  func.func @transform_21(%arg0: i32) -> (i32, i32) {
    %c0_i32 = arith.constant 0 : i32
    %c0_i32_0 = arith.constant 0 : i32
    %c0_i32_1 = arith.constant 0 : i32
    return %c0_i32, %c0_i32_0 : i32, i32
  }
  func.func @transform_22(%arg0: i32) -> (i32, i32) {
    %c0_i32 = arith.constant 0 : i32
    %c0_i32_0 = arith.constant 0 : i32
    %c0_i32_1 = arith.constant 0 : i32
    return %c0_i32, %c0_i32_0 : i32, i32
  }
  func.func @transform_23(%arg0: i32) -> (i32, i32) {
    %c0_i32 = arith.constant 0 : i32
    %c0_i32_0 = arith.constant 0 : i32
    %c0_i32_1 = arith.constant 0 : i32
    return %c0_i32, %c0_i32_0 : i32, i32
  }
  func.func @transform_24(%arg0: i32) -> (i32, i32) {
    %c0_i32 = arith.constant 0 : i32
    %c0_i32_0 = arith.constant 0 : i32
    %c0_i32_1 = arith.constant 0 : i32
    return %c0_i32, %c0_i32_0 : i32, i32
  }
  func.func @transform_25(%arg0: i32) -> (i32, i32) {
    %c0_i32 = arith.constant 0 : i32
    %c0_i32_0 = arith.constant 0 : i32
    %c0_i32_1 = arith.constant 0 : i32
    return %c0_i32, %c0_i32_0 : i32, i32
  }
  func.func @transform_26(%arg0: i32) -> (i32, i32) {
    %c0_i32 = arith.constant 0 : i32
    %c0_i32_0 = arith.constant 0 : i32
    %c0_i32_1 = arith.constant 0 : i32
    return %c0_i32, %c0_i32_0 : i32, i32
  }
  func.func @transform_27(%arg0: i32) -> (i32, i32) {
    %c0_i32 = arith.constant 0 : i32
    %c0_i32_0 = arith.constant 0 : i32
    return %arg0, %c0_i32 : i32, i32
  }
}

</mosaic_0001>

<llo_original>
// kernel: tpu_custom_call.1
$region0: #{tpu_custom_call.1}
  #allocation0 [shape = 'u32[]', space=smem, size = 0x4, offset = 0x4, fixed_abs, tag = 'smem constant byte address 0x4 - core index']
  #allocation1 [shape = 'u32[144,128]{1,0:T(1,128)}', space=vmem, size = 0x12000, scoped, tag = 'internal scratch']
  #allocation2 [shape = 'f32[8,128]{1,0:T(8,128)}', space=vmem, size = 0x1000, scoped, tag = 'scratch operand']
  %s0 = inlined_call_operand.hbm [shape: f32[8,156], index: 0, kind: input, shape index: {}]
  %s1 = inlined_call_operand.hbm [shape: bf16[138,1472], index: 1, kind: input, shape index: {}]
  %s2 = inlined_call_operand.hbm [shape: f32[1,1472], index: 2, kind: input, shape index: {}]
  %s3 = inlined_call_operand.hbm [shape: bf16[1472,368], index: 3, kind: input, shape index: {}]
  %s4 = inlined_call_operand.hbm [shape: f32[1,368], index: 4, kind: input, shape index: {}]
  %s5 = inlined_call_operand.vmem [shape: bf16[368,44], index: 5, kind: input, shape index: {}]
  %s6 = inlined_call_operand.hbm [shape: f32[1,44], index: 6, kind: input, shape index: {}]
  %s7 = inlined_call_operand.vmem [shape: bf16[44,12], index: 7, kind: input, shape index: {}]
  %s8 = inlined_call_operand.hbm [shape: f32[1,12], index: 8, kind: input, shape index: {}]
  %s9 = inlined_call_operand.hbm [shape: f32[1,18], index: 9, kind: input, shape index: {}]
  %s10 = inlined_call_operand.hbm [shape: f32[1,18], index: 10, kind: input, shape index: {}]
  %s11 = inlined_call_operand.vmem [shape: bf16[128,32], index: 11, kind: input, shape index: {}]
  %s12 = inlined_call_operand.hbm [shape: f32[1,32], index: 12, kind: input, shape index: {}]
  %s13 = inlined_call_operand.hbm [shape: bf16[32,32], index: 13, kind: input, shape index: {}]
  %s14 = inlined_call_operand.hbm [shape: f32[1,32], index: 14, kind: input, shape index: {}]
  %s15 = inlined_call_operand.hbm [shape: bf16[32,32], index: 15, kind: input, shape index: {}]
  %s16 = inlined_call_operand.hbm [shape: f32[1,32], index: 16, kind: input, shape index: {}]
  %s17 = inlined_call_operand.vmem [shape: bf16[128,32], index: 17, kind: input, shape index: {}]
  %s18 = inlined_call_operand.hbm [shape: f32[1,32], index: 18, kind: input, shape index: {}]
  %s19 = inlined_call_operand.hbm [shape: bf16[32,32], index: 19, kind: input, shape index: {}]
  %s20 = inlined_call_operand.hbm [shape: f32[1,32], index: 20, kind: input, shape index: {}]
  %s21 = inlined_call_operand.hbm [shape: bf16[32,32], index: 21, kind: input, shape index: {}]
  %s22 = inlined_call_operand.hbm [shape: f32[1,32], index: 22, kind: input, shape index: {}]
  %s23 = inlined_call_operand.vmem [shape: bf16[128,32], index: 23, kind: input, shape index: {}]
  %s24 = inlined_call_operand.hbm [shape: f32[1,32], index: 24, kind: input, shape index: {}]
  %s25 = inlined_call_operand.hbm [shape: bf16[32,128], index: 25, kind: input, shape index: {}]
  %s26 = inlined_call_operand.hbm [shape: f32[1,128], index: 26, kind: input, shape index: {}]
  %s27 = inlined_call_operand.hbm [shape: f32[8,128], index: 27, kind: output, shape index: {}]
  %s28 = sld [smem:[#allocation0]]
  $region206: #{tpu_custom_call.1} parent=0
    _
  %s30 = ssub.s32 1, %s28
  %s31 = scalar_select 0, %s30, %s28
  $region1: #{tpu_custom_call.1} parent=0
    #allocation3 [shape = 'u8[8192]{0}', space=vmem, size = 0x2000, scoped, tag = 'input window, operand 0, single buffered']
    #allocation4 [shape = 's32[1]{0}', space=sflag, size = 0x4, scoped, tag = 'scoped memory for tpu_custom_call.1']
    #allocation5 [shape = 's32[1]{0}', space=sflag, size = 0x4, scoped, tag = 'scoped memory for tpu_custom_call.1']
    #allocation6 [shape = 'u8[442368]{0}', space=vmem, size = 0x6c000, scoped, tag = 'input window, operand 1, single buffered']
    #allocation7 [shape = 's32[1]{0}', space=sflag, size = 0x4, scoped, tag = 'scoped memory for tpu_custom_call.1']
    #allocation8 [shape = 'u8[6144]{0}', space=vmem, size = 0x1800, scoped, tag = 'input window, operand 2, single buffered']
    #allocation9 [shape = 'u8[1130496]{0}', space=vmem, size = 0x114000, scoped, tag = 'input window, operand 3, single buffered']
    #allocation10 [shape = 's32[1]{0}', space=sflag, size = 0x4, scoped, tag = 'scoped memory for tpu_custom_call.1']
    #allocation11 [shape = 'u8[1536]{0}', space=vmem, size = 0x800, scoped, tag = 'input window, operand 4, single buffered']
    #allocation12 [shape = 'u8[512]{0}', space=vmem, size = 0x400, scoped, tag = 'input window, operand 6, single buffered']
    #allocation13 [shape = 's32[1]{0}', space=sflag, size = 0x4, scoped, tag = 'scoped memory for tpu_custom_call.1']
    #allocation14 [shape = 'u8[512]{0}', space=vmem, size = 0x400, scoped, tag = 'input window, operand 8, single buffered']
    #allocation15 [shape = 'u8[512]{0}', space=vmem, size = 0x400, scoped, tag = 'input window, operand 9, single buffered']
    #allocation16 [shape = 's32[1]{0}', space=sflag, size = 0x4, scoped, tag = 'scoped memory for tpu_custom_call.1']
    #allocation17 [shape = 'u8[512]{0}', space=vmem, size = 0x400, scoped, tag = 'input window, operand 10, single buffered']
    #allocation18 [shape = 'u8[512]{0}', space=vmem, size = 0x400, scoped, tag = 'input window, operand 12, single buffered']
    #allocation19 [shape = 's32[1]{0}', space=sflag, size = 0x4, scoped, tag = 'scoped memory for tpu_custom_call.1']
    #allocation20 [shape = 'u8[8192]{0}', space=vmem, size = 0x2000, scoped, tag = 'input window, operand 13, single buffered']
    #allocation21 [shape = 'u8[512]{0}', space=vmem, size = 0x400, scoped, tag = 'input window, operand 14, single buffered']
    #allocation22 [shape = 's32[1]{0}', space=sflag, size = 0x4, scoped, tag = 'scoped memory for tpu_custom_call.1']
    #allocation23 [shape = 'u8[8192]{0}', space=vmem, size = 0x2000, scoped, tag = 'input window, operand 15, single buffered']
    #allocation24 [shape = 'u8[512]{0}', space=vmem, size = 0x400, scoped, tag = 'input window, operand 16, single buffered']
    #allocation25 [shape = 's32[1]{0}', space=sflag, size = 0x4, scoped, tag = 'scoped memory for tpu_custom_call.1']
    #allocation26 [shape = 'u8[512]{0}', space=vmem, size = 0x400, scoped, tag = 'input window, operand 18, single buffered']
    #allocation27 [shape = 'u8[8192]{0}', space=vmem, size = 0x2000, scoped, tag = 'input window, operand 19, single buffered']
    #allocation28 [shape = 's32[1]{0}', space=sflag, size = 0x4, scoped, tag = 'scoped memory for tpu_custom_call.1']
    #allocation29 [shape = 'u8[512]{0}', space=vmem, size = 0x400, scoped, tag = 'input window, operand 20, single buffered']
    #allocation30 [shape = 'u8[8192]{0}', space=vmem, size = 0x2000, scoped, tag = 'input window, operand 21, single buffered']
    #allocation31 [shape = 's32[1]{0}', space=sflag, size = 0x4, scoped, tag = 'scoped memory for tpu_custom_call.1']
    #allocation32 [shape = 'u8[512]{0}', space=vmem, size = 0x400, scoped, tag = 'input window, operand 22, single buffered']
    #allocation33 [shape = 'u8[512]{0}', space=vmem, size = 0x400, scoped, tag = 'input window, operand 24, single buffered']
    #allocation34 [shape = 's32[1]{0}', space=sflag, size = 0x4, scoped, tag = 'scoped memory for tpu_custom_call.1']
    #allocation35 [shape = 'u8[8192]{0}', space=vmem, size = 0x2000, scoped, tag = 'input window, operand 25, single buffered']
    #allocation36 [shape = 'u8[512]{0}', space=vmem, size = 0x400, scoped, tag = 'input window, operand 26, single buffered']
    #allocation37 [shape = 's32[1]{0}', space=sflag, size = 0x4, scoped, tag = 'scoped memory for tpu_custom_call.1']
    #allocation38 [shape = 'u8[4096]{0}', space=vmem, size = 0x1000, scoped, tag = 'output window, operand 0, single buffered']
    %32 = vsyncpa [#allocation4], 0
    %33 = vsyncpa [#allocation7], 0
    %34 = vsyncpa [#allocation10], 0
    %35 = vsyncpa [#allocation13], 0
    %36 = vsyncpa [#allocation16], 0
    %37 = vsyncpa [#allocation19], 0
    %38 = vsyncpa [#allocation22], 0
    %39 = vsyncpa [#allocation25], 0
    %40 = vsyncpa [#allocation28], 0
    %41 = vsyncpa [#allocation31], 0
    %42 = vsyncpa [#allocation34], 0
    %43 = vsyncpa [#allocation37], 0
    %44 = vsyncpa [#allocation5], 0
    // Predicated region
    $region2: #{tpu_custom_call.1} parent=1 // pred_check
      _
    $region3: #{tpu_custom_call.1} parent=1 // pred_check_branch
      %46 = sbr.rel (0) target = $region5
    $region4: #{tpu_custom_call.1} parent=1 // pred_region
      %s48 = ssub.s32 256, 256
      %49 = vsyncadd [#allocation4], %s48
      %s51 = sshll.u32 [#allocation3], 4
      %s52 = int_to_ptr.vmem [resolvable:$true] %s51
      %54 = dma.hbm_to_vmem [thread:$0]  %s0, 256, %s52, [#allocation4]
    $region5: #{tpu_custom_call.1} parent=1 // pred_fallthru
      _
    // Predicated region
    $region6: #{tpu_custom_call.1} parent=1 // pred_check
      _
    $region7: #{tpu_custom_call.1} parent=1 // pred_check_branch
      %56 = sbr.rel (0) target = $region9
    $region8: #{tpu_custom_call.1} parent=1 // pred_region
      %s58 = ssub.s32 13824, 13824
      %59 = vsyncadd [#allocation7], %s58
      %s60 = sshll.u32 [#allocation6], 4
      %s61 = int_to_ptr.vmem [resolvable:$true] %s60
      %66 = dma.hbm_to_vmem [thread:$0]  %s1, 13824, %s61, [#allocation7], 768, 768, 48
    $region9: #{tpu_custom_call.1} parent=1 // pred_fallthru
      _
    // Predicated region
    $region10: #{tpu_custom_call.1} parent=1 // pred_check
      _
    $region11: #{tpu_custom_call.1} parent=1 // pred_check_branch
      %68 = sbr.rel (0) target = $region13
    $region12: #{tpu_custom_call.1} parent=1 // pred_region
      %s70 = ssub.s32 192, 192
      %71 = vsyncadd [#allocation7], %s70
      %s73 = sshll.u32 [#allocation8], 4
      %s74 = int_to_ptr.vmem [resolvable:$true] %s73
      %76 = dma.hbm_to_vmem [thread:$0]  %s2, 192, %s74, [#allocation7]
    $region13: #{tpu_custom_call.1} parent=1 // pred_fallthru
      _
    // Predicated region
    $region14: #{tpu_custom_call.1} parent=1 // pred_check
      _
    $region15: #{tpu_custom_call.1} parent=1 // pred_check_branch
      %78 = sbr.rel (0) target = $region17
    $region16: #{tpu_custom_call.1} parent=1 // pred_region
      %s80 = ssub.s32 35328, 35328
      %81 = vsyncadd [#allocation10], %s80
      %s82 = sshll.u32 [#allocation9], 4
      %s83 = int_to_ptr.vmem [resolvable:$true] %s82
      %88 = dma.hbm_to_vmem [thread:$0]  %s3, 35328, %s83, [#allocation10], 192, 192, 12
    $region17: #{tpu_custom_call.1} parent=1 // pred_fallthru
      _
    // Predicated region
    $region18: #{tpu_custom_call.1} parent=1 // pred_check
      _
    $region19: #{tpu_custom_call.1} parent=1 // pred_check_branch
      %90 = sbr.rel (0) target = $region21
    $region20: #{tpu_custom_call.1} parent=1 // pred_region
      %s92 = ssub.s32 48, 48
      %93 = vsyncadd [#allocation10], %s92
      %s95 = sshll.u32 [#allocation11], 4
      %s96 = int_to_ptr.vmem [resolvable:$true] %s95
      %98 = dma.hbm_to_vmem [thread:$0]  %s4, 48, %s96, [#allocation10]
    $region21: #{tpu_custom_call.1} parent=1 // pred_fallthru
      _
    // Predicated region
    $region22: #{tpu_custom_call.1} parent=1 // pred_check
      _
    $region23: #{tpu_custom_call.1} parent=1 // pred_check_branch
      %100 = sbr.rel (0) target = $region25
    $region24: #{tpu_custom_call.1} parent=1 // pred_region
      _
    $region25: #{tpu_custom_call.1} parent=1 // pred_fallthru
      _
    // Predicated region
    $region26: #{tpu_custom_call.1} parent=1 // pred_check
      _
    $region27: #{tpu_custom_call.1} parent=1 // pred_check_branch
      %102 = sbr.rel (0) target = $region29
    $region28: #{tpu_custom_call.1} parent=1 // pred_region
      %s104 = ssub.s32 16, 16
      %105 = vsyncadd [#allocation13], %s104
      %s107 = sshll.u32 [#allocation12], 4
      %s108 = int_to_ptr.vmem [resolvable:$true] %s107
      %110 = dma.hbm_to_vmem [thread:$0]  %s6, 16, %s108, [#allocation13]
    $region29: #{tpu_custom_call.1} parent=1 // pred_fallthru
      _
    // Predicated region
    $region30: #{tpu_custom_call.1} parent=1 // pred_check
      _
    $region31: #{tpu_custom_call.1} parent=1 // pred_check_branch
      %112 = sbr.rel (0) target = $region33
    $region32: #{tpu_custom_call.1} parent=1 // pred_region
      _
    $region33: #{tpu_custom_call.1} parent=1 // pred_fallthru
      _
    // Predicated region
    $region34: #{tpu_custom_call.1} parent=1 // pred_check
      _
    $region35: #{tpu_custom_call.1} parent=1 // pred_check_branch
      %114 = sbr.rel (0) target = $region37
    $region36: #{tpu_custom_call.1} parent=1 // pred_region
      %s116 = ssub.s32 16, 16
      %117 = vsyncadd [#allocation13], %s116
      %s119 = sshll.u32 [#allocation14], 4
      %s120 = int_to_ptr.vmem [resolvable:$true] %s119
      %122 = dma.hbm_to_vmem [thread:$0]  %s8, 16, %s120, [#allocation13]
    $region37: #{tpu_custom_call.1} parent=1 // pred_fallthru
      _
    // Predicated region
    $region38: #{tpu_custom_call.1} parent=1 // pred_check
      _
    $region39: #{tpu_custom_call.1} parent=1 // pred_check_branch
      %124 = sbr.rel (0) target = $region41
    $region40: #{tpu_custom_call.1} parent=1 // pred_region
      %s126 = ssub.s32 16, 16
      %127 = vsyncadd [#allocation16], %s126
      %s129 = sshll.u32 [#allocation15], 4
      %s130 = int_to_ptr.vmem [resolvable:$true] %s129
      %132 = dma.hbm_to_vmem [thread:$0]  %s9, 16, %s130, [#allocation16]
    $region41: #{tpu_custom_call.1} parent=1 // pred_fallthru
      _
    // Predicated region
    $region42: #{tpu_custom_call.1} parent=1 // pred_check
      _
    $region43: #{tpu_custom_call.1} parent=1 // pred_check_branch
      %134 = sbr.rel (0) target = $region45
    $region44: #{tpu_custom_call.1} parent=1 // pred_region
      %s136 = ssub.s32 16, 16
      %137 = vsyncadd [#allocation16], %s136
      %s139 = sshll.u32 [#allocation17], 4
      %s140 = int_to_ptr.vmem [resolvable:$true] %s139
      %142 = dma.hbm_to_vmem [thread:$0]  %s10, 16, %s140, [#allocation16]
    $region45: #{tpu_custom_call.1} parent=1 // pred_fallthru
      _
    // Predicated region
    $region46: #{tpu_custom_call.1} parent=1 // pred_check
      _
    $region47: #{tpu_custom_call.1} parent=1 // pred_check_branch
      %144 = sbr.rel (0) target = $region49
    $region48: #{tpu_custom_call.1} parent=1 // pred_region
      _
    $region49: #{tpu_custom_call.1} parent=1 // pred_fallthru
      _
    // Predicated region
    $region50: #{tpu_custom_call.1} parent=1 // pred_check
      _
    $region51: #{tpu_custom_call.1} parent=1 // pred_check_branch
      %146 = sbr.rel (0) target = $region53
    $region52: #{tpu_custom_call.1} parent=1 // pred_region
      %s148 = ssub.s32 16, 16
      %149 = vsyncadd [#allocation19], %s148
      %s151 = sshll.u32 [#allocation18], 4
      %s152 = int_to_ptr.vmem [resolvable:$true] %s151
      %154 = dma.hbm_to_vmem [thread:$0]  %s12, 16, %s152, [#allocation19]
    $region53: #{tpu_custom_call.1} parent=1 // pred_fallthru
      _
    // Predicated region
    $region54: #{tpu_custom_call.1} parent=1 // pred_check
      _
    $region55: #{tpu_custom_call.1} parent=1 // pred_check_branch
      %156 = sbr.rel (0) target = $region57
    $region56: #{tpu_custom_call.1} parent=1 // pred_region
      %s158 = ssub.s32 256, 256
      %159 = vsyncadd [#allocation19], %s158
      %s160 = sshll.u32 [#allocation20], 4
      %s161 = int_to_ptr.vmem [resolvable:$true] %s160
      %166 = dma.hbm_to_vmem [thread:$0]  %s13, 256, %s161, [#allocation19], 64, 64, 4
    $region57: #{tpu_custom_call.1} parent=1 // pred_fallthru
      _
    // Predicated region
    $region58: #{tpu_custom_call.1} parent=1 // pred_check
      _
    $region59: #{tpu_custom_call.1} parent=1 // pred_check_branch
      %168 = sbr.rel (0) target = $region61
    $region60: #{tpu_custom_call.1} parent=1 // pred_region
      %s170 = ssub.s32 16, 16
      %171 = vsyncadd [#allocation22], %s170
      %s173 = sshll.u32 [#allocation21], 4
      %s174 = int_to_ptr.vmem [resolvable:$true] %s173
      %176 = dma.hbm_to_vmem [thread:$0]  %s14, 16, %s174, [#allocation22]
    $region61: #{tpu_custom_call.1} parent=1 // pred_fallthru
      _
    // Predicated region
    $region62: #{tpu_custom_call.1} parent=1 // pred_check
      _
    $region63: #{tpu_custom_call.1} parent=1 // pred_check_branch
      %178 = sbr.rel (0) target = $region65
    $region64: #{tpu_custom_call.1} parent=1 // pred_region
      %s180 = ssub.s32 256, 256
      %181 = vsyncadd [#allocation22], %s180
      %s182 = sshll.u32 [#allocation23], 4
      %s183 = int_to_ptr.vmem [resolvable:$true] %s182
      %188 = dma.hbm_to_vmem [thread:$0]  %s15, 256, %s183, [#allocation22], 64, 64, 4
    $region65: #{tpu_custom_call.1} parent=1 // pred_fallthru
      _
    // Predicated region
    $region66: #{tpu_custom_call.1} parent=1 // pred_check
      _
    $region67: #{tpu_custom_call.1} parent=1 // pred_check_branch
      %190 = sbr.rel (0) target = $region69
    $region68: #{tpu_custom_call.1} parent=1 // pred_region
      %s192 = ssub.s32 16, 16
      %193 = vsyncadd [#allocation25], %s192
      %s195 = sshll.u32 [#allocation24], 4
      %s196 = int_to_ptr.vmem [resolvable:$true] %s195
      %198 = dma.hbm_to_vmem [thread:$0]  %s16, 16, %s196, [#allocation25]
    $region69: #{tpu_custom_call.1} parent=1 // pred_fallthru
      _
    // Predicated region
    $region70: #{tpu_custom_call.1} parent=1 // pred_check
      _
    $region71: #{tpu_custom_call.1} parent=1 // pred_check_branch
      %200 = sbr.rel (0) target = $region73
    $region72: #{tpu_custom_call.1} parent=1 // pred_region
      _
    $region73: #{tpu_custom_call.1} parent=1 // pred_fallthru
      _
    // Predicated region
    $region74: #{tpu_custom_call.1} parent=1 // pred_check
      _
    $region75: #{tpu_custom_call.1} parent=1 // pred_check_branch
      %202 = sbr.rel (0) target = $region77
    $region76: #{tpu_custom_call.1} parent=1 // pred_region
      %s204 = ssub.s32 16, 16
      %205 = vsyncadd [#allocation25], %s204
      %s207 = sshll.u32 [#allocation26], 4
      %s208 = int_to_ptr.vmem [resolvable:$true] %s207
      %210 = dma.hbm_to_vmem [thread:$0]  %s18, 16, %s208, [#allocation25]
    $region77: #{tpu_custom_call.1} parent=1 // pred_fallthru
      _
    // Predicated region
    $region78: #{tpu_custom_call.1} parent=1 // pred_check
      _
    $region79: #{tpu_custom_call.1} parent=1 // pred_check_branch
      %212 = sbr.rel (0) target = $region81
    $region80: #{tpu_custom_call.1} parent=1 // pred_region
      %s214 = ssub.s32 256, 256
      %215 = vsyncadd [#allocation28], %s214
      %s216 = sshll.u32 [#allocation27], 4
      %s217 = int_to_ptr.vmem [resolvable:$true] %s216
      %222 = dma.hbm_to_vmem [thread:$0]  %s19, 256, %s217, [#allocation28], 64, 64, 4
    $region81: #{tpu_custom_call.1} parent=1 // pred_fallthru
      _
    // Predicated region
    $region82: #{tpu_custom_call.1} parent=1 // pred_check
      _
    $region83: #{tpu_custom_call.1} parent=1 // pred_check_branch
      %224 = sbr.rel (0) target = $region85
    $region84: #{tpu_custom_call.1} parent=1 // pred_region
      %s226 = ssub.s32 16, 16
      %227 = vsyncadd [#allocation28], %s226
      %s229 = sshll.u32 [#allocation29], 4
      %s230 = int_to_ptr.vmem [resolvable:$true] %s229
      %232 = dma.hbm_to_vmem [thread:$0]  %s20, 16, %s230, [#allocation28]
    $region85: #{tpu_custom_call.1} parent=1 // pred_fallthru
      _
    // Predicated region
    $region86: #{tpu_custom_call.1} parent=1 // pred_check
      _
    $region87: #{tpu_custom_call.1} parent=1 // pred_check_branch
      %234 = sbr.rel (0) target = $region89
    $region88: #{tpu_custom_call.1} parent=1 // pred_region
      %s236 = ssub.s32 256, 256
      %237 = vsyncadd [#allocation31], %s236
      %s238 = sshll.u32 [#allocation30], 4
      %s239 = int_to_ptr.vmem [resolvable:$true] %s238
      %244 = dma.hbm_to_vmem [thread:$0]  %s21, 256, %s239, [#allocation31], 64, 64, 4
    $region89: #{tpu_custom_call.1} parent=1 // pred_fallthru
      _
    // Predicated region
    $region90: #{tpu_custom_call.1} parent=1 // pred_check
      _
    $region91: #{tpu_custom_call.1} parent=1 // pred_check_branch
      %246 = sbr.rel (0) target = $region93
    $region92: #{tpu_custom_call.1} parent=1 // pred_region
      %s248 = ssub.s32 16, 16
      %249 = vsyncadd [#allocation31], %s248
      %s251 = sshll.u32 [#allocation32], 4
      %s252 = int_to_ptr.vmem [resolvable:$true] %s251
      %254 = dma.hbm_to_vmem [thread:$0]  %s22, 16, %s252, [#allocation31]
    $region93: #{tpu_custom_call.1} parent=1 // pred_fallthru
      _
    // Predicated region
    $region94: #{tpu_custom_call.1} parent=1 // pred_check
      _
    $region95: #{tpu_custom_call.1} parent=1 // pred_check_branch
      %256 = sbr.rel (0) target = $region97
    $region96: #{tpu_custom_call.1} parent=1 // pred_region
      _
    $region97: #{tpu_custom_call.1} parent=1 // pred_fallthru
      _
    // Predicated region
    $region98: #{tpu_custom_call.1} parent=1 // pred_check
      _
    $region99: #{tpu_custom_call.1} parent=1 // pred_check_branch
      %258 = sbr.rel (0) target = $region101
    $region100: #{tpu_custom_call.1} parent=1 // pred_region
      %s260 = ssub.s32 16, 16
      %261 = vsyncadd [#allocation34], %s260
      %s263 = sshll.u32 [#allocation33], 4
      %s264 = int_to_ptr.vmem [resolvable:$true] %s263
      %266 = dma.hbm_to_vmem [thread:$0]  %s24, 16, %s264, [#allocation34]
    $region101: #{tpu_custom_call.1} parent=1 // pred_fallthru
      _
    // Predicated region
    $region102: #{tpu_custom_call.1} parent=1 // pred_check
      _
    $region103: #{tpu_custom_call.1} parent=1 // pred_check_branch
      %268 = sbr.rel (0) target = $region105
    $region104: #{tpu_custom_call.1} parent=1 // pred_region
      %s270 = ssub.s32 256, 256
      %271 = vsyncadd [#allocation34], %s270
      %s272 = sshll.u32 [#allocation35], 4
      %s273 = int_to_ptr.vmem [resolvable:$true] %s272
      %278 = dma.hbm_to_vmem [thread:$0]  %s25, 256, %s273, [#allocation34], 64, 64, 4
    $region105: #{tpu_custom_call.1} parent=1 // pred_fallthru
      _
    // Predicated region
    $region106: #{tpu_custom_call.1} parent=1 // pred_check
      _
    $region107: #{tpu_custom_call.1} parent=1 // pred_check_branch
      %280 = sbr.rel (0) target = $region109
    $region108: #{tpu_custom_call.1} parent=1 // pred_region
      %s282 = ssub.s32 16, 16
      %283 = vsyncadd [#allocation37], %s282
      %s285 = sshll.u32 [#allocation36], 4
      %s286 = int_to_ptr.vmem [resolvable:$true] %s285
      %288 = dma.hbm_to_vmem [thread:$0]  %s26, 16, %s286, [#allocation37]
    $region109: #{tpu_custom_call.1} parent=1 // pred_fallthru
      _
    // Predicated region
    $region110: #{tpu_custom_call.1} parent=1 // pred_check
      _
    $region111: #{tpu_custom_call.1} parent=1 // pred_check_branch
      %290 = sbr.rel (0) target = $region113
    $region112: #{tpu_custom_call.1} parent=1 // pred_region
      %291 = dma.done [#allocation4], 256
    $region113: #{tpu_custom_call.1} parent=1 // pred_fallthru
      _
    // Predicated region
    $region114: #{tpu_custom_call.1} parent=1 // pred_check
      _
    $region115: #{tpu_custom_call.1} parent=1 // pred_check_branch
      %293 = sbr.rel (0) target = $region117
    $region116: #{tpu_custom_call.1} parent=1 // pred_region
      %294 = dma.done [#allocation7], 13824
    $region117: #{tpu_custom_call.1} parent=1 // pred_fallthru
      _
    // Predicated region
    $region118: #{tpu_custom_call.1} parent=1 // pred_check
      _
    $region119: #{tpu_custom_call.1} parent=1 // pred_check_branch
      %296 = sbr.rel (0) target = $region121
    $region120: #{tpu_custom_call.1} parent=1 // pred_region
      %297 = dma.done [#allocation7], 192
    $region121: #{tpu_custom_call.1} parent=1 // pred_fallthru
      _
    // Predicated region
    $region122: #{tpu_custom_call.1} parent=1 // pred_check
      _
    $region123: #{tpu_custom_call.1} parent=1 // pred_check_branch
      %299 = sbr.rel (0) target = $region125
    $region124: #{tpu_custom_call.1} parent=1 // pred_region
      %300 = dma.done [#allocation10], 35328
    $region125: #{tpu_custom_call.1} parent=1 // pred_fallthru
      _
    // Predicated region
    $region126: #{tpu_custom_call.1} parent=1 // pred_check
      _
    $region127: #{tpu_custom_call.1} parent=1 // pred_check_branch
      %302 = sbr.rel (0) target = $region129
    $region128: #{tpu_custom_call.1} parent=1 // pred_region
      %303 = dma.done [#allocation10], 48
    $region129: #{tpu_custom_call.1} parent=1 // pred_fallthru
      _
    // Predicated region
    $region130: #{tpu_custom_call.1} parent=1 // pred_check
      _
    $region131: #{tpu_custom_call.1} parent=1 // pred_check_branch
      %305 = sbr.rel (0) target = $region133
    $region132: #{tpu_custom_call.1} parent=1 // pred_region
      %306 = dma.done [#allocation13], 16
    $region133: #{tpu_custom_call.1} parent=1 // pred_fallthru
      _
    // Predicated region
    $region134: #{tpu_custom_call.1} parent=1 // pred_check
      _
    $region135: #{tpu_custom_call.1} parent=1 // pred_check_branch
      %308 = sbr.rel (0) target = $region137
    $region136: #{tpu_custom_call.1} parent=1 // pred_region
      %309 = dma.done [#allocation13], 16
    $region137: #{tpu_custom_call.1} parent=1 // pred_fallthru
      _
    // Predicated region
    $region138: #{tpu_custom_call.1} parent=1 // pred_check
      _
    $region139: #{tpu_custom_call.1} parent=1 // pred_check_branch
      %311 = sbr.rel (0) target = $region141
    $region140: #{tpu_custom_call.1} parent=1 // pred_region
      %312 = dma.done [#allocation16], 16
    $region141: #{tpu_custom_call.1} parent=1 // pred_fallthru
      _
    // Predicated region
    $region142: #{tpu_custom_call.1} parent=1 // pred_check
      _
    $region143: #{tpu_custom_call.1} parent=1 // pred_check_branch
      %314 = sbr.rel (0) target = $region145
    $region144: #{tpu_custom_call.1} parent=1 // pred_region
      %315 = dma.done [#allocation16], 16
    $region145: #{tpu_custom_call.1} parent=1 // pred_fallthru
      _
    // Predicated region
    $region146: #{tpu_custom_call.1} parent=1 // pred_check
      _
    $region147: #{tpu_custom_call.1} parent=1 // pred_check_branch
      %317 = sbr.rel (0) target = $region149
    $region148: #{tpu_custom_call.1} parent=1 // pred_region
      %318 = dma.done [#allocation19], 16
    $region149: #{tpu_custom_call.1} parent=1 // pred_fallthru
      _
    // Predicated region
    $region150: #{tpu_custom_call.1} parent=1 // pred_check
      _
    $region151: #{tpu_custom_call.1} parent=1 // pred_check_branch
      %320 = sbr.rel (0) target = $region153
    $region152: #{tpu_custom_call.1} parent=1 // pred_region
      %321 = dma.done [#allocation19], 256
    $region153: #{tpu_custom_call.1} parent=1 // pred_fallthru
      _
    // Predicated region
    $region154: #{tpu_custom_call.1} parent=1 // pred_check
      _
    $region155: #{tpu_custom_call.1} parent=1 // pred_check_branch
      %323 = sbr.rel (0) target = $region157
    $region156: #{tpu_custom_call.1} parent=1 // pred_region
      %324 = dma.done [#allocation22], 16
    $region157: #{tpu_custom_call.1} parent=1 // pred_fallthru
      _
    // Predicated region
    $region158: #{tpu_custom_call.1} parent=1 // pred_check
      _
    $region159: #{tpu_custom_call.1} parent=1 // pred_check_branch
      %326 = sbr.rel (0) target = $region161
    $region160: #{tpu_custom_call.1} parent=1 // pred_region
      %327 = dma.done [#allocation22], 256
    $region161: #{tpu_custom_call.1} parent=1 // pred_fallthru
      _
    // Predicated region
    $region162: #{tpu_custom_call.1} parent=1 // pred_check
      _
    $region163: #{tpu_custom_call.1} parent=1 // pred_check_branch
      %329 = sbr.rel (0) target = $region165
    $region164: #{tpu_custom_call.1} parent=1 // pred_region
      %330 = dma.done [#allocation25], 16
    $region165: #{tpu_custom_call.1} parent=1 // pred_fallthru
      _
    // Predicated region
    $region166: #{tpu_custom_call.1} parent=1 // pred_check
      _
    $region167: #{tpu_custom_call.1} parent=1 // pred_check_branch
      %332 = sbr.rel (0) target = $region169
    $region168: #{tpu_custom_call.1} parent=1 // pred_region
      %333 = dma.done [#allocation25], 16
    $region169: #{tpu_custom_call.1} parent=1 // pred_fallthru
      _
    // Predicated region
    $region170: #{tpu_custom_call.1} parent=1 // pred_check
      _
    $region171: #{tpu_custom_call.1} parent=1 // pred_check_branch
      %335 = sbr.rel (0) target = $region173
    $region172: #{tpu_custom_call.1} parent=1 // pred_region
      %336 = dma.done [#allocation28], 256
    $region173: #{tpu_custom_call.1} parent=1 // pred_fallthru
      _
    // Predicated region
    $region174: #{tpu_custom_call.1} parent=1 // pred_check
      _
    $region175: #{tpu_custom_call.1} parent=1 // pred_check_branch
      %338 = sbr.rel (0) target = $region177
    $region176: #{tpu_custom_call.1} parent=1 // pred_region
      %339 = dma.done [#allocation28], 16
    $region177: #{tpu_custom_call.1} parent=1 // pred_fallthru
      _
    // Predicated region
    $region178: #{tpu_custom_call.1} parent=1 // pred_check
      _
    $region179: #{tpu_custom_call.1} parent=1 // pred_check_branch
      %341 = sbr.rel (0) target = $region181
    $region180: #{tpu_custom_call.1} parent=1 // pred_region
      %342 = dma.done [#allocation31], 256
    $region181: #{tpu_custom_call.1} parent=1 // pred_fallthru
      _
    // Predicated region
    $region182: #{tpu_custom_call.1} parent=1 // pred_check
      _
    $region183: #{tpu_custom_call.1} parent=1 // pred_check_branch
      %344 = sbr.rel (0) target = $region185
    $region184: #{tpu_custom_call.1} parent=1 // pred_region
      %345 = dma.done [#allocation31], 16
    $region185: #{tpu_custom_call.1} parent=1 // pred_fallthru
      _
    // Predicated region
    $region186: #{tpu_custom_call.1} parent=1 // pred_check
      _
    $region187: #{tpu_custom_call.1} parent=1 // pred_check_branch
      %347 = sbr.rel (0) target = $region189
    $region188: #{tpu_custom_call.1} parent=1 // pred_region
      %348 = dma.done [#allocation34], 16
    $region189: #{tpu_custom_call.1} parent=1 // pred_fallthru
      _
    // Predicated region
    $region190: #{tpu_custom_call.1} parent=1 // pred_check
      _
    $region191: #{tpu_custom_call.1} parent=1 // pred_check_branch
      %350 = sbr.rel (0) target = $region193
    $region192: #{tpu_custom_call.1} parent=1 // pred_region
      %351 = dma.done [#allocation34], 256
    $region193: #{tpu_custom_call.1} parent=1 // pred_fallthru
      _
    // Predicated region
    $region194: #{tpu_custom_call.1} parent=1 // pred_check
      _
    $region195: #{tpu_custom_call.1} parent=1 // pred_check_branch
      %353 = sbr.rel (0) target = $region197
    $region196: #{tpu_custom_call.1} parent=1 // pred_region
      %354 = dma.done [#allocation37], 16
    $region197: #{tpu_custom_call.1} parent=1 // pred_fallthru
      _
    %v356 = vld [vmem:[#allocation3] sm:$0xff]
    %v357 = vld [vmem:[#allocation3 + $0x8] sm:$0xff]
    %v358 = vpack.c.bf16 %v356, %v356
    %v359 = vpack.c.bf16 %v357, %v357
    %v360 = vld [vmem:[#allocation6] sm:$0xff]
    %v361 = vld [vmem:[#allocation6 + $0x8] sm:$0xff]
    %v362 = vld [vmem:[#allocation6 + $0x10] sm:$0xff]
    %v363 = vld [vmem:[#allocation6 + $0x18] sm:$0xff]
    %v364 = vld [vmem:[#allocation6 + $0x20] sm:$0xff]
    %v365 = vld [vmem:[#allocation6 + $0x28] sm:$0xff]
    %v366 = vld [vmem:[#allocation6 + $0x30] sm:$0xff]
    %v367 = vld [vmem:[#allocation6 + $0x38] sm:$0xff]
    %v368 = vld [vmem:[#allocation6 + $0x40] sm:$0xff]
    %v369 = vld [vmem:[#allocation6 + $0x48] sm:$0xff]
    %v370 = vld [vmem:[#allocation6 + $0x50] sm:$0xff]
    %v371 = vld [vmem:[#allocation6 + $0x58] sm:$0xff]
    %v372 = vld [vmem:[#allocation6 + $0x60] sm:$0xff]
    %v373 = vld [vmem:[#allocation6 + $0x68] sm:$0xff]
    %v374 = vld [vmem:[#allocation6 + $0x70] sm:$0xff]
    %v375 = vld [vmem:[#allocation6 + $0x78] sm:$0xff]
    %v376 = vld [vmem:[#allocation6 + $0x80] sm:$0xff]
    %v377 = vld [vmem:[#allocation6 + $0x88] sm:$0xff]
    %v378 = vld [vmem:[#allocation6 + $0x90] sm:$0xff]
    %v379 = vld [vmem:[#allocation6 + $0x98] sm:$0xff]
    %v380 = vld [vmem:[#allocation6 + $0xa0] sm:$0xff]
    %v381 = vld [vmem:[#allocation6 + $0xa8] sm:$0xff]
    %v382 = vld [vmem:[#allocation6 + $0xb0] sm:$0xff]
    %v383 = vld [vmem:[#allocation6 + $0xb8] sm:$0xff]
    %v384 = vld [vmem:[#allocation6 + $0xc0] sm:$0xff]
    %v385 = vld [vmem:[#allocation6 + $0xc8] sm:$0xff]
    %v386 = vld [vmem:[#allocation6 + $0xd0] sm:$0xff]
    %v387 = vld [vmem:[#allocation6 + $0xd8] sm:$0xff]
    %v388 = vld [vmem:[#allocation6 + $0xe0] sm:$0xff]
    %v389 = vld [vmem:[#allocation6 + $0xe8] sm:$0xff]
    %v390 = vld [vmem:[#allocation6 + $0xf0] sm:$0xff]
    %v391 = vld [vmem:[#allocation6 + $0xf8] sm:$0xff]
    %v392 = vld [vmem:[#allocation6 + $0x100] sm:$0xff]
    %v393 = vld [vmem:[#allocation6 + $0x108] sm:$0xff]
    %v394 = vld [vmem:[#allocation6 + $0x110] sm:$0xff]
    %v395 = vld [vmem:[#allocation6 + $0x118] sm:$0xff]
    %v396 = vld [vmem:[#allocation6 + $0x120] sm:$0xff]
    %v397 = vld [vmem:[#allocation6 + $0x128] sm:$0xff]
    %v398 = vld [vmem:[#allocation6 + $0x130] sm:$0xff]
    %v399 = vld [vmem:[#allocation6 + $0x138] sm:$0xff]
    %v400 = vld [vmem:[#allocation6 + $0x140] sm:$0xff]
    %v401 = vld [vmem:[#allocation6 + $0x148] sm:$0xff]
    %v402 = vld [vmem:[#allocation6 + $0x150] sm:$0xff]
    %v403 = vld [vmem:[#allocation6 + $0x158] sm:$0xff]
    %v404 = vld [vmem:[#allocation6 + $0x160] sm:$0xff]
    %v405 = vld [vmem:[#allocation6 + $0x168] sm:$0xff]
    %v406 = vld [vmem:[#allocation6 + $0x170] sm:$0xff]
    %v407 = vld [vmem:[#allocation6 + $0x178] sm:$0xff]
    %v408 = vld [vmem:[#allocation6 + $0x180] sm:$0xff]
    %v409 = vld [vmem:[#allocation6 + $0x188] sm:$0xff]
    %v410 = vld [vmem:[#allocation6 + $0x190] sm:$0xff]
    %v411 = vld [vmem:[#allocation6 + $0x198] sm:$0xff]
    %v412 = vld [vmem:[#allocation6 + $0x1a0] sm:$0xff]
    %v413 = vld [vmem:[#allocation6 + $0x1a8] sm:$0xff]
    %v414 = vld [vmem:[#allocation6 + $0x1b0] sm:$0xff]
    %v415 = vld [vmem:[#allocation6 + $0x1b8] sm:$0xff]
    %v416 = vld [vmem:[#allocation6 + $0x1c0] sm:$0xff]
    %v417 = vld [vmem:[#allocation6 + $0x1c8] sm:$0xff]
    %v418 = vld [vmem:[#allocation6 + $0x1d0] sm:$0xff]
    %v419 = vld [vmem:[#allocation6 + $0x1d8] sm:$0xff]
    %v420 = vld [vmem:[#allocation6 + $0x1e0] sm:$0xff]
    %v421 = vld [vmem:[#allocation6 + $0x1e8] sm:$0xff]
    %v422 = vld [vmem:[#allocation6 + $0x1f0] sm:$0xff]
    %v423 = vld [vmem:[#allocation6 + $0x1f8] sm:$0xff]
    %v424 = vld [vmem:[#allocation6 + $0x200] sm:$0xff]
    %v425 = vld [vmem:[#allocation6 + $0x208] sm:$0xff]
    %v426 = vld [vmem:[#allocation6 + $0x210] sm:$0xff]
    %v427 = vld [vmem:[#allocation6 + $0x218] sm:$0xff]
    %v428 = vld [vmem:[#allocation6 + $0x220] sm:$0xff]
    %v429 = vld [vmem:[#allocation6 + $0x228] sm:$0xff]
    %v430 = vld [vmem:[#allocation6 + $0x230] sm:$0xff]
    %v431 = vld [vmem:[#allocation6 + $0x238] sm:$0xff]
    %v432 = vld [vmem:[#allocation6 + $0x240] sm:$0xff]
    %v433 = vld [vmem:[#allocation6 + $0x248] sm:$0xff]
    %v434 = vld [vmem:[#allocation6 + $0x250] sm:$0xff]
    %v435 = vld [vmem:[#allocation6 + $0x258] sm:$0xff]
    %v436 = vld [vmem:[#allocation6 + $0x260] sm:$0xff]
    %v437 = vld [vmem:[#allocation6 + $0x268] sm:$0xff]
    %v438 = vld [vmem:[#allocation6 + $0x270] sm:$0xff]
    %v439 = vld [vmem:[#allocation6 + $0x278] sm:$0xff]
    %v440 = vld [vmem:[#allocation6 + $0x280] sm:$0xff]
    %v441 = vld [vmem:[#allocation6 + $0x288] sm:$0xff]
    %v442 = vld [vmem:[#allocation6 + $0x290] sm:$0xff]
    %v443 = vld [vmem:[#allocation6 + $0x298] sm:$0xff]
    %v444 = vld [vmem:[#allocation6 + $0x2a0] sm:$0xff]
    %v445 = vld [vmem:[#allocation6 + $0x2a8] sm:$0xff]
    %v446 = vld [vmem:[#allocation6 + $0x2b0] sm:$0xff]
    %v447 = vld [vmem:[#allocation6 + $0x2b8] sm:$0xff]
    %v448 = vld [vmem:[#allocation6 + $0x2c0] sm:$0xff]
    %v449 = vld [vmem:[#allocation6 + $0x2c8] sm:$0xff]
    %v450 = vld [vmem:[#allocation6 + $0x2d0] sm:$0xff]
    %v451 = vld [vmem:[#allocation6 + $0x2d8] sm:$0xff]
    %v452 = vld [vmem:[#allocation6 + $0x2e0] sm:$0xff]
    %v453 = vld [vmem:[#allocation6 + $0x2e8] sm:$0xff]
    %v454 = vld [vmem:[#allocation6 + $0x2f0] sm:$0xff]
    %v455 = vld [vmem:[#allocation6 + $0x2f8] sm:$0xff]
    %v456 = vld [vmem:[#allocation6 + $0x300] sm:$0xff]
    %v457 = vld [vmem:[#allocation6 + $0x308] sm:$0xff]
    %v458 = vld [vmem:[#allocation6 + $0x310] sm:$0xff]
    %v459 = vld [vmem:[#allocation6 + $0x318] sm:$0xff]
    %v460 = vld [vmem:[#allocation6 + $0x320] sm:$0xff]
    %v461 = vld [vmem:[#allocation6 + $0x328] sm:$0xff]
    %v462 = vld [vmem:[#allocation6 + $0x330] sm:$0x11]
    %v463 = vld [vmem:[#allocation6 + $0x338] sm:$0x11]
    %v464 = vld [vmem:[#allocation6 + $0x340] sm:$0x11]
    %v465 = vld [vmem:[#allocation6 + $0x348] sm:$0x11]
    %v466 = vld [vmem:[#allocation6 + $0x350] sm:$0x11]
    %v467 = vld [vmem:[#allocation6 + $0x358] sm:$0x11]
    %v468 = vld [vmem:[#allocation8] sm:$0xff]
    %v469 = vld [vmem:[#allocation8 + $0x8] sm:$0xf]
    %v472 = vlaneseq
    %v473 = vshrl.u32 %v472, 7
    %v474 = vsub.s32 0, %v473
    %v475 = vrot.slane %v468, %v474
    %v476 = vlaneseq
    %v477 = vshrl.u32 %v476, 7
    %v478 = vsub.s32 1, %v477
    %v479 = vrot.slane %v468, %v478
    %v480 = vlaneseq
    %v481 = vshrl.u32 %v480, 7
    %v482 = vsub.s32 2, %v481
    %v483 = vrot.slane %v468, %v482
    %v484 = vlaneseq
    %v485 = vshrl.u32 %v484, 7
    %v486 = vsub.s32 3, %v485
    %v487 = vrot.slane %v468, %v486
    %v488 = vlaneseq
    %v489 = vshrl.u32 %v488, 7
    %v490 = vsub.s32 4, %v489
    %v491 = vrot.slane %v468, %v490
    %v492 = vlaneseq
    %v493 = vshrl.u32 %v492, 7
    %v494 = vsub.s32 5, %v493
    %v495 = vrot.slane %v468, %v494
    %v496 = vlaneseq
    %v497 = vshrl.u32 %v496, 7
    %v498 = vsub.s32 6, %v497
    %v499 = vrot.slane %v468, %v498
    %v500 = vlaneseq
    %v501 = vshrl.u32 %v500, 7
    %v502 = vsub.s32 7, %v501
    %v503 = vrot.slane %v468, %v502
    %v504 = vlaneseq
    %v505 = vshrl.u32 %v504, 7
    %v506 = vsub.s32 0, %v505
    %v507 = vrot.slane %v469, %v506
    %v508 = vlaneseq
    %v509 = vshrl.u32 %v508, 7
    %v510 = vsub.s32 1, %v509
    %v511 = vrot.slane %v469, %v510
    %v512 = vlaneseq
    %v513 = vshrl.u32 %v512, 7
    %v514 = vsub.s32 2, %v513
    %v515 = vrot.slane %v469, %v514
    %v516 = vlaneseq
    %v517 = vshrl.u32 %v516, 7
    %v518 = vsub.s32 3, %v517
    %v519 = vrot.slane %v469, %v518
    %534 = vrot.lane.b32.xlu0 %v358, 110
    %v535 = vpop.permute.xlu0 %534
    %536 = vrot.lane.b32.xlu0 %v359, 110
    %v537 = vpop.permute.xlu0 %536
    %vm538 = vcmask 900096
    %v539 = vsel %vm538, %v535, %v537
    %v649 = vunpack.c.l.b16 %v360
    %v650 = vunpack.c.h.b16 %v360
    %v651 = vunpack.c.l.b16 %v361
    %v652 = vunpack.c.h.b16 %v361
    %v653 = vunpack.c.l.b16 %v362
    %v654 = vunpack.c.h.b16 %v362
    %v655 = vunpack.c.l.b16 %v363
    %v656 = vunpack.c.h.b16 %v363
    %v657 = vunpack.c.l.b16 %v364
    %v658 = vunpack.c.h.b16 %v364
    %v659 = vunpack.c.l.b16 %v365
    %v660 = vunpack.c.h.b16 %v365
    %v661 = vunpack.c.l.b16 %v366
    %v662 = vunpack.c.h.b16 %v366
    %v663 = vunpack.c.l.b16 %v367
    %v664 = vunpack.c.h.b16 %v367
    %v665 = vunpack.c.l.b16 %v368
    %v666 = vunpack.c.h.b16 %v368
    %v667 = vunpack.c.l.b16 %v369
    %v668 = vunpack.c.h.b16 %v369
    %v669 = vunpack.c.l.b16 %v370
    %v670 = vunpack.c.h.b16 %v370
    %v671 = vunpack.c.l.b16 %v371
    %v672 = vunpack.c.h.b16 %v371
    %v673 = vunpack.c.l.b16 %v372
    %v674 = vunpack.c.h.b16 %v372
    %v675 = vunpack.c.l.b16 %v373
    %v676 = vunpack.c.h.b16 %v373
    %v677 = vunpack.c.l.b16 %v374
    %v678 = vunpack.c.h.b16 %v374
    %v679 = vunpack.c.l.b16 %v375
    %v680 = vunpack.c.h.b16 %v375
    %v681 = vunpack.c.l.b16 %v376
    %v682 = vunpack.c.h.b16 %v376
    %v683 = vunpack.c.l.b16 %v377
    %v684 = vunpack.c.h.b16 %v377
    %v685 = vunpack.c.l.b16 %v378
    %v686 = vunpack.c.h.b16 %v378
    %v687 = vunpack.c.l.b16 %v379
    %v688 = vunpack.c.h.b16 %v379
    %v689 = vunpack.c.l.b16 %v380
    %v690 = vunpack.c.h.b16 %v380
    %v691 = vunpack.c.l.b16 %v381
    %v692 = vunpack.c.h.b16 %v381
    %v693 = vunpack.c.l.b16 %v382
    %v694 = vunpack.c.h.b16 %v382
    %v695 = vunpack.c.l.b16 %v383
    %v696 = vunpack.c.h.b16 %v383
    %v697 = vunpack.c.l.b16 %v384
    %v698 = vunpack.c.h.b16 %v384
    %v699 = vunpack.c.l.b16 %v385
    %v700 = vunpack.c.h.b16 %v385
    %v701 = vunpack.c.l.b16 %v386
    %v702 = vunpack.c.h.b16 %v386
    %v703 = vunpack.c.l.b16 %v387
    %v704 = vunpack.c.h.b16 %v387
    %v705 = vunpack.c.l.b16 %v388
    %v706 = vunpack.c.h.b16 %v388
    %v707 = vunpack.c.l.b16 %v389
    %v708 = vunpack.c.h.b16 %v389
    %v709 = vunpack.c.l.b16 %v390
    %v710 = vunpack.c.h.b16 %v390
    %v711 = vunpack.c.l.b16 %v391
    %v712 = vunpack.c.h.b16 %v391
    %v713 = vunpack.c.l.b16 %v392
    %v714 = vunpack.c.h.b16 %v392
    %v715 = vunpack.c.l.b16 %v393
    %v716 = vunpack.c.h.b16 %v393
    %v717 = vunpack.c.l.b16 %v394
    %v718 = vunpack.c.h.b16 %v394
    %v719 = vunpack.c.l.b16 %v395
    %v720 = vunpack.c.h.b16 %v395
    %v721 = vunpack.c.l.b16 %v396
    %v722 = vunpack.c.h.b16 %v396
    %v723 = vunpack.c.l.b16 %v397
    %v724 = vunpack.c.h.b16 %v397
    %v725 = vunpack.c.l.b16 %v398
    %v726 = vunpack.c.h.b16 %v398
    %v727 = vunpack.c.l.b16 %v399
    %v728 = vunpack.c.h.b16 %v399
    %v729 = vunpack.c.l.b16 %v400
    %v730 = vunpack.c.h.b16 %v400
    %v731 = vunpack.c.l.b16 %v401
    %v732 = vunpack.c.h.b16 %v401
    %v733 = vunpack.c.l.b16 %v402
    %v734 = vunpack.c.h.b16 %v402
    %v735 = vunpack.c.l.b16 %v403
    %v736 = vunpack.c.h.b16 %v403
    %v737 = vunpack.c.l.b16 %v404
    %v738 = vunpack.c.h.b16 %v404
    %v739 = vunpack.c.l.b16 %v405
    %v740 = vunpack.c.h.b16 %v405
    %v741 = vunpack.c.l.b16 %v406
    %v742 = vunpack.c.h.b16 %v406
    %v743 = vunpack.c.l.b16 %v407
    %v744 = vunpack.c.h.b16 %v407
    %v745 = vunpack.c.l.b16 %v408
    %v746 = vunpack.c.h.b16 %v408
    %v747 = vunpack.c.l.b16 %v409
    %v748 = vunpack.c.h.b16 %v409
    %v749 = vunpack.c.l.b16 %v410
    %v750 = vunpack.c.h.b16 %v410
    %v751 = vunpack.c.l.b16 %v411
    %v752 = vunpack.c.h.b16 %v411
    %v753 = vunpack.c.l.b16 %v412
    %v754 = vunpack.c.h.b16 %v412
    %v755 = vunpack.c.l.b16 %v413
    %v756 = vunpack.c.h.b16 %v413
    %v757 = vunpack.c.l.b16 %v414
    %v758 = vunpack.c.h.b16 %v414
    %v759 = vunpack.c.l.b16 %v415
    %v760 = vunpack.c.h.b16 %v415
    %v761 = vunpack.c.l.b16 %v416
    %v762 = vunpack.c.h.b16 %v416
    %v763 = vunpack.c.l.b16 %v417
    %v764 = vunpack.c.h.b16 %v417
    %v765 = vunpack.c.l.b16 %v418
    %v766 = vunpack.c.h.b16 %v418
    %v767 = vunpack.c.l.b16 %v419
    %v768 = vunpack.c.h.b16 %v419
    %v769 = vunpack.c.l.b16 %v420
    %v770 = vunpack.c.h.b16 %v420
    %v771 = vunpack.c.l.b16 %v421
    %v772 = vunpack.c.h.b16 %v421
    %v773 = vunpack.c.l.b16 %v422
    %v774 = vunpack.c.h.b16 %v422
    %v775 = vunpack.c.l.b16 %v423
    %v776 = vunpack.c.h.b16 %v423
    %v777 = vunpack.c.l.b16 %v424
    %v778 = vunpack.c.h.b16 %v424
    %v779 = vunpack.c.l.b16 %v425
    %v780 = vunpack.c.h.b16 %v425
    %v781 = vunpack.c.l.b16 %v426
    %v782 = vunpack.c.h.b16 %v426
    %v783 = vunpack.c.l.b16 %v427
    %v784 = vunpack.c.h.b16 %v427
    %v785 = vunpack.c.l.b16 %v428
    %v786 = vunpack.c.h.b16 %v428
    %v787 = vunpack.c.l.b16 %v429
    %v788 = vunpack.c.h.b16 %v429
    %v789 = vunpack.c.l.b16 %v430
    %v790 = vunpack.c.h.b16 %v430
    %v791 = vunpack.c.l.b16 %v431
    %v792 = vunpack.c.h.b16 %v431
    %v793 = vunpack.c.l.b16 %v432
    %v794 = vunpack.c.h.b16 %v432
    %v795 = vunpack.c.l.b16 %v433
    %v796 = vunpack.c.h.b16 %v433
    %v797 = vunpack.c.l.b16 %v434
    %v798 = vunpack.c.h.b16 %v434
    %v799 = vunpack.c.l.b16 %v435
    %v800 = vunpack.c.h.b16 %v435
    %v801 = vunpack.c.l.b16 %v436
    %v802 = vunpack.c.h.b16 %v436
    %v803 = vunpack.c.l.b16 %v437
    %v804 = vunpack.c.h.b16 %v437
    %v805 = vunpack.c.l.b16 %v438
    %v806 = vunpack.c.h.b16 %v438
    %v807 = vunpack.c.l.b16 %v439
    %v808 = vunpack.c.h.b16 %v439
    %v809 = vunpack.c.l.b16 %v440
    %v810 = vunpack.c.h.b16 %v440
    %v811 = vunpack.c.l.b16 %v441
    %v812 = vunpack.c.h.b16 %v441
    %v813 = vunpack.c.l.b16 %v442
    %v814 = vunpack.c.h.b16 %v442
    %v815 = vunpack.c.l.b16 %v443
    %v816 = vunpack.c.h.b16 %v443
    %v817 = vunpack.c.l.b16 %v444
    %v818 = vunpack.c.h.b16 %v444
    %v819 = vunpack.c.l.b16 %v445
    %v820 = vunpack.c.h.b16 %v445
    %v821 = vunpack.c.l.b16 %v446
    %v822 = vunpack.c.h.b16 %v446
    %v823 = vunpack.c.l.b16 %v447
    %v824 = vunpack.c.h.b16 %v447
    %v825 = vunpack.c.l.b16 %v448
    %v826 = vunpack.c.h.b16 %v448
    %v827 = vunpack.c.l.b16 %v449
    %v828 = vunpack.c.h.b16 %v449
    %v829 = vunpack.c.l.b16 %v450
    %v830 = vunpack.c.h.b16 %v450
    %v831 = vunpack.c.l.b16 %v451
    %v832 = vunpack.c.h.b16 %v451
    %v833 = vunpack.c.l.b16 %v452
    %v834 = vunpack.c.h.b16 %v452
    %v835 = vunpack.c.l.b16 %v453
    %v836 = vunpack.c.h.b16 %v453
    %v837 = vunpack.c.l.b16 %v454
    %v838 = vunpack.c.h.b16 %v454
    %v839 = vunpack.c.l.b16 %v455
    %v840 = vunpack.c.h.b16 %v455
    %v841 = vunpack.c.l.b16 %v456
    %v842 = vunpack.c.h.b16 %v456
    %v843 = vunpack.c.l.b16 %v457
    %v844 = vunpack.c.h.b16 %v457
    %v845 = vunpack.c.l.b16 %v458
    %v846 = vunpack.c.h.b16 %v458
    %v847 = vunpack.c.l.b16 %v459
    %v848 = vunpack.c.h.b16 %v459
    %v849 = vunpack.c.l.b16 %v460
    %v850 = vunpack.c.h.b16 %v460
    %v851 = vunpack.c.l.b16 %v461
    %v852 = vunpack.c.h.b16 %v461
    %v853 = vunpack.c.l.b16 %v462
    %v854 = vunpack.c.h.b16 %v462
    %v855 = vunpack.c.l.b16 %v463
    %v856 = vunpack.c.h.b16 %v463
    %v857 = vunpack.c.l.b16 %v464
    %v858 = vunpack.c.h.b16 %v464
    %v859 = vunpack.c.l.b16 %v465
    %v860 = vunpack.c.h.b16 %v465
    %v861 = vunpack.c.l.b16 %v466
    %v862 = vunpack.c.h.b16 %v466
    %v863 = vunpack.c.l.b16 %v467
    %v864 = vunpack.c.h.b16 %v467
    %v865 = vpack.c.b16 %v661, %v649
    %v866 = vpack.c.b16 %v662, %v650
    %v867 = vpack.c.b16 %v663, %v651
    %v868 = vpack.c.b16 %v664, %v652
    %v869 = vpack.c.b16 %v665, %v653
    %v870 = vpack.c.b16 %v666, %v654
    %v871 = vpack.c.b16 %v667, %v655
    %v872 = vpack.c.b16 %v668, %v656
    %v873 = vpack.c.b16 %v669, %v657
    %v874 = vpack.c.b16 %v670, %v658
    %v875 = vpack.c.b16 %v671, %v659
    %v876 = vpack.c.b16 %v672, %v660
    %v877 = vpack.c.b16 %v685, %v673
    %v878 = vpack.c.b16 %v686, %v674
    %v879 = vpack.c.b16 %v687, %v675
    %v880 = vpack.c.b16 %v688, %v676
    %v881 = vpack.c.b16 %v689, %v677
    %v882 = vpack.c.b16 %v690, %v678
    %v883 = vpack.c.b16 %v691, %v679
    %v884 = vpack.c.b16 %v692, %v680
    %v885 = vpack.c.b16 %v693, %v681
    %v886 = vpack.c.b16 %v694, %v682
    %v887 = vpack.c.b16 %v695, %v683
    %v888 = vpack.c.b16 %v696, %v684
    %v889 = vpack.c.b16 %v709, %v697
    %v890 = vpack.c.b16 %v710, %v698
    %v891 = vpack.c.b16 %v711, %v699
    %v892 = vpack.c.b16 %v712, %v700
    %v893 = vpack.c.b16 %v713, %v701
    %v894 = vpack.c.b16 %v714, %v702
    %v895 = vpack.c.b16 %v715, %v703
    %v896 = vpack.c.b16 %v716, %v704
    %v897 = vpack.c.b16 %v717, %v705
    %v898 = vpack.c.b16 %v718, %v706
    %v899 = vpack.c.b16 %v719, %v707
    %v900 = vpack.c.b16 %v720, %v708
    %v901 = vpack.c.b16 %v733, %v721
    %v902 = vpack.c.b16 %v734, %v722
    %v903 = vpack.c.b16 %v735, %v723
    %v904 = vpack.c.b16 %v736, %v724
    %v905 = vpack.c.b16 %v737, %v725
    %v906 = vpack.c.b16 %v738, %v726
    %v907 = vpack.c.b16 %v739, %v727
    %v908 = vpack.c.b16 %v740, %v728
    %v909 = vpack.c.b16 %v741, %v729
    %v910 = vpack.c.b16 %v742, %v730
    %v911 = vpack.c.b16 %v743, %v731
    %v912 = vpack.c.b16 %v744, %v732
    %v913 = vpack.c.b16 %v757, %v745
    %v914 = vpack.c.b16 %v758, %v746
    %v915 = vpack.c.b16 %v759, %v747
    %v916 = vpack.c.b16 %v760, %v748
    %v917 = vpack.c.b16 %v761, %v749
    %v918 = vpack.c.b16 %v762, %v750
    %v919 = vpack.c.b16 %v763, %v751
    %v920 = vpack.c.b16 %v764, %v752
    %v921 = vpack.c.b16 %v765, %v753
    %v922 = vpack.c.b16 %v766, %v754
    %v923 = vpack.c.b16 %v767, %v755
    %v924 = vpack.c.b16 %v768, %v756
    %v925 = vpack.c.b16 %v781, %v769
    %v926 = vpack.c.b16 %v782, %v770
    %v927 = vpack.c.b16 %v783, %v771
    %v928 = vpack.c.b16 %v784, %v772
    %v929 = vpack.c.b16 %v785, %v773
    %v930 = vpack.c.b16 %v786, %v774
    %v931 = vpack.c.b16 %v787, %v775
    %v932 = vpack.c.b16 %v788, %v776
    %v933 = vpack.c.b16 %v789, %v777
    %v934 = vpack.c.b16 %v790, %v778
    %v935 = vpack.c.b16 %v791, %v779
    %v936 = vpack.c.b16 %v792, %v780
    %v937 = vpack.c.b16 %v805, %v793
    %v938 = vpack.c.b16 %v806, %v794
    %v939 = vpack.c.b16 %v807, %v795
    %v940 = vpack.c.b16 %v808, %v796
    %v941 = vpack.c.b16 %v809, %v797
    %v942 = vpack.c.b16 %v810, %v798
    %v943 = vpack.c.b16 %v811, %v799
    %v944 = vpack.c.b16 %v812, %v800
    %v945 = vpack.c.b16 %v813, %v801
    %v946 = vpack.c.b16 %v814, %v802
    %v947 = vpack.c.b16 %v815, %v803
    %v948 = vpack.c.b16 %v816, %v804
    %v949 = vpack.c.b16 %v829, %v817
    %v950 = vpack.c.b16 %v830, %v818
    %v951 = vpack.c.b16 %v831, %v819
    %v952 = vpack.c.b16 %v832, %v820
    %v953 = vpack.c.b16 %v833, %v821
    %v954 = vpack.c.b16 %v834, %v822
    %v955 = vpack.c.b16 %v835, %v823
    %v956 = vpack.c.b16 %v836, %v824
    %v957 = vpack.c.b16 %v837, %v825
    %v958 = vpack.c.b16 %v838, %v826
    %v959 = vpack.c.b16 %v839, %v827
    %v960 = vpack.c.b16 %v840, %v828
    %v961 = vpack.c.b16 %v853, %v841
    %v962 = vpack.c.b16 %v854, %v842
    %v963 = vpack.c.b16 %v855, %v843
    %v964 = vpack.c.b16 %v856, %v844
    %v965 = vpack.c.b16 %v857, %v845
    %v966 = vpack.c.b16 %v858, %v846
    %v967 = vpack.c.b16 %v859, %v847
    %v968 = vpack.c.b16 %v860, %v848
    %v969 = vpack.c.b16 %v861, %v849
    %v970 = vpack.c.b16 %v862, %v850
    %v971 = vpack.c.b16 %v863, %v851
    %v972 = vpack.c.b16 %v864, %v852
    %vm1069 = vcmask 80896
    %v1071 = vsel %vm1069, %v537, 0
    %vm1073 = vcmask 1044480
    %v1075 = vsel %vm1073, %v961, 0
    %v1078 = vsel %vm1073, %v962, 0
    %v1081 = vsel %vm1073, %v963, 0
    %v1084 = vsel %vm1073, %v964, 0
    %v1087 = vsel %vm1073, %v965, 0
    %v1090 = vsel %vm1073, %v966, 0
    %v1093 = vsel %vm1073, %v967, 0
    %v1096 = vsel %vm1073, %v968, 0
    %v1099 = vsel %vm1073, %v969, 0
    %v1102 = vsel %vm1073, %v970, 0
    %v1105 = vsel %vm1073, %v971, 0
    %v1108 = vsel %vm1073, %v972, 0
    %1110 = vmatprep.subr.bf16.mxu0 %v866
    %1111 = vmatpush1.bf16.msra.mxu0 %v865
    %1112 = vmatprep.subr.bf16.mxu0 %v878
    %1113 = vmatpush1.bf16.msra.mxu0 %v877
    %1114 = vmatprep.subr.bf16.mxu0 %v890
    %1115 = vmatpush1.bf16.msra.mxu0 %v889
    %1116 = vmatprep.subr.bf16.mxu0 %v902
    %1117 = vmatpush1.bf16.msra.mxu0 %v901
    %1118 = vmatprep.subr.bf16.mxu0 %v914
    %1119 = vmatpush1.bf16.msra.mxu0 %v913
    %1120 = vmatprep.subr.bf16.mxu0 %v926
    %1121 = vmatpush1.bf16.msra.mxu0 %v925
    %1122 = vmatprep.subr.bf16.mxu0 %v938
    %1123 = vmatpush1.bf16.msra.mxu0 %v937
    %1124 = vmatprep.subr.bf16.mxu0 %v950
    %1125 = vmatpush1.bf16.msra.mxu0 %v949
    %1126 = vmatprep.subr.bf16.mxu0 %v1078
    %1127 = vmatpush1.bf16.msra.mxu0 %v1075
    %1128 = vmatprep.subr.bf16.mxu0 0
    %1129 = vmatpush1.bf16.msra.mxu0 0
    %1130 = vmatprep.subr.bf16.mxu0 0
    %1131 = vmatpush1.bf16.msra.mxu0 0
    %1132 = vmatprep.subr.bf16.mxu0 0
    %1133 = vmatpush1.bf16.msra.mxu0 0
    %1134 = vmatprep.subr.bf16.mxu0 0
    %1135 = vmatpush1.bf16.msra.mxu0 0
    %1136 = vmatprep.subr.bf16.mxu0 0
    %1137 = vmatpush1.bf16.msra.mxu0 0
    %1138 = vmatprep.subr.bf16.mxu0 0
    %1139 = vmatpush1.bf16.msra.mxu0 0
    %1140 = vmatprep.subr.bf16.mxu0 0
    %1141 = vmatpush1.bf16.msra.mxu0 0
    %1142 = vmatprep.mubr.bf16.mxu0 %v1071
    %1143 = vmatmul.mubr.bf16.gmra.mrb[0].mxu0 %v539
    %v1144 = vpop.f32.mrb[0].mxu0
    %v1145 = vadd.f32 %v475, %v1144
    %v1146 = vpop.f32.mrb[0].mxu0
    %v1147 = vadd.f32 %v479, %v1146
    %v1148 = vpop.f32.mrb[0].mxu0
    %v1149 = vpop.f32.mrb[0].mxu0
    %1150 = vdwg.mxu0
    %1151 = vmatprep.subr.bf16.mxu0 %v868
    %1152 = vmatpush1.bf16.msra.mxu0 %v867
    %1153 = vmatprep.subr.bf16.mxu0 %v880
    %1154 = vmatpush1.bf16.msra.mxu0 %v879
    %1155 = vmatprep.subr.bf16.mxu0 %v892
    %1156 = vmatpush1.bf16.msra.mxu0 %v891
    %1157 = vmatprep.subr.bf16.mxu0 %v904
    %1158 = vmatpush1.bf16.msra.mxu0 %v903
    %1159 = vmatprep.subr.bf16.mxu0 %v916
    %1160 = vmatpush1.bf16.msra.mxu0 %v915
    %1161 = vmatprep.subr.bf16.mxu0 %v928
    %1162 = vmatpush1.bf16.msra.mxu0 %v927
    %1163 = vmatprep.subr.bf16.mxu0 %v940
    %1164 = vmatpush1.bf16.msra.mxu0 %v939
    %1165 = vmatprep.subr.bf16.mxu0 %v952
    %1166 = vmatpush1.bf16.msra.mxu0 %v951
    %1167 = vmatprep.subr.bf16.mxu0 %v1084
    %1168 = vmatpush1.bf16.msra.mxu0 %v1081
    %1169 = vmatprep.subr.bf16.mxu0 0
    %1170 = vmatpush1.bf16.msra.mxu0 0
    %1171 = vmatprep.subr.bf16.mxu0 0
    %1172 = vmatpush1.bf16.msra.mxu0 0
    %1173 = vmatprep.subr.bf16.mxu0 0
    %1174 = vmatpush1.bf16.msra.mxu0 0
    %1175 = vmatprep.subr.bf16.mxu0 0
    %1176 = vmatpush1.bf16.msra.mxu0 0
    %1177 = vmatprep.subr.bf16.mxu0 0
    %1178 = vmatpush1.bf16.msra.mxu0 0
    %1179 = vmatprep.subr.bf16.mxu0 0
    %1180 = vmatpush1.bf16.msra.mxu0 0
    %1181 = vmatprep.subr.bf16.mxu0 0
    %1182 = vmatpush1.bf16.msra.mxu0 0
    %1183 = vmatprep.mubr.bf16.mxu0 %v1071
    %1184 = vmatmul.mubr.bf16.gmra.mrb[0].mxu0 %v539
    %v1185 = vpop.f32.mrb[0].mxu0
    %v1186 = vadd.f32 %v483, %v1185
    %v1187 = vpop.f32.mrb[0].mxu0
    %v1188 = vadd.f32 %v487, %v1187
    %v1189 = vpop.f32.mrb[0].mxu0
    %v1190 = vpop.f32.mrb[0].mxu0
    %1191 = vdwg.mxu0
    %1192 = vmatprep.subr.bf16.mxu0 %v870
    %1193 = vmatpush1.bf16.msra.mxu0 %v869
    %1194 = vmatprep.subr.bf16.mxu0 %v882
    %1195 = vmatpush1.bf16.msra.mxu0 %v881
    %1196 = vmatprep.subr.bf16.mxu0 %v894
    %1197 = vmatpush1.bf16.msra.mxu0 %v893
    %1198 = vmatprep.subr.bf16.mxu0 %v906
    %1199 = vmatpush1.bf16.msra.mxu0 %v905
    %1200 = vmatprep.subr.bf16.mxu0 %v918
    %1201 = vmatpush1.bf16.msra.mxu0 %v917
    %1202 = vmatprep.subr.bf16.mxu0 %v930
    %1203 = vmatpush1.bf16.msra.mxu0 %v929
    %1204 = vmatprep.subr.bf16.mxu0 %v942
    %1205 = vmatpush1.bf16.msra.mxu0 %v941
    %1206 = vmatprep.subr.bf16.mxu0 %v954
    %1207 = vmatpush1.bf16.msra.mxu0 %v953
    %1208 = vmatprep.subr.bf16.mxu0 %v1090
    %1209 = vmatpush1.bf16.msra.mxu0 %v1087
    %1210 = vmatprep.subr.bf16.mxu0 0
    %1211 = vmatpush1.bf16.msra.mxu0 0
    %1212 = vmatprep.subr.bf16.mxu0 0
    %1213 = vmatpush1.bf16.msra.mxu0 0
    %1214 = vmatprep.subr.bf16.mxu0 0
    %1215 = vmatpush1.bf16.msra.mxu0 0
    %1216 = vmatprep.subr.bf16.mxu0 0
    %1217 = vmatpush1.bf16.msra.mxu0 0
    %1218 = vmatprep.subr.bf16.mxu0 0
    %1219 = vmatpush1.bf16.msra.mxu0 0
    %1220 = vmatprep.subr.bf16.mxu0 0
    %1221 = vmatpush1.bf16.msra.mxu0 0
    %1222 = vmatprep.subr.bf16.mxu0 0
    %1223 = vmatpush1.bf16.msra.mxu0 0
    %1224 = vmatprep.mubr.bf16.mxu0 %v1071
    %1225 = vmatmul.mubr.bf16.gmra.mrb[0].mxu0 %v539
    %v1226 = vpop.f32.mrb[0].mxu0
    %v1227 = vadd.f32 %v491, %v1226
    %v1228 = vpop.f32.mrb[0].mxu0
    %v1229 = vadd.f32 %v495, %v1228
    %v1230 = vpop.f32.mrb[0].mxu0
    %v1231 = vpop.f32.mrb[0].mxu0
    %1232 = vdwg.mxu0
    %1233 = vmatprep.subr.bf16.mxu0 %v872
    %1234 = vmatpush1.bf16.msra.mxu0 %v871
    %1235 = vmatprep.subr.bf16.mxu0 %v884
    %1236 = vmatpush1.bf16.msra.mxu0 %v883
    %1237 = vmatprep.subr.bf16.mxu0 %v896
    %1238 = vmatpush1.bf16.msra.mxu0 %v895
    %1239 = vmatprep.subr.bf16.mxu0 %v908
    %1240 = vmatpush1.bf16.msra.mxu0 %v907
    %1241 = vmatprep.subr.bf16.mxu0 %v920
    %1242 = vmatpush1.bf16.msra.mxu0 %v919
    %1243 = vmatprep.subr.bf16.mxu0 %v932
    %1244 = vmatpush1.bf16.msra.mxu0 %v931
    %1245 = vmatprep.subr.bf16.mxu0 %v944
    %1246 = vmatpush1.bf16.msra.mxu0 %v943
    %1247 = vmatprep.subr.bf16.mxu0 %v956
    %1248 = vmatpush1.bf16.msra.mxu0 %v955
    %1249 = vmatprep.subr.bf16.mxu0 %v1096
    %1250 = vmatpush1.bf16.msra.mxu0 %v1093
    %1251 = vmatprep.subr.bf16.mxu0 0
    %1252 = vmatpush1.bf16.msra.mxu0 0
    %1253 = vmatprep.subr.bf16.mxu0 0
    %1254 = vmatpush1.bf16.msra.mxu0 0
    %1255 = vmatprep.subr.bf16.mxu0 0
    %1256 = vmatpush1.bf16.msra.mxu0 0
    %1257 = vmatprep.subr.bf16.mxu0 0
    %1258 = vmatpush1.bf16.msra.mxu0 0
    %1259 = vmatprep.subr.bf16.mxu0 0
    %1260 = vmatpush1.bf16.msra.mxu0 0
    %1261 = vmatprep.subr.bf16.mxu0 0
    %1262 = vmatpush1.bf16.msra.mxu0 0
    %1263 = vmatprep.subr.bf16.mxu0 0
    %1264 = vmatpush1.bf16.msra.mxu0 0
    %1265 = vmatprep.mubr.bf16.mxu0 %v1071
    %1266 = vmatmul.mubr.bf16.gmra.mrb[0].mxu0 %v539
    %v1267 = vpop.f32.mrb[0].mxu0
    %v1268 = vadd.f32 %v499, %v1267
    %v1269 = vpop.f32.mrb[0].mxu0
    %v1270 = vadd.f32 %v503, %v1269
    %v1271 = vpop.f32.mrb[0].mxu0
    %v1272 = vpop.f32.mrb[0].mxu0
    %1273 = vdwg.mxu0
    %1274 = vmatprep.subr.bf16.mxu0 %v874
    %1275 = vmatpush1.bf16.msra.mxu0 %v873
    %1276 = vmatprep.subr.bf16.mxu0 %v886
    %1277 = vmatpush1.bf16.msra.mxu0 %v885
    %1278 = vmatprep.subr.bf16.mxu0 %v898
    %1279 = vmatpush1.bf16.msra.mxu0 %v897
    %1280 = vmatprep.subr.bf16.mxu0 %v910
    %1281 = vmatpush1.bf16.msra.mxu0 %v909
    %1282 = vmatprep.subr.bf16.mxu0 %v922
    %1283 = vmatpush1.bf16.msra.mxu0 %v921
    %1284 = vmatprep.subr.bf16.mxu0 %v934
    %1285 = vmatpush1.bf16.msra.mxu0 %v933
    %1286 = vmatprep.subr.bf16.mxu0 %v946
    %1287 = vmatpush1.bf16.msra.mxu0 %v945
    %1288 = vmatprep.subr.bf16.mxu0 %v958
    %1289 = vmatpush1.bf16.msra.mxu0 %v957
    %1290 = vmatprep.subr.bf16.mxu0 %v1102
    %1291 = vmatpush1.bf16.msra.mxu0 %v1099
    %1292 = vmatprep.subr.bf16.mxu0 0
    %1293 = vmatpush1.bf16.msra.mxu0 0
    %1294 = vmatprep.subr.bf16.mxu0 0
    %1295 = vmatpush1.bf16.msra.mxu0 0
    %1296 = vmatprep.subr.bf16.mxu0 0
    %1297 = vmatpush1.bf16.msra.mxu0 0
    %1298 = vmatprep.subr.bf16.mxu0 0
    %1299 = vmatpush1.bf16.msra.mxu0 0
    %1300 = vmatprep.subr.bf16.mxu0 0
    %1301 = vmatpush1.bf16.msra.mxu0 0
    %1302 = vmatprep.subr.bf16.mxu0 0
    %1303 = vmatpush1.bf16.msra.mxu0 0
    %1304 = vmatprep.subr.bf16.mxu0 0
    %1305 = vmatpush1.bf16.msra.mxu0 0
    %1306 = vmatprep.mubr.bf16.mxu0 %v1071
    %1307 = vmatmul.mubr.bf16.gmra.mrb[0].mxu0 %v539
    %v1308 = vpop.f32.mrb[0].mxu0
    %v1309 = vadd.f32 %v507, %v1308
    %v1310 = vpop.f32.mrb[0].mxu0
    %v1311 = vadd.f32 %v511, %v1310
    %v1312 = vpop.f32.mrb[0].mxu0
    %v1313 = vpop.f32.mrb[0].mxu0
    %1314 = vdwg.mxu0
    %1315 = vmatprep.subr.bf16.mxu0 %v876
    %1316 = vmatpush1.bf16.msra.mxu0 %v875
    %1317 = vmatprep.subr.bf16.mxu0 %v888
    %1318 = vmatpush1.bf16.msra.mxu0 %v887
    %1319 = vmatprep.subr.bf16.mxu0 %v900
    %1320 = vmatpush1.bf16.msra.mxu0 %v899
    %1321 = vmatprep.subr.bf16.mxu0 %v912
    %1322 = vmatpush1.bf16.msra.mxu0 %v911
    %1323 = vmatprep.subr.bf16.mxu0 %v924
    %1324 = vmatpush1.bf16.msra.mxu0 %v923
    %1325 = vmatprep.subr.bf16.mxu0 %v936
    %1326 = vmatpush1.bf16.msra.mxu0 %v935
    %1327 = vmatprep.subr.bf16.mxu0 %v948
    %1328 = vmatpush1.bf16.msra.mxu0 %v947
    %1329 = vmatprep.subr.bf16.mxu0 %v960
    %1330 = vmatpush1.bf16.msra.mxu0 %v959
    %1331 = vmatprep.subr.bf16.mxu0 %v1108
    %1332 = vmatpush1.bf16.msra.mxu0 %v1105
    %1333 = vmatprep.subr.bf16.mxu0 0
    %1334 = vmatpush1.bf16.msra.mxu0 0
    %1335 = vmatprep.subr.bf16.mxu0 0
    %1336 = vmatpush1.bf16.msra.mxu0 0
    %1337 = vmatprep.subr.bf16.mxu0 0
    %1338 = vmatpush1.bf16.msra.mxu0 0
    %1339 = vmatprep.subr.bf16.mxu0 0
    %1340 = vmatpush1.bf16.msra.mxu0 0
    %1341 = vmatprep.subr.bf16.mxu0 0
    %1342 = vmatpush1.bf16.msra.mxu0 0
    %1343 = vmatprep.subr.bf16.mxu0 0
    %1344 = vmatpush1.bf16.msra.mxu0 0
    %1345 = vmatprep.subr.bf16.mxu0 0
    %1346 = vmatpush1.bf16.msra.mxu0 0
    %1347 = vmatprep.mubr.bf16.mxu0 %v1071
    %1348 = vmatmul.mubr.bf16.gmra.mrb[0].mxu0 %v539
    %v1349 = vpop.f32.mrb[0].mxu0
    %v1350 = vadd.f32 %v515, %v1349
    %v1351 = vpop.f32.mrb[0].mxu0
    %v1352 = vadd.f32 %v519, %v1351
    %v1353 = vpop.f32.mrb[0].mxu0
    %v1354 = vpop.f32.mrb[0].mxu0
    %1355 = vdwg.mxu0
    %v1356 = vmax.f32 %v1145, 0.0
    %v1357 = vmax.f32 %v1147, 0.0
    %v1358 = vmax.f32 %v1186, 0.0
    %v1359 = vmax.f32 %v1188, 0.0
    %v1360 = vmax.f32 %v1227, 0.0
    %v1361 = vmax.f32 %v1229, 0.0
    %v1362 = vmax.f32 %v1268, 0.0
    %v1363 = vmax.f32 %v1270, 0.0
    %v1364 = vmax.f32 %v1309, 0.0
    %v1365 = vmax.f32 %v1311, 0.0
    %v1366 = vmax.f32 %v1350, 0.0
    %v1367 = vmax.f32 %v1352, 0.0
    %v1368 = vpack.c.bf16 %v1356, %v1356
    %v1369 = vpack.c.bf16 %v1357, %v1357
    %v1370 = vpack.c.bf16 %v1358, %v1358
    %v1371 = vpack.c.bf16 %v1359, %v1359
    %v1372 = vpack.c.bf16 %v1360, %v1360
    %v1373 = vpack.c.bf16 %v1361, %v1361
    %v1374 = vpack.c.bf16 %v1362, %v1362
    %v1375 = vpack.c.bf16 %v1363, %v1363
    %v1376 = vpack.c.bf16 %v1364, %v1364
    %v1377 = vpack.c.bf16 %v1365, %v1365
    %v1378 = vpack.c.bf16 %v1366, %v1366
    %v1379 = vpack.c.bf16 %v1367, %v1367
    %v1380 = vld [vmem:[#allocation9] sm:$0xff]
    %v1381 = vld [vmem:[#allocation9 + $0x8] sm:$0xf]
    %v1382 = vld [vmem:[#allocation9 + $0xc] sm:$0xff]
    %v1383 = vld [vmem:[#allocation9 + $0x14] sm:$0xf]
    %v1384 = vld [vmem:[#allocation9 + $0x18] sm:$0xff]
    %v1385 = vld [vmem:[#allocation9 + $0x20] sm:$0xf]
    %v1386 = vld [vmem:[#allocation9 + $0x24] sm:$0xff]
    %v1387 = vld [vmem:[#allocation9 + $0x2c] sm:$0xf]
    %v1388 = vld [vmem:[#allocation9 + $0x30] sm:$0xff]
    %v1389 = vld [vmem:[#allocation9 + $0x38] sm:$0xf]
    %v1390 = vld [vmem:[#allocation9 + $0x3c] sm:$0xff]
    %v1391 = vld [vmem:[#allocation9 + $0x44] sm:$0xf]
    %v1392 = vld [vmem:[#allocation9 + $0x48] sm:$0xff]
    %v1393 = vld [vmem:[#allocation9 + $0x50] sm:$0xf]
    %v1394 = vld [vmem:[#allocation9 + $0x54] sm:$0xff]
    %v1395 = vld [vmem:[#allocation9 + $0x5c] sm:$0xf]
    %v1396 = vld [vmem:[#allocation9 + $0x60] sm:$0xff]
    %v1397 = vld [vmem:[#allocation9 + $0x68] sm:$0xf]
    %v1398 = vld [vmem:[#allocation9 + $0x6c] sm:$0xff]
    %v1399 = vld [vmem:[#allocation9 + $0x74] sm:$0xf]
    %v1400 = vld [vmem:[#allocation9 + $0x78] sm:$0xff]
    %v1401 = vld [vmem:[#allocation9 + $0x80] sm:$0xf]
    %v1402 = vld [vmem:[#allocation9 + $0x84] sm:$0xff]
    %v1403 = vld [vmem:[#allocation9 + $0x8c] sm:$0xf]
    %v1404 = vld [vmem:[#allocation9 + $0x90] sm:$0xff]
    %v1405 = vld [vmem:[#allocation9 + $0x98] sm:$0xf]
    %v1406 = vld [vmem:[#allocation9 + $0x9c] sm:$0xff]
    %v1407 = vld [vmem:[#allocation9 + $0xa4] sm:$0xf]
    %v1408 = vld [vmem:[#allocation9 + $0xa8] sm:$0xff]
    %v1409 = vld [vmem:[#allocation9 + $0xb0] sm:$0xf]
    %v1410 = vld [vmem:[#allocation9 + $0xb4] sm:$0xff]
    %v1411 = vld [vmem:[#allocation9 + $0xbc] sm:$0xf]
    %v1412 = vld [vmem:[#allocation9 + $0xc0] sm:$0xff]
    %v1413 = vld [vmem:[#allocation9 + $0xc8] sm:$0xf]
    %v1414 = vld [vmem:[#allocation9 + $0xcc] sm:$0xff]
    %v1415 = vld [vmem:[#allocation9 + $0xd4] sm:$0xf]
    %v1416 = vld [vmem:[#allocation9 + $0xd8] sm:$0xff]
    %v1417 = vld [vmem:[#allocation9 + $0xe0] sm:$0xf]
    %v1418 = vld [vmem:[#allocation9 + $0xe4] sm:$0xff]
    %v1419 = vld [vmem:[#allocation9 + $0xec] sm:$0xf]
    %v1420 = vld [vmem:[#allocation9 + $0xf0] sm:$0xff]
    %v1421 = vld [vmem:[#allocation9 + $0xf8] sm:$0xf]
    %v1422 = vld [vmem:[#allocation9 + $0xfc] sm:$0xff]
    %v1423 = vld [vmem:[#allocation9 + $0x104] sm:$0xf]
    %v1424 = vld [vmem:[#allocation9 + $0x108] sm:$0xff]
    %v1425 = vld [vmem:[#allocation9 + $0x110] sm:$0xf]
    %v1426 = vld [vmem:[#allocation9 + $0x114] sm:$0xff]
    %v1427 = vld [vmem:[#allocation9 + $0x11c] sm:$0xf]
    %v1428 = vld [vmem:[#allocation9 + $0x120] sm:$0xff]
    %v1429 = vld [vmem:[#allocation9 + $0x128] sm:$0xf]
    %v1430 = vld [vmem:[#allocation9 + $0x12c] sm:$0xff]
    %v1431 = vld [vmem:[#allocation9 + $0x134] sm:$0xf]
    %v1432 = vld [vmem:[#allocation9 + $0x138] sm:$0xff]
    %v1433 = vld [vmem:[#allocation9 + $0x140] sm:$0xf]
    %v1434 = vld [vmem:[#allocation9 + $0x144] sm:$0xff]
    %v1435 = vld [vmem:[#allocation9 + $0x14c] sm:$0xf]
    %v1436 = vld [vmem:[#allocation9 + $0x150] sm:$0xff]
    %v1437 = vld [vmem:[#allocation9 + $0x158] sm:$0xf]
    %v1438 = vld [vmem:[#allocation9 + $0x15c] sm:$0xff]
    %v1439 = vld [vmem:[#allocation9 + $0x164] sm:$0xf]
    %v1440 = vld [vmem:[#allocation9 + $0x168] sm:$0xff]
    %v1441 = vld [vmem:[#allocation9 + $0x170] sm:$0xf]
    %v1442 = vld [vmem:[#allocation9 + $0x174] sm:$0xff]
    %v1443 = vld [vmem:[#allocation9 + $0x17c] sm:$0xf]
    %v1444 = vld [vmem:[#allocation9 + $0x180] sm:$0xff]
    %v1445 = vld [vmem:[#allocation9 + $0x188] sm:$0xf]
    %v1446 = vld [vmem:[#allocation9 + $0x18c] sm:$0xff]
    %v1447 = vld [vmem:[#allocation9 + $0x194] sm:$0xf]
    %v1448 = vld [vmem:[#allocation9 + $0x198] sm:$0xff]
    %v1449 = vld [vmem:[#allocation9 + $0x1a0] sm:$0xf]
    %v1450 = vld [vmem:[#allocation9 + $0x1a4] sm:$0xff]
    %v1451 = vld [vmem:[#allocation9 + $0x1ac] sm:$0xf]
    %v1452 = vld [vmem:[#allocation9 + $0x1b0] sm:$0xff]
    %v1453 = vld [vmem:[#allocation9 + $0x1b8] sm:$0xf]
    %v1454 = vld [vmem:[#allocation9 + $0x1bc] sm:$0xff]
    %v1455 = vld [vmem:[#allocation9 + $0x1c4] sm:$0xf]
    %v1456 = vld [vmem:[#allocation9 + $0x1c8] sm:$0xff]
    %v1457 = vld [vmem:[#allocation9 + $0x1d0] sm:$0xf]
    %v1458 = vld [vmem:[#allocation9 + $0x1d4] sm:$0xff]
    %v1459 = vld [vmem:[#allocation9 + $0x1dc] sm:$0xf]
    %v1460 = vld [vmem:[#allocation9 + $0x1e0] sm:$0xff]
    %v1461 = vld [vmem:[#allocation9 + $0x1e8] sm:$0xf]
    %v1462 = vld [vmem:[#allocation9 + $0x1ec] sm:$0xff]
    %v1463 = vld [vmem:[#allocation9 + $0x1f4] sm:$0xf]
    %v1464 = vld [vmem:[#allocation9 + $0x1f8] sm:$0xff]
    %v1465 = vld [vmem:[#allocation9 + $0x200] sm:$0xf]
    %v1466 = vld [vmem:[#allocation9 + $0x204] sm:$0xff]
    %v1467 = vld [vmem:[#allocation9 + $0x20c] sm:$0xf]
    %v1468 = vld [vmem:[#allocation9 + $0x210] sm:$0xff]
    %v1469 = vld [vmem:[#allocation9 + $0x218] sm:$0xf]
    %v1470 = vld [vmem:[#allocation9 + $0x21c] sm:$0xff]
    %v1471 = vld [vmem:[#allocation9 + $0x224] sm:$0xf]
    %v1472 = vld [vmem:[#allocation9 + $0x228] sm:$0xff]
    %v1473 = vld [vmem:[#allocation9 + $0x230] sm:$0xf]
    %v1474 = vld [vmem:[#allocation9 + $0x234] sm:$0xff]
    %v1475 = vld [vmem:[#allocation9 + $0x23c] sm:$0xf]
    %v1476 = vld [vmem:[#allocation9 + $0x240] sm:$0xff]
    %v1477 = vld [vmem:[#allocation9 + $0x248] sm:$0xf]
    %v1478 = vld [vmem:[#allocation9 + $0x24c] sm:$0xff]
    %v1479 = vld [vmem:[#allocation9 + $0x254] sm:$0xf]
    %v1480 = vld [vmem:[#allocation9 + $0x258] sm:$0xff]
    %v1481 = vld [vmem:[#allocation9 + $0x260] sm:$0xf]
    %v1482 = vld [vmem:[#allocation9 + $0x264] sm:$0xff]
    %v1483 = vld [vmem:[#allocation9 + $0x26c] sm:$0xf]
    %v1484 = vld [vmem:[#allocation9 + $0x270] sm:$0xff]
    %v1485 = vld [vmem:[#allocation9 + $0x278] sm:$0xf]
    %v1486 = vld [vmem:[#allocation9 + $0x27c] sm:$0xff]
    %v1487 = vld [vmem:[#allocation9 + $0x284] sm:$0xf]
    %v1488 = vld [vmem:[#allocation9 + $0x288] sm:$0xff]
    %v1489 = vld [vmem:[#allocation9 + $0x290] sm:$0xf]
    %v1490 = vld [vmem:[#allocation9 + $0x294] sm:$0xff]
    %v1491 = vld [vmem:[#allocation9 + $0x29c] sm:$0xf]
    %v1492 = vld [vmem:[#allocation9 + $0x2a0] sm:$0xff]
    %v1493 = vld [vmem:[#allocation9 + $0x2a8] sm:$0xf]
    %v1494 = vld [vmem:[#allocation9 + $0x2ac] sm:$0xff]
    %v1495 = vld [vmem:[#allocation9 + $0x2b4] sm:$0xf]
    %v1496 = vld [vmem:[#allocation9 + $0x2b8] sm:$0xff]
    %v1497 = vld [vmem:[#allocation9 + $0x2c0] sm:$0xf]
    %v1498 = vld [vmem:[#allocation9 + $0x2c4] sm:$0xff]
    %v1499 = vld [vmem:[#allocation9 + $0x2cc] sm:$0xf]
    %v1500 = vld [vmem:[#allocation9 + $0x2d0] sm:$0xff]
    %v1501 = vld [vmem:[#allocation9 + $0x2d8] sm:$0xf]
    %v1502 = vld [vmem:[#allocation9 + $0x2dc] sm:$0xff]
    %v1503 = vld [vmem:[#allocation9 + $0x2e4] sm:$0xf]
    %v1504 = vld [vmem:[#allocation9 + $0x2e8] sm:$0xff]
    %v1505 = vld [vmem:[#allocation9 + $0x2f0] sm:$0xf]
    %v1506 = vld [vmem:[#allocation9 + $0x2f4] sm:$0xff]
    %v1507 = vld [vmem:[#allocation9 + $0x2fc] sm:$0xf]
    %v1508 = vld [vmem:[#allocation9 + $0x300] sm:$0xff]
    %v1509 = vld [vmem:[#allocation9 + $0x308] sm:$0xf]
    %v1510 = vld [vmem:[#allocation9 + $0x30c] sm:$0xff]
    %v1511 = vld [vmem:[#allocation9 + $0x314] sm:$0xf]
    %v1512 = vld [vmem:[#allocation9 + $0x318] sm:$0xff]
    %v1513 = vld [vmem:[#allocation9 + $0x320] sm:$0xf]
    %v1514 = vld [vmem:[#allocation9 + $0x324] sm:$0xff]
    %v1515 = vld [vmem:[#allocation9 + $0x32c] sm:$0xf]
    %v1516 = vld [vmem:[#allocation9 + $0x330] sm:$0xff]
    %v1517 = vld [vmem:[#allocation9 + $0x338] sm:$0xf]
    %v1518 = vld [vmem:[#allocation9 + $0x33c] sm:$0xff]
    %v1519 = vld [vmem:[#allocation9 + $0x344] sm:$0xf]
    %v1520 = vld [vmem:[#allocation9 + $0x348] sm:$0xff]
    %v1521 = vld [vmem:[#allocation9 + $0x350] sm:$0xf]
    %v1522 = vld [vmem:[#allocation9 + $0x354] sm:$0xff]
    %v1523 = vld [vmem:[#allocation9 + $0x35c] sm:$0xf]
    %v1524 = vld [vmem:[#allocation9 + $0x360] sm:$0xff]
    %v1525 = vld [vmem:[#allocation9 + $0x368] sm:$0xf]
    %v1526 = vld [vmem:[#allocation9 + $0x36c] sm:$0xff]
    %v1527 = vld [vmem:[#allocation9 + $0x374] sm:$0xf]
    %v1528 = vld [vmem:[#allocation9 + $0x378] sm:$0xff]
    %v1529 = vld [vmem:[#allocation9 + $0x380] sm:$0xf]
    %v1530 = vld [vmem:[#allocation9 + $0x384] sm:$0xff]
    %v1531 = vld [vmem:[#allocation9 + $0x38c] sm:$0xf]
    %v1532 = vld [vmem:[#allocation9 + $0x390] sm:$0xff]
    %v1533 = vld [vmem:[#allocation9 + $0x398] sm:$0xf]
    %v1534 = vld [vmem:[#allocation9 + $0x39c] sm:$0xff]
    %v1535 = vld [vmem:[#allocation9 + $0x3a4] sm:$0xf]
    %v1536 = vld [vmem:[#allocation9 + $0x3a8] sm:$0xff]
    %v1537 = vld [vmem:[#allocation9 + $0x3b0] sm:$0xf]
    %v1538 = vld [vmem:[#allocation9 + $0x3b4] sm:$0xff]
    %v1539 = vld [vmem:[#allocation9 + $0x3bc] sm:$0xf]
    %v1540 = vld [vmem:[#allocation9 + $0x3c0] sm:$0xff]
    %v1541 = vld [vmem:[#allocation9 + $0x3c8] sm:$0xf]
    %v1542 = vld [vmem:[#allocation9 + $0x3cc] sm:$0xff]
    %v1543 = vld [vmem:[#allocation9 + $0x3d4] sm:$0xf]
    %v1544 = vld [vmem:[#allocation9 + $0x3d8] sm:$0xff]
    %v1545 = vld [vmem:[#allocation9 + $0x3e0] sm:$0xf]
    %v1546 = vld [vmem:[#allocation9 + $0x3e4] sm:$0xff]
    %v1547 = vld [vmem:[#allocation9 + $0x3ec] sm:$0xf]
    %v1548 = vld [vmem:[#allocation9 + $0x3f0] sm:$0xff]
    %v1549 = vld [vmem:[#allocation9 + $0x3f8] sm:$0xf]
    %v1550 = vld [vmem:[#allocation9 + $0x3fc] sm:$0xff]
    %v1551 = vld [vmem:[#allocation9 + $0x404] sm:$0xf]
    %v1552 = vld [vmem:[#allocation9 + $0x408] sm:$0xff]
    %v1553 = vld [vmem:[#allocation9 + $0x410] sm:$0xf]
    %v1554 = vld [vmem:[#allocation9 + $0x414] sm:$0xff]
    %v1555 = vld [vmem:[#allocation9 + $0x41c] sm:$0xf]
    %v1556 = vld [vmem:[#allocation9 + $0x420] sm:$0xff]
    %v1557 = vld [vmem:[#allocation9 + $0x428] sm:$0xf]
    %v1558 = vld [vmem:[#allocation9 + $0x42c] sm:$0xff]
    %v1559 = vld [vmem:[#allocation9 + $0x434] sm:$0xf]
    %v1560 = vld [vmem:[#allocation9 + $0x438] sm:$0xff]
    %v1561 = vld [vmem:[#allocation9 + $0x440] sm:$0xf]
    %v1562 = vld [vmem:[#allocation9 + $0x444] sm:$0xff]
    %v1563 = vld [vmem:[#allocation9 + $0x44c] sm:$0xf]
    %v1564 = vld [vmem:[#allocation9 + $0x450] sm:$0xff]
    %v1565 = vld [vmem:[#allocation9 + $0x458] sm:$0xf]
    %v1566 = vld [vmem:[#allocation9 + $0x45c] sm:$0xff]
    %v1567 = vld [vmem:[#allocation9 + $0x464] sm:$0xf]
    %v1568 = vld [vmem:[#allocation9 + $0x468] sm:$0xff]
    %v1569 = vld [vmem:[#allocation9 + $0x470] sm:$0xf]
    %v1570 = vld [vmem:[#allocation9 + $0x474] sm:$0xff]
    %v1571 = vld [vmem:[#allocation9 + $0x47c] sm:$0xf]
    %v1572 = vld [vmem:[#allocation9 + $0x480] sm:$0xff]
    %v1573 = vld [vmem:[#allocation9 + $0x488] sm:$0xf]
    %v1574 = vld [vmem:[#allocation9 + $0x48c] sm:$0xff]
    %v1575 = vld [vmem:[#allocation9 + $0x494] sm:$0xf]
    %v1576 = vld [vmem:[#allocation9 + $0x498] sm:$0xff]
    %v1577 = vld [vmem:[#allocation9 + $0x4a0] sm:$0xf]
    %v1578 = vld [vmem:[#allocation9 + $0x4a4] sm:$0xff]
    %v1579 = vld [vmem:[#allocation9 + $0x4ac] sm:$0xf]
    %v1580 = vld [vmem:[#allocation9 + $0x4b0] sm:$0xff]
    %v1581 = vld [vmem:[#allocation9 + $0x4b8] sm:$0xf]
    %v1582 = vld [vmem:[#allocation9 + $0x4bc] sm:$0xff]
    %v1583 = vld [vmem:[#allocation9 + $0x4c4] sm:$0xf]
    %v1584 = vld [vmem:[#allocation9 + $0x4c8] sm:$0xff]
    %v1585 = vld [vmem:[#allocation9 + $0x4d0] sm:$0xf]
    %v1586 = vld [vmem:[#allocation9 + $0x4d4] sm:$0xff]
    %v1587 = vld [vmem:[#allocation9 + $0x4dc] sm:$0xf]
    %v1588 = vld [vmem:[#allocation9 + $0x4e0] sm:$0xff]
    %v1589 = vld [vmem:[#allocation9 + $0x4e8] sm:$0xf]
    %v1590 = vld [vmem:[#allocation9 + $0x4ec] sm:$0xff]
    %v1591 = vld [vmem:[#allocation9 + $0x4f4] sm:$0xf]
    %v1592 = vld [vmem:[#allocation9 + $0x4f8] sm:$0xff]
    %v1593 = vld [vmem:[#allocation9 + $0x500] sm:$0xf]
    %v1594 = vld [vmem:[#allocation9 + $0x504] sm:$0xff]
    %v1595 = vld [vmem:[#allocation9 + $0x50c] sm:$0xf]
    %v1596 = vld [vmem:[#allocation9 + $0x510] sm:$0xff]
    %v1597 = vld [vmem:[#allocation9 + $0x518] sm:$0xf]
    %v1598 = vld [vmem:[#allocation9 + $0x51c] sm:$0xff]
    %v1599 = vld [vmem:[#allocation9 + $0x524] sm:$0xf]
    %v1600 = vld [vmem:[#allocation9 + $0x528] sm:$0xff]
    %v1601 = vld [vmem:[#allocation9 + $0x530] sm:$0xf]
    %v1602 = vld [vmem:[#allocation9 + $0x534] sm:$0xff]
    %v1603 = vld [vmem:[#allocation9 + $0x53c] sm:$0xf]
    %v1604 = vld [vmem:[#allocation9 + $0x540] sm:$0xff]
    %v1605 = vld [vmem:[#allocation9 + $0x548] sm:$0xf]
    %v1606 = vld [vmem:[#allocation9 + $0x54c] sm:$0xff]
    %v1607 = vld [vmem:[#allocation9 + $0x554] sm:$0xf]
    %v1608 = vld [vmem:[#allocation9 + $0x558] sm:$0xff]
    %v1609 = vld [vmem:[#allocation9 + $0x560] sm:$0xf]
    %v1610 = vld [vmem:[#allocation9 + $0x564] sm:$0xff]
    %v1611 = vld [vmem:[#allocation9 + $0x56c] sm:$0xf]
    %v1612 = vld [vmem:[#allocation9 + $0x570] sm:$0xff]
    %v1613 = vld [vmem:[#allocation9 + $0x578] sm:$0xf]
    %v1614 = vld [vmem:[#allocation9 + $0x57c] sm:$0xff]
    %v1615 = vld [vmem:[#allocation9 + $0x584] sm:$0xf]
    %v1616 = vld [vmem:[#allocation9 + $0x588] sm:$0xff]
    %v1617 = vld [vmem:[#allocation9 + $0x590] sm:$0xf]
    %v1618 = vld [vmem:[#allocation9 + $0x594] sm:$0xff]
    %v1619 = vld [vmem:[#allocation9 + $0x59c] sm:$0xf]
    %v1620 = vld [vmem:[#allocation9 + $0x5a0] sm:$0xff]
    %v1621 = vld [vmem:[#allocation9 + $0x5a8] sm:$0xf]
    %v1622 = vld [vmem:[#allocation9 + $0x5ac] sm:$0xff]
    %v1623 = vld [vmem:[#allocation9 + $0x5b4] sm:$0xf]
    %v1624 = vld [vmem:[#allocation9 + $0x5b8] sm:$0xff]
    %v1625 = vld [vmem:[#allocation9 + $0x5c0] sm:$0xf]
    %v1626 = vld [vmem:[#allocation9 + $0x5c4] sm:$0xff]
    %v1627 = vld [vmem:[#allocation9 + $0x5cc] sm:$0xf]
    %v1628 = vld [vmem:[#allocation9 + $0x5d0] sm:$0xff]
    %v1629 = vld [vmem:[#allocation9 + $0x5d8] sm:$0xf]
    %v1630 = vld [vmem:[#allocation9 + $0x5dc] sm:$0xff]
    %v1631 = vld [vmem:[#allocation9 + $0x5e4] sm:$0xf]
    %v1632 = vld [vmem:[#allocation9 + $0x5e8] sm:$0xff]
    %v1633 = vld [vmem:[#allocation9 + $0x5f0] sm:$0xf]
    %v1634 = vld [vmem:[#allocation9 + $0x5f4] sm:$0xff]
    %v1635 = vld [vmem:[#allocation9 + $0x5fc] sm:$0xf]
    %v1636 = vld [vmem:[#allocation9 + $0x600] sm:$0xff]
    %v1637 = vld [vmem:[#allocation9 + $0x608] sm:$0xf]
    %v1638 = vld [vmem:[#allocation9 + $0x60c] sm:$0xff]
    %v1639 = vld [vmem:[#allocation9 + $0x614] sm:$0xf]
    %v1640 = vld [vmem:[#allocation9 + $0x618] sm:$0xff]
    %v1641 = vld [vmem:[#allocation9 + $0x620] sm:$0xf]
    %v1642 = vld [vmem:[#allocation9 + $0x624] sm:$0xff]
    %v1643 = vld [vmem:[#allocation9 + $0x62c] sm:$0xf]
    %v1644 = vld [vmem:[#allocation9 + $0x630] sm:$0xff]
    %v1645 = vld [vmem:[#allocation9 + $0x638] sm:$0xf]
    %v1646 = vld [vmem:[#allocation9 + $0x63c] sm:$0xff]
    %v1647 = vld [vmem:[#allocation9 + $0x644] sm:$0xf]
    %v1648 = vld [vmem:[#allocation9 + $0x648] sm:$0xff]
    %v1649 = vld [vmem:[#allocation9 + $0x650] sm:$0xf]
    %v1650 = vld [vmem:[#allocation9 + $0x654] sm:$0xff]
    %v1651 = vld [vmem:[#allocation9 + $0x65c] sm:$0xf]
    %v1652 = vld [vmem:[#allocation9 + $0x660] sm:$0xff]
    %v1653 = vld [vmem:[#allocation9 + $0x668] sm:$0xf]
    %v1654 = vld [vmem:[#allocation9 + $0x66c] sm:$0xff]
    %v1655 = vld [vmem:[#allocation9 + $0x674] sm:$0xf]
    %v1656 = vld [vmem:[#allocation9 + $0x678] sm:$0xff]
    %v1657 = vld [vmem:[#allocation9 + $0x680] sm:$0xf]
    %v1658 = vld [vmem:[#allocation9 + $0x684] sm:$0xff]
    %v1659 = vld [vmem:[#allocation9 + $0x68c] sm:$0xf]
    %v1660 = vld [vmem:[#allocation9 + $0x690] sm:$0xff]
    %v1661 = vld [vmem:[#allocation9 + $0x698] sm:$0xf]
    %v1662 = vld [vmem:[#allocation9 + $0x69c] sm:$0xff]
    %v1663 = vld [vmem:[#allocation9 + $0x6a4] sm:$0xf]
    %v1664 = vld [vmem:[#allocation9 + $0x6a8] sm:$0xff]
    %v1665 = vld [vmem:[#allocation9 + $0x6b0] sm:$0xf]
    %v1666 = vld [vmem:[#allocation9 + $0x6b4] sm:$0xff]
    %v1667 = vld [vmem:[#allocation9 + $0x6bc] sm:$0xf]
    %v1668 = vld [vmem:[#allocation9 + $0x6c0] sm:$0xff]
    %v1669 = vld [vmem:[#allocation9 + $0x6c8] sm:$0xf]
    %v1670 = vld [vmem:[#allocation9 + $0x6cc] sm:$0xff]
    %v1671 = vld [vmem:[#allocation9 + $0x6d4] sm:$0xf]
    %v1672 = vld [vmem:[#allocation9 + $0x6d8] sm:$0xff]
    %v1673 = vld [vmem:[#allocation9 + $0x6e0] sm:$0xf]
    %v1674 = vld [vmem:[#allocation9 + $0x6e4] sm:$0xff]
    %v1675 = vld [vmem:[#allocation9 + $0x6ec] sm:$0xf]
    %v1676 = vld [vmem:[#allocation9 + $0x6f0] sm:$0xff]
    %v1677 = vld [vmem:[#allocation9 + $0x6f8] sm:$0xf]
    %v1678 = vld [vmem:[#allocation9 + $0x6fc] sm:$0xff]
    %v1679 = vld [vmem:[#allocation9 + $0x704] sm:$0xf]
    %v1680 = vld [vmem:[#allocation9 + $0x708] sm:$0xff]
    %v1681 = vld [vmem:[#allocation9 + $0x710] sm:$0xf]
    %v1682 = vld [vmem:[#allocation9 + $0x714] sm:$0xff]
    %v1683 = vld [vmem:[#allocation9 + $0x71c] sm:$0xf]
    %v1684 = vld [vmem:[#allocation9 + $0x720] sm:$0xff]
    %v1685 = vld [vmem:[#allocation9 + $0x728] sm:$0xf]
    %v1686 = vld [vmem:[#allocation9 + $0x72c] sm:$0xff]
    %v1687 = vld [vmem:[#allocation9 + $0x734] sm:$0xf]
    %v1688 = vld [vmem:[#allocation9 + $0x738] sm:$0xff]
    %v1689 = vld [vmem:[#allocation9 + $0x740] sm:$0xf]
    %v1690 = vld [vmem:[#allocation9 + $0x744] sm:$0xff]
    %v1691 = vld [vmem:[#allocation9 + $0x74c] sm:$0xf]
    %v1692 = vld [vmem:[#allocation9 + $0x750] sm:$0xff]
    %v1693 = vld [vmem:[#allocation9 + $0x758] sm:$0xf]
    %v1694 = vld [vmem:[#allocation9 + $0x75c] sm:$0xff]
    %v1695 = vld [vmem:[#allocation9 + $0x764] sm:$0xf]
    %v1696 = vld [vmem:[#allocation9 + $0x768] sm:$0xff]
    %v1697 = vld [vmem:[#allocation9 + $0x770] sm:$0xf]
    %v1698 = vld [vmem:[#allocation9 + $0x774] sm:$0xff]
    %v1699 = vld [vmem:[#allocation9 + $0x77c] sm:$0xf]
    %v1700 = vld [vmem:[#allocation9 + $0x780] sm:$0xff]
    %v1701 = vld [vmem:[#allocation9 + $0x788] sm:$0xf]
    %v1702 = vld [vmem:[#allocation9 + $0x78c] sm:$0xff]
    %v1703 = vld [vmem:[#allocation9 + $0x794] sm:$0xf]
    %v1704 = vld [vmem:[#allocation9 + $0x798] sm:$0xff]
    %v1705 = vld [vmem:[#allocation9 + $0x7a0] sm:$0xf]
    %v1706 = vld [vmem:[#allocation9 + $0x7a4] sm:$0xff]
    %v1707 = vld [vmem:[#allocation9 + $0x7ac] sm:$0xf]
    %v1708 = vld [vmem:[#allocation9 + $0x7b0] sm:$0xff]
    %v1709 = vld [vmem:[#allocation9 + $0x7b8] sm:$0xf]
    %v1710 = vld [vmem:[#allocation9 + $0x7bc] sm:$0xff]
    %v1711 = vld [vmem:[#allocation9 + $0x7c4] sm:$0xf]
    %v1712 = vld [vmem:[#allocation9 + $0x7c8] sm:$0xff]
    %v1713 = vld [vmem:[#allocation9 + $0x7d0] sm:$0xf]
    %v1714 = vld [vmem:[#allocation9 + $0x7d4] sm:$0xff]
    %v1715 = vld [vmem:[#allocation9 + $0x7dc] sm:$0xf]
    %v1716 = vld [vmem:[#allocation9 + $0x7e0] sm:$0xff]
    %v1717 = vld [vmem:[#allocation9 + $0x7e8] sm:$0xf]
    %v1718 = vld [vmem:[#allocation9 + $0x7ec] sm:$0xff]
    %v1719 = vld [vmem:[#allocation9 + $0x7f4] sm:$0xf]
    %v1720 = vld [vmem:[#allocation9 + $0x7f8] sm:$0xff]
    %v1721 = vld [vmem:[#allocation9 + $0x800] sm:$0xf]
    %v1722 = vld [vmem:[#allocation9 + $0x804] sm:$0xff]
    %v1723 = vld [vmem:[#allocation9 + $0x80c] sm:$0xf]
    %v1724 = vld [vmem:[#allocation9 + $0x810] sm:$0xff]
    %v1725 = vld [vmem:[#allocation9 + $0x818] sm:$0xf]
    %v1726 = vld [vmem:[#allocation9 + $0x81c] sm:$0xff]
    %v1727 = vld [vmem:[#allocation9 + $0x824] sm:$0xf]
    %v1728 = vld [vmem:[#allocation9 + $0x828] sm:$0xff]
    %v1729 = vld [vmem:[#allocation9 + $0x830] sm:$0xf]
    %v1730 = vld [vmem:[#allocation9 + $0x834] sm:$0xff]
    %v1731 = vld [vmem:[#allocation9 + $0x83c] sm:$0xf]
    %v1732 = vld [vmem:[#allocation9 + $0x840] sm:$0xff]
    %v1733 = vld [vmem:[#allocation9 + $0x848] sm:$0xf]
    %v1734 = vld [vmem:[#allocation9 + $0x84c] sm:$0xff]
    %v1735 = vld [vmem:[#allocation9 + $0x854] sm:$0xf]
    %v1736 = vld [vmem:[#allocation9 + $0x858] sm:$0xff]
    %v1737 = vld [vmem:[#allocation9 + $0x860] sm:$0xf]
    %v1738 = vld [vmem:[#allocation9 + $0x864] sm:$0xff]
    %v1739 = vld [vmem:[#allocation9 + $0x86c] sm:$0xf]
    %v1740 = vld [vmem:[#allocation9 + $0x870] sm:$0xff]
    %v1741 = vld [vmem:[#allocation9 + $0x878] sm:$0xf]
    %v1742 = vld [vmem:[#allocation9 + $0x87c] sm:$0xff]
    %v1743 = vld [vmem:[#allocation9 + $0x884] sm:$0xf]
    %v1744 = vld [vmem:[#allocation9 + $0x888] sm:$0xff]
    %v1745 = vld [vmem:[#allocation9 + $0x890] sm:$0xf]
    %v1746 = vld [vmem:[#allocation9 + $0x894] sm:$0xff]
    %v1747 = vld [vmem:[#allocation9 + $0x89c] sm:$0xf]
    %v1748 = vld [vmem:[#allocation11] sm:$0x7]
    %v1750 = vlaneseq
    %v1751 = vshrl.u32 %v1750, 7
    %v1752 = vsub.s32 0, %v1751
    %v1753 = vrot.slane %v1748, %v1752
    %v1754 = vlaneseq
    %v1755 = vshrl.u32 %v1754, 7
    %v1756 = vsub.s32 1, %v1755
    %v1757 = vrot.slane %v1748, %v1756
    %v1758 = vlaneseq
    %v1759 = vshrl.u32 %v1758, 7
    %v1760 = vsub.s32 2, %v1759
    %v1761 = vrot.slane %v1748, %v1760
    %v2133 = vunpack.c.l.b16 %v1380
    %v2134 = vunpack.c.h.b16 %v1380
    %v2135 = vunpack.c.l.b16 %v1381
    %v2136 = vunpack.c.l.b16 %v1382
    %v2137 = vunpack.c.h.b16 %v1382
    %v2138 = vunpack.c.l.b16 %v1383
    %v2139 = vunpack.c.l.b16 %v1384
    %v2140 = vunpack.c.h.b16 %v1384
    %v2141 = vunpack.c.l.b16 %v1385
    %v2142 = vunpack.c.l.b16 %v1386
    %v2143 = vunpack.c.h.b16 %v1386
    %v2144 = vunpack.c.l.b16 %v1387
    %v2145 = vunpack.c.l.b16 %v1388
    %v2146 = vunpack.c.h.b16 %v1388
    %v2147 = vunpack.c.l.b16 %v1389
    %v2148 = vunpack.c.l.b16 %v1390
    %v2149 = vunpack.c.h.b16 %v1390
    %v2150 = vunpack.c.l.b16 %v1391
    %v2151 = vunpack.c.l.b16 %v1392
    %v2152 = vunpack.c.h.b16 %v1392
    %v2153 = vunpack.c.l.b16 %v1393
    %v2154 = vunpack.c.l.b16 %v1394
    %v2155 = vunpack.c.h.b16 %v1394
    %v2156 = vunpack.c.l.b16 %v1395
    %v2157 = vunpack.c.l.b16 %v1396
    %v2158 = vunpack.c.h.b16 %v1396
    %v2159 = vunpack.c.l.b16 %v1397
    %v2160 = vunpack.c.l.b16 %v1398
    %v2161 = vunpack.c.h.b16 %v1398
    %v2162 = vunpack.c.l.b16 %v1399
    %v2163 = vunpack.c.l.b16 %v1400
    %v2164 = vunpack.c.h.b16 %v1400
    %v2165 = vunpack.c.l.b16 %v1401
    %v2166 = vunpack.c.l.b16 %v1402
    %v2167 = vunpack.c.h.b16 %v1402
    %v2168 = vunpack.c.l.b16 %v1403
    %v2169 = vunpack.c.l.b16 %v1404
    %v2170 = vunpack.c.h.b16 %v1404
    %v2171 = vunpack.c.l.b16 %v1405
    %v2172 = vunpack.c.l.b16 %v1406
    %v2173 = vunpack.c.h.b16 %v1406
    %v2174 = vunpack.c.l.b16 %v1407
    %v2175 = vunpack.c.l.b16 %v1408
    %v2176 = vunpack.c.h.b16 %v1408
    %v2177 = vunpack.c.l.b16 %v1409
    %v2178 = vunpack.c.l.b16 %v1410
    %v2179 = vunpack.c.h.b16 %v1410
    %v2180 = vunpack.c.l.b16 %v1411
    %v2181 = vunpack.c.l.b16 %v1412
    %v2182 = vunpack.c.h.b16 %v1412
    %v2183 = vunpack.c.l.b16 %v1413
    %v2184 = vunpack.c.l.b16 %v1414
    %v2185 = vunpack.c.h.b16 %v1414
    %v2186 = vunpack.c.l.b16 %v1415
    %v2187 = vunpack.c.l.b16 %v1416
    %v2188 = vunpack.c.h.b16 %v1416
    %v2189 = vunpack.c.l.b16 %v1417
    %v2190 = vunpack.c.l.b16 %v1418
    %v2191 = vunpack.c.h.b16 %v1418
    %v2192 = vunpack.c.l.b16 %v1419
    %v2193 = vunpack.c.l.b16 %v1420
    %v2194 = vunpack.c.h.b16 %v1420
    %v2195 = vunpack.c.l.b16 %v1421
    %v2196 = vunpack.c.l.b16 %v1422
    %v2197 = vunpack.c.h.b16 %v1422
    %v2198 = vunpack.c.l.b16 %v1423
    %v2199 = vunpack.c.l.b16 %v1424
    %v2200 = vunpack.c.h.b16 %v1424
    %v2201 = vunpack.c.l.b16 %v1425
    %v2202 = vunpack.c.l.b16 %v1426
    %v2203 = vunpack.c.h.b16 %v1426
    %v2204 = vunpack.c.l.b16 %v1427
    %v2205 = vunpack.c.l.b16 %v1428
    %v2206 = vunpack.c.h.b16 %v1428
    %v2207 = vunpack.c.l.b16 %v1429
    %v2208 = vunpack.c.l.b16 %v1430
    %v2209 = vunpack.c.h.b16 %v1430
    %v2210 = vunpack.c.l.b16 %v1431
    %v2211 = vunpack.c.l.b16 %v1432
    %v2212 = vunpack.c.h.b16 %v1432
    %v2213 = vunpack.c.l.b16 %v1433
    %v2214 = vunpack.c.l.b16 %v1434
    %v2215 = vunpack.c.h.b16 %v1434
    %v2216 = vunpack.c.l.b16 %v1435
    %v2217 = vunpack.c.l.b16 %v1436
    %v2218 = vunpack.c.h.b16 %v1436
    %v2219 = vunpack.c.l.b16 %v1437
    %v2220 = vunpack.c.l.b16 %v1438
    %v2221 = vunpack.c.h.b16 %v1438
    %v2222 = vunpack.c.l.b16 %v1439
    %v2223 = vunpack.c.l.b16 %v1440
    %v2224 = vunpack.c.h.b16 %v1440
    %v2225 = vunpack.c.l.b16 %v1441
    %v2226 = vunpack.c.l.b16 %v1442
    %v2227 = vunpack.c.h.b16 %v1442
    %v2228 = vunpack.c.l.b16 %v1443
    %v2229 = vunpack.c.l.b16 %v1444
    %v2230 = vunpack.c.h.b16 %v1444
    %v2231 = vunpack.c.l.b16 %v1445
    %v2232 = vunpack.c.l.b16 %v1446
    %v2233 = vunpack.c.h.b16 %v1446
    %v2234 = vunpack.c.l.b16 %v1447
    %v2235 = vunpack.c.l.b16 %v1448
    %v2236 = vunpack.c.h.b16 %v1448
    %v2237 = vunpack.c.l.b16 %v1449
    %v2238 = vunpack.c.l.b16 %v1450
    %v2239 = vunpack.c.h.b16 %v1450
    %v2240 = vunpack.c.l.b16 %v1451
    %v2241 = vunpack.c.l.b16 %v1452
    %v2242 = vunpack.c.h.b16 %v1452
    %v2243 = vunpack.c.l.b16 %v1453
    %v2244 = vunpack.c.l.b16 %v1454
    %v2245 = vunpack.c.h.b16 %v1454
    %v2246 = vunpack.c.l.b16 %v1455
    %v2247 = vunpack.c.l.b16 %v1456
    %v2248 = vunpack.c.h.b16 %v1456
    %v2249 = vunpack.c.l.b16 %v1457
    %v2250 = vunpack.c.l.b16 %v1458
    %v2251 = vunpack.c.h.b16 %v1458
    %v2252 = vunpack.c.l.b16 %v1459
    %v2253 = vunpack.c.l.b16 %v1460
    %v2254 = vunpack.c.h.b16 %v1460
    %v2255 = vunpack.c.l.b16 %v1461
    %v2256 = vunpack.c.l.b16 %v1462
    %v2257 = vunpack.c.h.b16 %v1462
    %v2258 = vunpack.c.l.b16 %v1463
    %v2259 = vunpack.c.l.b16 %v1464
    %v2260 = vunpack.c.h.b16 %v1464
    %v2261 = vunpack.c.l.b16 %v1465
    %v2262 = vunpack.c.l.b16 %v1466
    %v2263 = vunpack.c.h.b16 %v1466
    %v2264 = vunpack.c.l.b16 %v1467
    %v2265 = vunpack.c.l.b16 %v1468
    %v2266 = vunpack.c.h.b16 %v1468
    %v2267 = vunpack.c.l.b16 %v1469
    %v2268 = vunpack.c.l.b16 %v1470
    %v2269 = vunpack.c.h.b16 %v1470
    %v2270 = vunpack.c.l.b16 %v1471
    %v2271 = vunpack.c.l.b16 %v1472
    %v2272 = vunpack.c.h.b16 %v1472
    %v2273 = vunpack.c.l.b16 %v1473
    %v2274 = vunpack.c.l.b16 %v1474
    %v2275 = vunpack.c.h.b16 %v1474
    %v2276 = vunpack.c.l.b16 %v1475
    %v2277 = vunpack.c.l.b16 %v1476
    %v2278 = vunpack.c.h.b16 %v1476
    %v2279 = vunpack.c.l.b16 %v1477
    %v2280 = vunpack.c.l.b16 %v1478
    %v2281 = vunpack.c.h.b16 %v1478
    %v2282 = vunpack.c.l.b16 %v1479
    %v2283 = vunpack.c.l.b16 %v1480
    %v2284 = vunpack.c.h.b16 %v1480
    %v2285 = vunpack.c.l.b16 %v1481
    %v2286 = vunpack.c.l.b16 %v1482
    %v2287 = vunpack.c.h.b16 %v1482
    %v2288 = vunpack.c.l.b16 %v1483
    %v2289 = vunpack.c.l.b16 %v1484
    %v2290 = vunpack.c.h.b16 %v1484
    %v2291 = vunpack.c.l.b16 %v1485
    %v2292 = vunpack.c.l.b16 %v1486
    %v2293 = vunpack.c.h.b16 %v1486
    %v2294 = vunpack.c.l.b16 %v1487
    %v2295 = vunpack.c.l.b16 %v1488
    %v2296 = vunpack.c.h.b16 %v1488
    %v2297 = vunpack.c.l.b16 %v1489
    %v2298 = vunpack.c.l.b16 %v1490
    %v2299 = vunpack.c.h.b16 %v1490
    %v2300 = vunpack.c.l.b16 %v1491
    %v2301 = vunpack.c.l.b16 %v1492
    %v2302 = vunpack.c.h.b16 %v1492
    %v2303 = vunpack.c.l.b16 %v1493
    %v2304 = vunpack.c.l.b16 %v1494
    %v2305 = vunpack.c.h.b16 %v1494
    %v2306 = vunpack.c.l.b16 %v1495
    %v2307 = vunpack.c.l.b16 %v1496
    %v2308 = vunpack.c.h.b16 %v1496
    %v2309 = vunpack.c.l.b16 %v1497
    %v2310 = vunpack.c.l.b16 %v1498
    %v2311 = vunpack.c.h.b16 %v1498
    %v2312 = vunpack.c.l.b16 %v1499
    %v2313 = vunpack.c.l.b16 %v1500
    %v2314 = vunpack.c.h.b16 %v1500
    %v2315 = vunpack.c.l.b16 %v1501
    %v2316 = vunpack.c.l.b16 %v1502
    %v2317 = vunpack.c.h.b16 %v1502
    %v2318 = vunpack.c.l.b16 %v1503
    %v2319 = vunpack.c.l.b16 %v1504
    %v2320 = vunpack.c.h.b16 %v1504
    %v2321 = vunpack.c.l.b16 %v1505
    %v2322 = vunpack.c.l.b16 %v1506
    %v2323 = vunpack.c.h.b16 %v1506
    %v2324 = vunpack.c.l.b16 %v1507
    %v2325 = vunpack.c.l.b16 %v1508
    %v2326 = vunpack.c.h.b16 %v1508
    %v2327 = vunpack.c.l.b16 %v1509
    %v2328 = vunpack.c.l.b16 %v1510
    %v2329 = vunpack.c.h.b16 %v1510
    %v2330 = vunpack.c.l.b16 %v1511
    %v2331 = vunpack.c.l.b16 %v1512
    %v2332 = vunpack.c.h.b16 %v1512
    %v2333 = vunpack.c.l.b16 %v1513
    %v2334 = vunpack.c.l.b16 %v1514
    %v2335 = vunpack.c.h.b16 %v1514
    %v2336 = vunpack.c.l.b16 %v1515
    %v2337 = vunpack.c.l.b16 %v1516
    %v2338 = vunpack.c.h.b16 %v1516
    %v2339 = vunpack.c.l.b16 %v1517
    %v2340 = vunpack.c.l.b16 %v1518
    %v2341 = vunpack.c.h.b16 %v1518
    %v2342 = vunpack.c.l.b16 %v1519
    %v2343 = vunpack.c.l.b16 %v1520
    %v2344 = vunpack.c.h.b16 %v1520
    %v2345 = vunpack.c.l.b16 %v1521
    %v2346 = vunpack.c.l.b16 %v1522
    %v2347 = vunpack.c.h.b16 %v1522
    %v2348 = vunpack.c.l.b16 %v1523
    %v2349 = vunpack.c.l.b16 %v1524
    %v2350 = vunpack.c.h.b16 %v1524
    %v2351 = vunpack.c.l.b16 %v1525
    %v2352 = vunpack.c.l.b16 %v1526
    %v2353 = vunpack.c.h.b16 %v1526
    %v2354 = vunpack.c.l.b16 %v1527
    %v2355 = vunpack.c.l.b16 %v1528
    %v2356 = vunpack.c.h.b16 %v1528
    %v2357 = vunpack.c.l.b16 %v1529
    %v2358 = vunpack.c.l.b16 %v1530
    %v2359 = vunpack.c.h.b16 %v1530
    %v2360 = vunpack.c.l.b16 %v1531
    %v2361 = vunpack.c.l.b16 %v1532
    %v2362 = vunpack.c.h.b16 %v1532
    %v2363 = vunpack.c.l.b16 %v1533
    %v2364 = vunpack.c.l.b16 %v1534
    %v2365 = vunpack.c.h.b16 %v1534
    %v2366 = vunpack.c.l.b16 %v1535
    %v2367 = vunpack.c.l.b16 %v1536
    %v2368 = vunpack.c.h.b16 %v1536
    %v2369 = vunpack.c.l.b16 %v1537
    %v2370 = vunpack.c.l.b16 %v1538
    %v2371 = vunpack.c.h.b16 %v1538
    %v2372 = vunpack.c.l.b16 %v1539
    %v2373 = vunpack.c.l.b16 %v1540
    %v2374 = vunpack.c.h.b16 %v1540
    %v2375 = vunpack.c.l.b16 %v1541
    %v2376 = vunpack.c.l.b16 %v1542
    %v2377 = vunpack.c.h.b16 %v1542
    %v2378 = vunpack.c.l.b16 %v1543
    %v2379 = vunpack.c.l.b16 %v1544
    %v2380 = vunpack.c.h.b16 %v1544
    %v2381 = vunpack.c.l.b16 %v1545
    %v2382 = vunpack.c.l.b16 %v1546
    %v2383 = vunpack.c.h.b16 %v1546
    %v2384 = vunpack.c.l.b16 %v1547
    %v2385 = vunpack.c.l.b16 %v1548
    %v2386 = vunpack.c.h.b16 %v1548
    %v2387 = vunpack.c.l.b16 %v1549
    %v2388 = vunpack.c.l.b16 %v1550
    %v2389 = vunpack.c.h.b16 %v1550
    %v2390 = vunpack.c.l.b16 %v1551
    %v2391 = vunpack.c.l.b16 %v1552
    %v2392 = vunpack.c.h.b16 %v1552
    %v2393 = vunpack.c.l.b16 %v1553
    %v2394 = vunpack.c.l.b16 %v1554
    %v2395 = vunpack.c.h.b16 %v1554
    %v2396 = vunpack.c.l.b16 %v1555
    %v2397 = vunpack.c.l.b16 %v1556
    %v2398 = vunpack.c.h.b16 %v1556
    %v2399 = vunpack.c.l.b16 %v1557
    %v2400 = vunpack.c.l.b16 %v1558
    %v2401 = vunpack.c.h.b16 %v1558
    %v2402 = vunpack.c.l.b16 %v1559
    %v2403 = vunpack.c.l.b16 %v1560
    %v2404 = vunpack.c.h.b16 %v1560
    %v2405 = vunpack.c.l.b16 %v1561
    %v2406 = vunpack.c.l.b16 %v1562
    %v2407 = vunpack.c.h.b16 %v1562
    %v2408 = vunpack.c.l.b16 %v1563
    %v2409 = vunpack.c.l.b16 %v1564
    %v2410 = vunpack.c.h.b16 %v1564
    %v2411 = vunpack.c.l.b16 %v1565
    %v2412 = vunpack.c.l.b16 %v1566
    %v2413 = vunpack.c.h.b16 %v1566
    %v2414 = vunpack.c.l.b16 %v1567
    %v2415 = vunpack.c.l.b16 %v1568
    %v2416 = vunpack.c.h.b16 %v1568
    %v2417 = vunpack.c.l.b16 %v1569
    %v2418 = vunpack.c.l.b16 %v1570
    %v2419 = vunpack.c.h.b16 %v1570
    %v2420 = vunpack.c.l.b16 %v1571
    %v2421 = vunpack.c.l.b16 %v1572
    %v2422 = vunpack.c.h.b16 %v1572
    %v2423 = vunpack.c.l.b16 %v1573
    %v2424 = vunpack.c.l.b16 %v1574
    %v2425 = vunpack.c.h.b16 %v1574
    %v2426 = vunpack.c.l.b16 %v1575
    %v2427 = vunpack.c.l.b16 %v1576
    %v2428 = vunpack.c.h.b16 %v1576
    %v2429 = vunpack.c.l.b16 %v1577
    %v2430 = vunpack.c.l.b16 %v1578
    %v2431 = vunpack.c.h.b16 %v1578
    %v2432 = vunpack.c.l.b16 %v1579
    %v2433 = vunpack.c.l.b16 %v1580
    %v2434 = vunpack.c.h.b16 %v1580
    %v2435 = vunpack.c.l.b16 %v1581
    %v2436 = vunpack.c.l.b16 %v1582
    %v2437 = vunpack.c.h.b16 %v1582
    %v2438 = vunpack.c.l.b16 %v1583
    %v2439 = vunpack.c.l.b16 %v1584
    %v2440 = vunpack.c.h.b16 %v1584
    %v2441 = vunpack.c.l.b16 %v1585
    %v2442 = vunpack.c.l.b16 %v1586
    %v2443 = vunpack.c.h.b16 %v1586
    %v2444 = vunpack.c.l.b16 %v1587
    %v2445 = vunpack.c.l.b16 %v1588
    %v2446 = vunpack.c.h.b16 %v1588
    %v2447 = vunpack.c.l.b16 %v1589
    %v2448 = vunpack.c.l.b16 %v1590
    %v2449 = vunpack.c.h.b16 %v1590
    %v2450 = vunpack.c.l.b16 %v1591
    %v2451 = vunpack.c.l.b16 %v1592
    %v2452 = vunpack.c.h.b16 %v1592
    %v2453 = vunpack.c.l.b16 %v1593
    %v2454 = vunpack.c.l.b16 %v1594
    %v2455 = vunpack.c.h.b16 %v1594
    %v2456 = vunpack.c.l.b16 %v1595
    %v2457 = vunpack.c.l.b16 %v1596
    %v2458 = vunpack.c.h.b16 %v1596
    %v2459 = vunpack.c.l.b16 %v1597
    %v2460 = vunpack.c.l.b16 %v1598
    %v2461 = vunpack.c.h.b16 %v1598
    %v2462 = vunpack.c.l.b16 %v1599
    %v2463 = vunpack.c.l.b16 %v1600
    %v2464 = vunpack.c.h.b16 %v1600
    %v2465 = vunpack.c.l.b16 %v1601
    %v2466 = vunpack.c.l.b16 %v1602
    %v2467 = vunpack.c.h.b16 %v1602
    %v2468 = vunpack.c.l.b16 %v1603
    %v2469 = vunpack.c.l.b16 %v1604
    %v2470 = vunpack.c.h.b16 %v1604
    %v2471 = vunpack.c.l.b16 %v1605
    %v2472 = vunpack.c.l.b16 %v1606
    %v2473 = vunpack.c.h.b16 %v1606
    %v2474 = vunpack.c.l.b16 %v1607
    %v2475 = vunpack.c.l.b16 %v1608
    %v2476 = vunpack.c.h.b16 %v1608
    %v2477 = vunpack.c.l.b16 %v1609
    %v2478 = vunpack.c.l.b16 %v1610
    %v2479 = vunpack.c.h.b16 %v1610
    %v2480 = vunpack.c.l.b16 %v1611
    %v2481 = vunpack.c.l.b16 %v1612
    %v2482 = vunpack.c.h.b16 %v1612
    %v2483 = vunpack.c.l.b16 %v1613
    %v2484 = vunpack.c.l.b16 %v1614
    %v2485 = vunpack.c.h.b16 %v1614
    %v2486 = vunpack.c.l.b16 %v1615
    %v2487 = vunpack.c.l.b16 %v1616
    %v2488 = vunpack.c.h.b16 %v1616
    %v2489 = vunpack.c.l.b16 %v1617
    %v2490 = vunpack.c.l.b16 %v1618
    %v2491 = vunpack.c.h.b16 %v1618
    %v2492 = vunpack.c.l.b16 %v1619
    %v2493 = vunpack.c.l.b16 %v1620
    %v2494 = vunpack.c.h.b16 %v1620
    %v2495 = vunpack.c.l.b16 %v1621
    %v2496 = vunpack.c.l.b16 %v1622
    %v2497 = vunpack.c.h.b16 %v1622
    %v2498 = vunpack.c.l.b16 %v1623
    %v2499 = vunpack.c.l.b16 %v1624
    %v2500 = vunpack.c.h.b16 %v1624
    %v2501 = vunpack.c.l.b16 %v1625
    %v2502 = vunpack.c.l.b16 %v1626
    %v2503 = vunpack.c.h.b16 %v1626
    %v2504 = vunpack.c.l.b16 %v1627
    %v2505 = vunpack.c.l.b16 %v1628
    %v2506 = vunpack.c.h.b16 %v1628
    %v2507 = vunpack.c.l.b16 %v1629
    %v2508 = vunpack.c.l.b16 %v1630
    %v2509 = vunpack.c.h.b16 %v1630
    %v2510 = vunpack.c.l.b16 %v1631
    %v2511 = vunpack.c.l.b16 %v1632
    %v2512 = vunpack.c.h.b16 %v1632
    %v2513 = vunpack.c.l.b16 %v1633
    %v2514 = vunpack.c.l.b16 %v1634
    %v2515 = vunpack.c.h.b16 %v1634
    %v2516 = vunpack.c.l.b16 %v1635
    %v2517 = vunpack.c.l.b16 %v1636
    %v2518 = vunpack.c.h.b16 %v1636
    %v2519 = vunpack.c.l.b16 %v1637
    %v2520 = vunpack.c.l.b16 %v1638
    %v2521 = vunpack.c.h.b16 %v1638
    %v2522 = vunpack.c.l.b16 %v1639
    %v2523 = vunpack.c.l.b16 %v1640
    %v2524 = vunpack.c.h.b16 %v1640
    %v2525 = vunpack.c.l.b16 %v1641
    %v2526 = vunpack.c.l.b16 %v1642
    %v2527 = vunpack.c.h.b16 %v1642
    %v2528 = vunpack.c.l.b16 %v1643
    %v2529 = vunpack.c.l.b16 %v1644
    %v2530 = vunpack.c.h.b16 %v1644
    %v2531 = vunpack.c.l.b16 %v1645
    %v2532 = vunpack.c.l.b16 %v1646
    %v2533 = vunpack.c.h.b16 %v1646
    %v2534 = vunpack.c.l.b16 %v1647
    %v2535 = vunpack.c.l.b16 %v1648
    %v2536 = vunpack.c.h.b16 %v1648
    %v2537 = vunpack.c.l.b16 %v1649
    %v2538 = vunpack.c.l.b16 %v1650
    %v2539 = vunpack.c.h.b16 %v1650
    %v2540 = vunpack.c.l.b16 %v1651
    %v2541 = vunpack.c.l.b16 %v1652
    %v2542 = vunpack.c.h.b16 %v1652
    %v2543 = vunpack.c.l.b16 %v1653
    %v2544 = vunpack.c.l.b16 %v1654
    %v2545 = vunpack.c.h.b16 %v1654
    %v2546 = vunpack.c.l.b16 %v1655
    %v2547 = vunpack.c.l.b16 %v1656
    %v2548 = vunpack.c.h.b16 %v1656
    %v2549 = vunpack.c.l.b16 %v1657
    %v2550 = vunpack.c.l.b16 %v1658
    %v2551 = vunpack.c.h.b16 %v1658
    %v2552 = vunpack.c.l.b16 %v1659
    %v2553 = vunpack.c.l.b16 %v1660
    %v2554 = vunpack.c.h.b16 %v1660
    %v2555 = vunpack.c.l.b16 %v1661
    %v2556 = vunpack.c.l.b16 %v1662
    %v2557 = vunpack.c.h.b16 %v1662
    %v2558 = vunpack.c.l.b16 %v1663
    %v2559 = vunpack.c.l.b16 %v1664
    %v2560 = vunpack.c.h.b16 %v1664
    %v2561 = vunpack.c.l.b16 %v1665
    %v2562 = vunpack.c.l.b16 %v1666
    %v2563 = vunpack.c.h.b16 %v1666
    %v2564 = vunpack.c.l.b16 %v1667
    %v2565 = vunpack.c.l.b16 %v1668
    %v2566 = vunpack.c.h.b16 %v1668
    %v2567 = vunpack.c.l.b16 %v1669
    %v2568 = vunpack.c.l.b16 %v1670
    %v2569 = vunpack.c.h.b16 %v1670
    %v2570 = vunpack.c.l.b16 %v1671
    %v2571 = vunpack.c.l.b16 %v1672
    %v2572 = vunpack.c.h.b16 %v1672
    %v2573 = vunpack.c.l.b16 %v1673
    %v2574 = vunpack.c.l.b16 %v1674
    %v2575 = vunpack.c.h.b16 %v1674
    %v2576 = vunpack.c.l.b16 %v1675
    %v2577 = vunpack.c.l.b16 %v1676
    %v2578 = vunpack.c.h.b16 %v1676
    %v2579 = vunpack.c.l.b16 %v1677
    %v2580 = vunpack.c.l.b16 %v1678
    %v2581 = vunpack.c.h.b16 %v1678
    %v2582 = vunpack.c.l.b16 %v1679
    %v2583 = vunpack.c.l.b16 %v1680
    %v2584 = vunpack.c.h.b16 %v1680
    %v2585 = vunpack.c.l.b16 %v1681
    %v2586 = vunpack.c.l.b16 %v1682
    %v2587 = vunpack.c.h.b16 %v1682
    %v2588 = vunpack.c.l.b16 %v1683
    %v2589 = vunpack.c.l.b16 %v1684
    %v2590 = vunpack.c.h.b16 %v1684
    %v2591 = vunpack.c.l.b16 %v1685
    %v2592 = vunpack.c.l.b16 %v1686
    %v2593 = vunpack.c.h.b16 %v1686
    %v2594 = vunpack.c.l.b16 %v1687
    %v2595 = vunpack.c.l.b16 %v1688
    %v2596 = vunpack.c.h.b16 %v1688
    %v2597 = vunpack.c.l.b16 %v1689
    %v2598 = vunpack.c.l.b16 %v1690
    %v2599 = vunpack.c.h.b16 %v1690
    %v2600 = vunpack.c.l.b16 %v1691
    %v2601 = vunpack.c.l.b16 %v1692
    %v2602 = vunpack.c.h.b16 %v1692
    %v2603 = vunpack.c.l.b16 %v1693
    %v2604 = vunpack.c.l.b16 %v1694
    %v2605 = vunpack.c.h.b16 %v1694
    %v2606 = vunpack.c.l.b16 %v1695
    %v2607 = vunpack.c.l.b16 %v1696
    %v2608 = vunpack.c.h.b16 %v1696
    %v2609 = vunpack.c.l.b16 %v1697
    %v2610 = vunpack.c.l.b16 %v1698
    %v2611 = vunpack.c.h.b16 %v1698
    %v2612 = vunpack.c.l.b16 %v1699
    %v2613 = vunpack.c.l.b16 %v1700
    %v2614 = vunpack.c.h.b16 %v1700
    %v2615 = vunpack.c.l.b16 %v1701
    %v2616 = vunpack.c.l.b16 %v1702
    %v2617 = vunpack.c.h.b16 %v1702
    %v2618 = vunpack.c.l.b16 %v1703
    %v2619 = vunpack.c.l.b16 %v1704
    %v2620 = vunpack.c.h.b16 %v1704
    %v2621 = vunpack.c.l.b16 %v1705
    %v2622 = vunpack.c.l.b16 %v1706
    %v2623 = vunpack.c.h.b16 %v1706
    %v2624 = vunpack.c.l.b16 %v1707
    %v2625 = vunpack.c.l.b16 %v1708
    %v2626 = vunpack.c.h.b16 %v1708
    %v2627 = vunpack.c.l.b16 %v1709
    %v2628 = vunpack.c.l.b16 %v1710
    %v2629 = vunpack.c.h.b16 %v1710
    %v2630 = vunpack.c.l.b16 %v1711
    %v2631 = vunpack.c.l.b16 %v1712
    %v2632 = vunpack.c.h.b16 %v1712
    %v2633 = vunpack.c.l.b16 %v1713
    %v2634 = vunpack.c.l.b16 %v1714
    %v2635 = vunpack.c.h.b16 %v1714
    %v2636 = vunpack.c.l.b16 %v1715
    %v2637 = vunpack.c.l.b16 %v1716
    %v2638 = vunpack.c.h.b16 %v1716
    %v2639 = vunpack.c.l.b16 %v1717
    %v2640 = vunpack.c.l.b16 %v1718
    %v2641 = vunpack.c.h.b16 %v1718
    %v2642 = vunpack.c.l.b16 %v1719
    %v2643 = vunpack.c.l.b16 %v1720
    %v2644 = vunpack.c.h.b16 %v1720
    %v2645 = vunpack.c.l.b16 %v1721
    %v2646 = vunpack.c.l.b16 %v1722
    %v2647 = vunpack.c.h.b16 %v1722
    %v2648 = vunpack.c.l.b16 %v1723
    %v2649 = vunpack.c.l.b16 %v1724
    %v2650 = vunpack.c.h.b16 %v1724
    %v2651 = vunpack.c.l.b16 %v1725
    %v2652 = vunpack.c.l.b16 %v1726
    %v2653 = vunpack.c.h.b16 %v1726
    %v2654 = vunpack.c.l.b16 %v1727
    %v2655 = vunpack.c.l.b16 %v1728
    %v2656 = vunpack.c.h.b16 %v1728
    %v2657 = vunpack.c.l.b16 %v1729
    %v2658 = vunpack.c.l.b16 %v1730
    %v2659 = vunpack.c.h.b16 %v1730
    %v2660 = vunpack.c.l.b16 %v1731
    %v2661 = vunpack.c.l.b16 %v1732
    %v2662 = vunpack.c.h.b16 %v1732
    %v2663 = vunpack.c.l.b16 %v1733
    %v2664 = vunpack.c.l.b16 %v1734
    %v2665 = vunpack.c.h.b16 %v1734
    %v2666 = vunpack.c.l.b16 %v1735
    %v2667 = vunpack.c.l.b16 %v1736
    %v2668 = vunpack.c.h.b16 %v1736
    %v2669 = vunpack.c.l.b16 %v1737
    %v2670 = vunpack.c.l.b16 %v1738
    %v2671 = vunpack.c.h.b16 %v1738
    %v2672 = vunpack.c.l.b16 %v1739
    %v2673 = vunpack.c.l.b16 %v1740
    %v2674 = vunpack.c.h.b16 %v1740
    %v2675 = vunpack.c.l.b16 %v1741
    %v2676 = vunpack.c.l.b16 %v1742
    %v2677 = vunpack.c.h.b16 %v1742
    %v2678 = vunpack.c.l.b16 %v1743
    %v2679 = vunpack.c.l.b16 %v1744
    %v2680 = vunpack.c.h.b16 %v1744
    %v2681 = vunpack.c.l.b16 %v1745
    %v2682 = vunpack.c.l.b16 %v1746
    %v2683 = vunpack.c.h.b16 %v1746
    %v2684 = vunpack.c.l.b16 %v1747
    %v2685 = vpack.c.b16 %v2136, %v2133
    %v2686 = vpack.c.b16 %v2137, %v2134
    %v2687 = vpack.c.b16 %v2138, %v2135
    %v2688 = vpack.c.b16 %v2142, %v2139
    %v2689 = vpack.c.b16 %v2143, %v2140
    %v2690 = vpack.c.b16 %v2144, %v2141
    %v2691 = vpack.c.b16 %v2148, %v2145
    %v2692 = vpack.c.b16 %v2149, %v2146
    %v2693 = vpack.c.b16 %v2150, %v2147
    %v2694 = vpack.c.b16 %v2154, %v2151
    %v2695 = vpack.c.b16 %v2155, %v2152
    %v2696 = vpack.c.b16 %v2156, %v2153
    %v2697 = vpack.c.b16 %v2160, %v2157
    %v2698 = vpack.c.b16 %v2161, %v2158
    %v2699 = vpack.c.b16 %v2162, %v2159
    %v2700 = vpack.c.b16 %v2166, %v2163
    %v2701 = vpack.c.b16 %v2167, %v2164
    %v2702 = vpack.c.b16 %v2168, %v2165
    %v2703 = vpack.c.b16 %v2172, %v2169
    %v2704 = vpack.c.b16 %v2173, %v2170
    %v2705 = vpack.c.b16 %v2174, %v2171
    %v2706 = vpack.c.b16 %v2178, %v2175
    %v2707 = vpack.c.b16 %v2179, %v2176
    %v2708 = vpack.c.b16 %v2180, %v2177
    %v2709 = vpack.c.b16 %v2184, %v2181
    %v2710 = vpack.c.b16 %v2185, %v2182
    %v2711 = vpack.c.b16 %v2186, %v2183
    %v2712 = vpack.c.b16 %v2190, %v2187
    %v2713 = vpack.c.b16 %v2191, %v2188
    %v2714 = vpack.c.b16 %v2192, %v2189
    %v2715 = vpack.c.b16 %v2196, %v2193
    %v2716 = vpack.c.b16 %v2197, %v2194
    %v2717 = vpack.c.b16 %v2198, %v2195
    %v2718 = vpack.c.b16 %v2202, %v2199
    %v2719 = vpack.c.b16 %v2203, %v2200
    %v2720 = vpack.c.b16 %v2204, %v2201
    %v2721 = vpack.c.b16 %v2208, %v2205
    %v2722 = vpack.c.b16 %v2209, %v2206
    %v2723 = vpack.c.b16 %v2210, %v2207
    %v2724 = vpack.c.b16 %v2214, %v2211
    %v2725 = vpack.c.b16 %v2215, %v2212
    %v2726 = vpack.c.b16 %v2216, %v2213
    %v2727 = vpack.c.b16 %v2220, %v2217
    %v2728 = vpack.c.b16 %v2221, %v2218
    %v2729 = vpack.c.b16 %v2222, %v2219
    %v2730 = vpack.c.b16 %v2226, %v2223
    %v2731 = vpack.c.b16 %v2227, %v2224
    %v2732 = vpack.c.b16 %v2228, %v2225
    %v2733 = vpack.c.b16 %v2232, %v2229
    %v2734 = vpack.c.b16 %v2233, %v2230
    %v2735 = vpack.c.b16 %v2234, %v2231
    %v2736 = vpack.c.b16 %v2238, %v2235
    %v2737 = vpack.c.b16 %v2239, %v2236
    %v2738 = vpack.c.b16 %v2240, %v2237
    %v2739 = vpack.c.b16 %v2244, %v2241
    %v2740 = vpack.c.b16 %v2245, %v2242
    %v2741 = vpack.c.b16 %v2246, %v2243
    %v2742 = vpack.c.b16 %v2250, %v2247
    %v2743 = vpack.c.b16 %v2251, %v2248
    %v2744 = vpack.c.b16 %v2252, %v2249
    %v2745 = vpack.c.b16 %v2256, %v2253
    %v2746 = vpack.c.b16 %v2257, %v2254
    %v2747 = vpack.c.b16 %v2258, %v2255
    %v2748 = vpack.c.b16 %v2262, %v2259
    %v2749 = vpack.c.b16 %v2263, %v2260
    %v2750 = vpack.c.b16 %v2264, %v2261
    %v2751 = vpack.c.b16 %v2268, %v2265
    %v2752 = vpack.c.b16 %v2269, %v2266
    %v2753 = vpack.c.b16 %v2270, %v2267
    %v2754 = vpack.c.b16 %v2274, %v2271
    %v2755 = vpack.c.b16 %v2275, %v2272
    %v2756 = vpack.c.b16 %v2276, %v2273
    %v2757 = vpack.c.b16 %v2280, %v2277
    %v2758 = vpack.c.b16 %v2281, %v2278
    %v2759 = vpack.c.b16 %v2282, %v2279
    %v2760 = vpack.c.b16 %v2286, %v2283
    %v2761 = vpack.c.b16 %v2287, %v2284
    %v2762 = vpack.c.b16 %v2288, %v2285
    %v2763 = vpack.c.b16 %v2292, %v2289
    %v2764 = vpack.c.b16 %v2293, %v2290
    %v2765 = vpack.c.b16 %v2294, %v2291
    %v2766 = vpack.c.b16 %v2298, %v2295
    %v2767 = vpack.c.b16 %v2299, %v2296
    %v2768 = vpack.c.b16 %v2300, %v2297
    %v2769 = vpack.c.b16 %v2304, %v2301
    %v2770 = vpack.c.b16 %v2305, %v2302
    %v2771 = vpack.c.b16 %v2306, %v2303
    %v2772 = vpack.c.b16 %v2310, %v2307
    %v2773 = vpack.c.b16 %v2311, %v2308
    %v2774 = vpack.c.b16 %v2312, %v2309
    %v2775 = vpack.c.b16 %v2316, %v2313
    %v2776 = vpack.c.b16 %v2317, %v2314
    %v2777 = vpack.c.b16 %v2318, %v2315
    %v2778 = vpack.c.b16 %v2322, %v2319
    %v2779 = vpack.c.b16 %v2323, %v2320
    %v2780 = vpack.c.b16 %v2324, %v2321
    %v2781 = vpack.c.b16 %v2328, %v2325
    %v2782 = vpack.c.b16 %v2329, %v2326
    %v2783 = vpack.c.b16 %v2330, %v2327
    %v2784 = vpack.c.b16 %v2334, %v2331
    %v2785 = vpack.c.b16 %v2335, %v2332
    %v2786 = vpack.c.b16 %v2336, %v2333
    %v2787 = vpack.c.b16 %v2340, %v2337
    %v2788 = vpack.c.b16 %v2341, %v2338
    %v2789 = vpack.c.b16 %v2342, %v2339
    %v2790 = vpack.c.b16 %v2346, %v2343
    %v2791 = vpack.c.b16 %v2347, %v2344
    %v2792 = vpack.c.b16 %v2348, %v2345
    %v2793 = vpack.c.b16 %v2352, %v2349
    %v2794 = vpack.c.b16 %v2353, %v2350
    %v2795 = vpack.c.b16 %v2354, %v2351
    %v2796 = vpack.c.b16 %v2358, %v2355
    %v2797 = vpack.c.b16 %v2359, %v2356
    %v2798 = vpack.c.b16 %v2360, %v2357
    %v2799 = vpack.c.b16 %v2364, %v2361
    %v2800 = vpack.c.b16 %v2365, %v2362
    %v2801 = vpack.c.b16 %v2366, %v2363
    %v2802 = vpack.c.b16 %v2370, %v2367
    %v2803 = vpack.c.b16 %v2371, %v2368
    %v2804 = vpack.c.b16 %v2372, %v2369
    %v2805 = vpack.c.b16 %v2376, %v2373
    %v2806 = vpack.c.b16 %v2377, %v2374
    %v2807 = vpack.c.b16 %v2378, %v2375
    %v2808 = vpack.c.b16 %v2382, %v2379
    %v2809 = vpack.c.b16 %v2383, %v2380
    %v2810 = vpack.c.b16 %v2384, %v2381
    %v2811 = vpack.c.b16 %v2388, %v2385
    %v2812 = vpack.c.b16 %v2389, %v2386
    %v2813 = vpack.c.b16 %v2390, %v2387
    %v2814 = vpack.c.b16 %v2394, %v2391
    %v2815 = vpack.c.b16 %v2395, %v2392
    %v2816 = vpack.c.b16 %v2396, %v2393
    %v2817 = vpack.c.b16 %v2400, %v2397
    %v2818 = vpack.c.b16 %v2401, %v2398
    %v2819 = vpack.c.b16 %v2402, %v2399
    %v2820 = vpack.c.b16 %v2406, %v2403
    %v2821 = vpack.c.b16 %v2407, %v2404
    %v2822 = vpack.c.b16 %v2408, %v2405
    %v2823 = vpack.c.b16 %v2412, %v2409
    %v2824 = vpack.c.b16 %v2413, %v2410
    %v2825 = vpack.c.b16 %v2414, %v2411
    %v2826 = vpack.c.b16 %v2418, %v2415
    %v2827 = vpack.c.b16 %v2419, %v2416
    %v2828 = vpack.c.b16 %v2420, %v2417
    %v2829 = vpack.c.b16 %v2424, %v2421
    %v2830 = vpack.c.b16 %v2425, %v2422
    %v2831 = vpack.c.b16 %v2426, %v2423
    %v2832 = vpack.c.b16 %v2430, %v2427
    %v2833 = vpack.c.b16 %v2431, %v2428
    %v2834 = vpack.c.b16 %v2432, %v2429
    %v2835 = vpack.c.b16 %v2436, %v2433
    %v2836 = vpack.c.b16 %v2437, %v2434
    %v2837 = vpack.c.b16 %v2438, %v2435
    %v2838 = vpack.c.b16 %v2442, %v2439
    %v2839 = vpack.c.b16 %v2443, %v2440
    %v2840 = vpack.c.b16 %v2444, %v2441
    %v2841 = vpack.c.b16 %v2448, %v2445
    %v2842 = vpack.c.b16 %v2449, %v2446
    %v2843 = vpack.c.b16 %v2450, %v2447
    %v2844 = vpack.c.b16 %v2454, %v2451
    %v2845 = vpack.c.b16 %v2455, %v2452
    %v2846 = vpack.c.b16 %v2456, %v2453
    %v2847 = vpack.c.b16 %v2460, %v2457
    %v2848 = vpack.c.b16 %v2461, %v2458
    %v2849 = vpack.c.b16 %v2462, %v2459
    %v2850 = vpack.c.b16 %v2466, %v2463
    %v2851 = vpack.c.b16 %v2467, %v2464
    %v2852 = vpack.c.b16 %v2468, %v2465
    %v2853 = vpack.c.b16 %v2472, %v2469
    %v2854 = vpack.c.b16 %v2473, %v2470
    %v2855 = vpack.c.b16 %v2474, %v2471
    %v2856 = vpack.c.b16 %v2478, %v2475
    %v2857 = vpack.c.b16 %v2479, %v2476
    %v2858 = vpack.c.b16 %v2480, %v2477
    %v2859 = vpack.c.b16 %v2484, %v2481
    %v2860 = vpack.c.b16 %v2485, %v2482
    %v2861 = vpack.c.b16 %v2486, %v2483
    %v2862 = vpack.c.b16 %v2490, %v2487
    %v2863 = vpack.c.b16 %v2491, %v2488
    %v2864 = vpack.c.b16 %v2492, %v2489
    %v2865 = vpack.c.b16 %v2496, %v2493
    %v2866 = vpack.c.b16 %v2497, %v2494
    %v2867 = vpack.c.b16 %v2498, %v2495
    %v2868 = vpack.c.b16 %v2502, %v2499
    %v2869 = vpack.c.b16 %v2503, %v2500
    %v2870 = vpack.c.b16 %v2504, %v2501
    %v2871 = vpack.c.b16 %v2508, %v2505
    %v2872 = vpack.c.b16 %v2509, %v2506
    %v2873 = vpack.c.b16 %v2510, %v2507
    %v2874 = vpack.c.b16 %v2514, %v2511
    %v2875 = vpack.c.b16 %v2515, %v2512
    %v2876 = vpack.c.b16 %v2516, %v2513
    %v2877 = vpack.c.b16 %v2520, %v2517
    %v2878 = vpack.c.b16 %v2521, %v2518
    %v2879 = vpack.c.b16 %v2522, %v2519
    %v2880 = vpack.c.b16 %v2526, %v2523
    %v2881 = vpack.c.b16 %v2527, %v2524
    %v2882 = vpack.c.b16 %v2528, %v2525
    %v2883 = vpack.c.b16 %v2532, %v2529
    %v2884 = vpack.c.b16 %v2533, %v2530
    %v2885 = vpack.c.b16 %v2534, %v2531
    %v2886 = vpack.c.b16 %v2538, %v2535
    %v2887 = vpack.c.b16 %v2539, %v2536
    %v2888 = vpack.c.b16 %v2540, %v2537
    %v2889 = vpack.c.b16 %v2544, %v2541
    %v2890 = vpack.c.b16 %v2545, %v2542
    %v2891 = vpack.c.b16 %v2546, %v2543
    %v2892 = vpack.c.b16 %v2550, %v2547
    %v2893 = vpack.c.b16 %v2551, %v2548
    %v2894 = vpack.c.b16 %v2552, %v2549
    %v2895 = vpack.c.b16 %v2556, %v2553
    %v2896 = vpack.c.b16 %v2557, %v2554
    %v2897 = vpack.c.b16 %v2558, %v2555
    %v2898 = vpack.c.b16 %v2562, %v2559
    %v2899 = vpack.c.b16 %v2563, %v2560
    %v2900 = vpack.c.b16 %v2564, %v2561
    %v2901 = vpack.c.b16 %v2568, %v2565
    %v2902 = vpack.c.b16 %v2569, %v2566
    %v2903 = vpack.c.b16 %v2570, %v2567
    %v2904 = vpack.c.b16 %v2574, %v2571
    %v2905 = vpack.c.b16 %v2575, %v2572
    %v2906 = vpack.c.b16 %v2576, %v2573
    %v2907 = vpack.c.b16 %v2580, %v2577
    %v2908 = vpack.c.b16 %v2581, %v2578
    %v2909 = vpack.c.b16 %v2582, %v2579
    %v2910 = vpack.c.b16 %v2586, %v2583
    %v2911 = vpack.c.b16 %v2587, %v2584
    %v2912 = vpack.c.b16 %v2588, %v2585
    %v2913 = vpack.c.b16 %v2592, %v2589
    %v2914 = vpack.c.b16 %v2593, %v2590
    %v2915 = vpack.c.b16 %v2594, %v2591
    %v2916 = vpack.c.b16 %v2598, %v2595
    %v2917 = vpack.c.b16 %v2599, %v2596
    %v2918 = vpack.c.b16 %v2600, %v2597
    %v2919 = vpack.c.b16 %v2604, %v2601
    %v2920 = vpack.c.b16 %v2605, %v2602
    %v2921 = vpack.c.b16 %v2606, %v2603
    %v2922 = vpack.c.b16 %v2610, %v2607
    %v2923 = vpack.c.b16 %v2611, %v2608
    %v2924 = vpack.c.b16 %v2612, %v2609
    %v2925 = vpack.c.b16 %v2616, %v2613
    %v2926 = vpack.c.b16 %v2617, %v2614
    %v2927 = vpack.c.b16 %v2618, %v2615
    %v2928 = vpack.c.b16 %v2622, %v2619
    %v2929 = vpack.c.b16 %v2623, %v2620
    %v2930 = vpack.c.b16 %v2624, %v2621
    %v2931 = vpack.c.b16 %v2628, %v2625
    %v2932 = vpack.c.b16 %v2629, %v2626
    %v2933 = vpack.c.b16 %v2630, %v2627
    %v2934 = vpack.c.b16 %v2634, %v2631
    %v2935 = vpack.c.b16 %v2635, %v2632
    %v2936 = vpack.c.b16 %v2636, %v2633
    %v2937 = vpack.c.b16 %v2640, %v2637
    %v2938 = vpack.c.b16 %v2641, %v2638
    %v2939 = vpack.c.b16 %v2642, %v2639
    %v2940 = vpack.c.b16 %v2646, %v2643
    %v2941 = vpack.c.b16 %v2647, %v2644
    %v2942 = vpack.c.b16 %v2648, %v2645
    %v2943 = vpack.c.b16 %v2652, %v2649
    %v2944 = vpack.c.b16 %v2653, %v2650
    %v2945 = vpack.c.b16 %v2654, %v2651
    %v2946 = vpack.c.b16 %v2658, %v2655
    %v2947 = vpack.c.b16 %v2659, %v2656
    %v2948 = vpack.c.b16 %v2660, %v2657
    %v2949 = vpack.c.b16 %v2664, %v2661
    %v2950 = vpack.c.b16 %v2665, %v2662
    %v2951 = vpack.c.b16 %v2666, %v2663
    %v2952 = vpack.c.b16 %v2670, %v2667
    %v2953 = vpack.c.b16 %v2671, %v2668
    %v2954 = vpack.c.b16 %v2672, %v2669
    %v2955 = vpack.c.b16 %v2676, %v2673
    %v2956 = vpack.c.b16 %v2677, %v2674
    %v2957 = vpack.c.b16 %v2678, %v2675
    %v2958 = vpack.c.b16 %v2682, %v2679
    %v2959 = vpack.c.b16 %v2683, %v2680
    %v2960 = vpack.c.b16 %v2684, %v2681
    %vm3237 = vcmask 523264
    %v3239 = vsel %vm3237, %v1379, 0
    %3241 = vmatprep.subr.bf16.mxu0 %v2686
    %3242 = vmatpush1.bf16.msra.mxu0 %v2685
    %3243 = vmatprep.subr.bf16.mxu0 %v2689
    %3244 = vmatpush1.bf16.msra.mxu0 %v2688
    %3245 = vmatprep.subr.bf16.mxu0 %v2692
    %3246 = vmatpush1.bf16.msra.mxu0 %v2691
    %3247 = vmatprep.subr.bf16.mxu0 %v2695
    %3248 = vmatpush1.bf16.msra.mxu0 %v2694
    %3249 = vmatprep.subr.bf16.mxu0 %v2698
    %3250 = vmatpush1.bf16.msra.mxu0 %v2697
    %3251 = vmatprep.subr.bf16.mxu0 %v2701
    %3252 = vmatpush1.bf16.msra.mxu0 %v2700
    %3253 = vmatprep.subr.bf16.mxu0 %v2704
    %3254 = vmatpush1.bf16.msra.mxu0 %v2703
    %3255 = vmatprep.subr.bf16.mxu0 %v2707
    %3256 = vmatpush1.bf16.msra.mxu0 %v2706
    %3257 = vmatprep.subr.bf16.mxu0 %v2710
    %3258 = vmatpush1.bf16.msra.mxu0 %v2709
    %3259 = vmatprep.subr.bf16.mxu0 %v2713
    %3260 = vmatpush1.bf16.msra.mxu0 %v2712
    %3261 = vmatprep.subr.bf16.mxu0 %v2716
    %3262 = vmatpush1.bf16.msra.mxu0 %v2715
    %3263 = vmatprep.subr.bf16.mxu0 %v2719
    %3264 = vmatpush1.bf16.msra.mxu0 %v2718
    %3265 = vmatprep.subr.bf16.mxu0 %v2722
    %3266 = vmatpush1.bf16.msra.mxu0 %v2721
    %3267 = vmatprep.subr.bf16.mxu0 %v2725
    %3268 = vmatpush1.bf16.msra.mxu0 %v2724
    %3269 = vmatprep.subr.bf16.mxu0 %v2728
    %3270 = vmatpush1.bf16.msra.mxu0 %v2727
    %3271 = vmatprep.subr.bf16.mxu0 %v2731
    %3272 = vmatpush1.bf16.msra.mxu0 %v2730
    %3273 = vmatprep.mubr.bf16.mxu0 %v1369
    %3274 = vmatmul.mubr.bf16.gmra.mrb[0].mxu0 %v1368
    %v3275 = vpop.f32.mrb[0].mxu0
    %v3276 = vadd.f32 %v1753, %v3275
    %v3277 = vpop.f32.mrb[0].mxu0
    %v3278 = vadd.f32 %v1757, %v3277
    %v3279 = vpop.f32.mrb[0].mxu0
    %v3280 = vpop.f32.mrb[0].mxu0
    %3281 = vdwg.mxu0
    %3282 = vmatprep.subr.bf16.mxu0 %v2734
    %3283 = vmatpush1.bf16.msra.mxu0 %v2733
    %3284 = vmatprep.subr.bf16.mxu0 %v2737
    %3285 = vmatpush1.bf16.msra.mxu0 %v2736
    %3286 = vmatprep.subr.bf16.mxu0 %v2740
    %3287 = vmatpush1.bf16.msra.mxu0 %v2739
    %3288 = vmatprep.subr.bf16.mxu0 %v2743
    %3289 = vmatpush1.bf16.msra.mxu0 %v2742
    %3290 = vmatprep.subr.bf16.mxu0 %v2746
    %3291 = vmatpush1.bf16.msra.mxu0 %v2745
    %3292 = vmatprep.subr.bf16.mxu0 %v2749
    %3293 = vmatpush1.bf16.msra.mxu0 %v2748
    %3294 = vmatprep.subr.bf16.mxu0 %v2752
    %3295 = vmatpush1.bf16.msra.mxu0 %v2751
    %3296 = vmatprep.subr.bf16.mxu0 %v2755
    %3297 = vmatpush1.bf16.msra.mxu0 %v2754
    %3298 = vmatprep.subr.bf16.mxu0 %v2758
    %3299 = vmatpush1.bf16.msra.mxu0 %v2757
    %3300 = vmatprep.subr.bf16.mxu0 %v2761
    %3301 = vmatpush1.bf16.msra.mxu0 %v2760
    %3302 = vmatprep.subr.bf16.mxu0 %v2764
    %3303 = vmatpush1.bf16.msra.mxu0 %v2763
    %3304 = vmatprep.subr.bf16.mxu0 %v2767
    %3305 = vmatpush1.bf16.msra.mxu0 %v2766
    %3306 = vmatprep.subr.bf16.mxu0 %v2770
    %3307 = vmatpush1.bf16.msra.mxu0 %v2769
    %3308 = vmatprep.subr.bf16.mxu0 %v2773
    %3309 = vmatpush1.bf16.msra.mxu0 %v2772
    %3310 = vmatprep.subr.bf16.mxu0 %v2776
    %3311 = vmatpush1.bf16.msra.mxu0 %v2775
    %3312 = vmatprep.subr.bf16.mxu0 %v2779
    %3313 = vmatpush1.bf16.msra.mxu0 %v2778
    %3314 = vmatprep.mubr.bf16.mxu0 %v1371
    %3315 = vmatmul.mubr.bf16.gmra.mrb[0].mxu0 %v1370
    %v3316 = vpop.f32.mrb[0].mxu0
    %v3317 = vadd.f32 %v3276, %v3316
    %v3318 = vpop.f32.mrb[0].mxu0
    %v3319 = vadd.f32 %v3278, %v3318
    %v3320 = vpop.f32.mrb[0].mxu0
    %v3321 = vpop.f32.mrb[0].mxu0
    %3322 = vdwg.mxu0
    %3323 = vmatprep.subr.bf16.mxu0 %v2782
    %3324 = vmatpush1.bf16.msra.mxu0 %v2781
    %3325 = vmatprep.subr.bf16.mxu0 %v2785
    %3326 = vmatpush1.bf16.msra.mxu0 %v2784
    %3327 = vmatprep.subr.bf16.mxu0 %v2788
    %3328 = vmatpush1.bf16.msra.mxu0 %v2787
    %3329 = vmatprep.subr.bf16.mxu0 %v2791
    %3330 = vmatpush1.bf16.msra.mxu0 %v2790
    %3331 = vmatprep.subr.bf16.mxu0 %v2794
    %3332 = vmatpush1.bf16.msra.mxu0 %v2793
    %3333 = vmatprep.subr.bf16.mxu0 %v2797
    %3334 = vmatpush1.bf16.msra.mxu0 %v2796
    %3335 = vmatprep.subr.bf16.mxu0 %v2800
    %3336 = vmatpush1.bf16.msra.mxu0 %v2799
    %3337 = vmatprep.subr.bf16.mxu0 %v2803
    %3338 = vmatpush1.bf16.msra.mxu0 %v2802
    %3339 = vmatprep.subr.bf16.mxu0 %v2806
    %3340 = vmatpush1.bf16.msra.mxu0 %v2805
    %3341 = vmatprep.subr.bf16.mxu0 %v2809
    %3342 = vmatpush1.bf16.msra.mxu0 %v2808
    %3343 = vmatprep.subr.bf16.mxu0 %v2812
    %3344 = vmatpush1.bf16.msra.mxu0 %v2811
    %3345 = vmatprep.subr.bf16.mxu0 %v2815
    %3346 = vmatpush1.bf16.msra.mxu0 %v2814
    %3347 = vmatprep.subr.bf16.mxu0 %v2818
    %3348 = vmatpush1.bf16.msra.mxu0 %v2817
    %3349 = vmatprep.subr.bf16.mxu0 %v2821
    %3350 = vmatpush1.bf16.msra.mxu0 %v2820
    %3351 = vmatprep.subr.bf16.mxu0 %v2824
    %3352 = vmatpush1.bf16.msra.mxu0 %v2823
    %3353 = vmatprep.subr.bf16.mxu0 %v2827
    %3354 = vmatpush1.bf16.msra.mxu0 %v2826
    %3355 = vmatprep.mubr.bf16.mxu0 %v1373
    %3356 = vmatmul.mubr.bf16.gmra.mrb[0].mxu0 %v1372
    %v3357 = vpop.f32.mrb[0].mxu0
    %v3358 = vadd.f32 %v3317, %v3357
    %v3359 = vpop.f32.mrb[0].mxu0
    %v3360 = vadd.f32 %v3319, %v3359
    %v3361 = vpop.f32.mrb[0].mxu0
    %v3362 = vpop.f32.mrb[0].mxu0
    %3363 = vdwg.mxu0
    %3364 = vmatprep.subr.bf16.mxu0 %v2830
    %3365 = vmatpush1.bf16.msra.mxu0 %v2829
    %3366 = vmatprep.subr.bf16.mxu0 %v2833
    %3367 = vmatpush1.bf16.msra.mxu0 %v2832
    %3368 = vmatprep.subr.bf16.mxu0 %v2836
    %3369 = vmatpush1.bf16.msra.mxu0 %v2835
    %3370 = vmatprep.subr.bf16.mxu0 %v2839
    %3371 = vmatpush1.bf16.msra.mxu0 %v2838
    %3372 = vmatprep.subr.bf16.mxu0 %v2842
    %3373 = vmatpush1.bf16.msra.mxu0 %v2841
    %3374 = vmatprep.subr.bf16.mxu0 %v2845
    %3375 = vmatpush1.bf16.msra.mxu0 %v2844
    %3376 = vmatprep.subr.bf16.mxu0 %v2848
    %3377 = vmatpush1.bf16.msra.mxu0 %v2847
    %3378 = vmatprep.subr.bf16.mxu0 %v2851
    %3379 = vmatpush1.bf16.msra.mxu0 %v2850
    %3380 = vmatprep.subr.bf16.mxu0 %v2854
    %3381 = vmatpush1.bf16.msra.mxu0 %v2853
    %3382 = vmatprep.subr.bf16.mxu0 %v2857
    %3383 = vmatpush1.bf16.msra.mxu0 %v2856
    %3384 = vmatprep.subr.bf16.mxu0 %v2860
    %3385 = vmatpush1.bf16.msra.mxu0 %v2859
    %3386 = vmatprep.subr.bf16.mxu0 %v2863
    %3387 = vmatpush1.bf16.msra.mxu0 %v2862
    %3388 = vmatprep.subr.bf16.mxu0 %v2866
    %3389 = vmatpush1.bf16.msra.mxu0 %v2865
    %3390 = vmatprep.subr.bf16.mxu0 %v2869
    %3391 = vmatpush1.bf16.msra.mxu0 %v2868
    %3392 = vmatprep.subr.bf16.mxu0 %v2872
    %3393 = vmatpush1.bf16.msra.mxu0 %v2871
    %3394 = vmatprep.subr.bf16.mxu0 %v2875
    %3395 = vmatpush1.bf16.msra.mxu0 %v2874
    %3396 = vmatprep.mubr.bf16.mxu0 %v1375
    %3397 = vmatmul.mubr.bf16.gmra.mrb[0].mxu0 %v1374
    %v3398 = vpop.f32.mrb[0].mxu0
    %v3399 = vadd.f32 %v3358, %v3398
    %v3400 = vpop.f32.mrb[0].mxu0
    %v3401 = vadd.f32 %v3360, %v3400
    %v3402 = vpop.f32.mrb[0].mxu0
    %v3403 = vpop.f32.mrb[0].mxu0
    %3404 = vdwg.mxu0
    %3405 = vmatprep.subr.bf16.mxu0 %v2878
    %3406 = vmatpush1.bf16.msra.mxu0 %v2877
    %3407 = vmatprep.subr.bf16.mxu0 %v2881
    %3408 = vmatpush1.bf16.msra.mxu0 %v2880
    %3409 = vmatprep.subr.bf16.mxu0 %v2884
    %3410 = vmatpush1.bf16.msra.mxu0 %v2883
    %3411 = vmatprep.subr.bf16.mxu0 %v2887
    %3412 = vmatpush1.bf16.msra.mxu0 %v2886
    %3413 = vmatprep.subr.bf16.mxu0 %v2890
    %3414 = vmatpush1.bf16.msra.mxu0 %v2889
    %3415 = vmatprep.subr.bf16.mxu0 %v2893
    %3416 = vmatpush1.bf16.msra.mxu0 %v2892
    %3417 = vmatprep.subr.bf16.mxu0 %v2896
    %3418 = vmatpush1.bf16.msra.mxu0 %v2895
    %3419 = vmatprep.subr.bf16.mxu0 %v2899
    %3420 = vmatpush1.bf16.msra.mxu0 %v2898
    %3421 = vmatprep.subr.bf16.mxu0 %v2902
    %3422 = vmatpush1.bf16.msra.mxu0 %v2901
    %3423 = vmatprep.subr.bf16.mxu0 %v2905
    %3424 = vmatpush1.bf16.msra.mxu0 %v2904
    %3425 = vmatprep.subr.bf16.mxu0 %v2908
    %3426 = vmatpush1.bf16.msra.mxu0 %v2907
    %3427 = vmatprep.subr.bf16.mxu0 %v2911
    %3428 = vmatpush1.bf16.msra.mxu0 %v2910
    %3429 = vmatprep.subr.bf16.mxu0 %v2914
    %3430 = vmatpush1.bf16.msra.mxu0 %v2913
    %3431 = vmatprep.subr.bf16.mxu0 %v2917
    %3432 = vmatpush1.bf16.msra.mxu0 %v2916
    %3433 = vmatprep.subr.bf16.mxu0 %v2920
    %3434 = vmatpush1.bf16.msra.mxu0 %v2919
    %3435 = vmatprep.subr.bf16.mxu0 %v2923
    %3436 = vmatpush1.bf16.msra.mxu0 %v2922
    %3437 = vmatprep.mubr.bf16.mxu0 %v1377
    %3438 = vmatmul.mubr.bf16.gmra.mrb[0].mxu0 %v1376
    %v3439 = vpop.f32.mrb[0].mxu0
    %v3440 = vadd.f32 %v3399, %v3439
    %v3441 = vpop.f32.mrb[0].mxu0
    %v3442 = vadd.f32 %v3401, %v3441
    %v3443 = vpop.f32.mrb[0].mxu0
    %v3444 = vpop.f32.mrb[0].mxu0
    %3445 = vdwg.mxu0
    %3446 = vmatprep.subr.bf16.mxu0 %v2926
    %3447 = vmatpush1.bf16.msra.mxu0 %v2925
    %3448 = vmatprep.subr.bf16.mxu0 %v2929
    %3449 = vmatpush1.bf16.msra.mxu0 %v2928
    %3450 = vmatprep.subr.bf16.mxu0 %v2932
    %3451 = vmatpush1.bf16.msra.mxu0 %v2931
    %3452 = vmatprep.subr.bf16.mxu0 %v2935
    %3453 = vmatpush1.bf16.msra.mxu0 %v2934
    %3454 = vmatprep.subr.bf16.mxu0 %v2938
    %3455 = vmatpush1.bf16.msra.mxu0 %v2937
    %3456 = vmatprep.subr.bf16.mxu0 %v2941
    %3457 = vmatpush1.bf16.msra.mxu0 %v2940
    %3458 = vmatprep.subr.bf16.mxu0 %v2944
    %3459 = vmatpush1.bf16.msra.mxu0 %v2943
    %3460 = vmatprep.subr.bf16.mxu0 %v2947
    %3461 = vmatpush1.bf16.msra.mxu0 %v2946
    %3462 = vmatprep.subr.bf16.mxu0 %v2950
    %3463 = vmatpush1.bf16.msra.mxu0 %v2949
    %3464 = vmatprep.subr.bf16.mxu0 %v2953
    %3465 = vmatpush1.bf16.msra.mxu0 %v2952
    %3466 = vmatprep.subr.bf16.mxu0 %v2956
    %3467 = vmatpush1.bf16.msra.mxu0 %v2955
    %3468 = vmatprep.subr.bf16.mxu0 %v2959
    %3469 = vmatpush1.bf16.msra.mxu0 %v2958
    %3470 = vmatprep.subr.bf16.mxu0 0
    %3471 = vmatpush1.bf16.msra.mxu0 0
    %3472 = vmatprep.subr.bf16.mxu0 0
    %3473 = vmatpush1.bf16.msra.mxu0 0
    %3474 = vmatprep.subr.bf16.mxu0 0
    %3475 = vmatpush1.bf16.msra.mxu0 0
    %3476 = vmatprep.subr.bf16.mxu0 0
    %3477 = vmatpush1.bf16.msra.mxu0 0
    %3478 = vmatprep.mubr.bf16.mxu0 %v3239
    %3479 = vmatmul.mubr.bf16.gmra.mrb[0].mxu0 %v1378
    %v3480 = vpop.f32.mrb[0].mxu0
    %v3481 = vadd.f32 %v3440, %v3480
    %v3482 = vpop.f32.mrb[0].mxu0
    %v3483 = vadd.f32 %v3442, %v3482
    %v3484 = vpop.f32.mrb[0].mxu0
    %v3485 = vpop.f32.mrb[0].mxu0
    %3486 = vdwg.mxu0
    %3487 = vmatprep.subr.bf16.mxu0 0
    %3488 = vmatpush1.bf16.msra.mxu0 %v2687
    %3489 = vmatprep.subr.bf16.mxu0 0
    %3490 = vmatpush1.bf16.msra.mxu0 %v2690
    %3491 = vmatprep.subr.bf16.mxu0 0
    %3492 = vmatpush1.bf16.msra.mxu0 %v2693
    %3493 = vmatprep.subr.bf16.mxu0 0
    %3494 = vmatpush1.bf16.msra.mxu0 %v2696
    %3495 = vmatprep.subr.bf16.mxu0 0
    %3496 = vmatpush1.bf16.msra.mxu0 %v2699
    %3497 = vmatprep.subr.bf16.mxu0 0
    %3498 = vmatpush1.bf16.msra.mxu0 %v2702
    %3499 = vmatprep.subr.bf16.mxu0 0
    %3500 = vmatpush1.bf16.msra.mxu0 %v2705
    %3501 = vmatprep.subr.bf16.mxu0 0
    %3502 = vmatpush1.bf16.msra.mxu0 %v2708
    %3503 = vmatprep.subr.bf16.mxu0 0
    %3504 = vmatpush1.bf16.msra.mxu0 %v2711
    %3505 = vmatprep.subr.bf16.mxu0 0
    %3506 = vmatpush1.bf16.msra.mxu0 %v2714
    %3507 = vmatprep.subr.bf16.mxu0 0
    %3508 = vmatpush1.bf16.msra.mxu0 %v2717
    %3509 = vmatprep.subr.bf16.mxu0 0
    %3510 = vmatpush1.bf16.msra.mxu0 %v2720
    %3511 = vmatprep.subr.bf16.mxu0 0
    %3512 = vmatpush1.bf16.msra.mxu0 %v2723
    %3513 = vmatprep.subr.bf16.mxu0 0
    %3514 = vmatpush1.bf16.msra.mxu0 %v2726
    %3515 = vmatprep.subr.bf16.mxu0 0
    %3516 = vmatpush1.bf16.msra.mxu0 %v2729
    %3517 = vmatprep.subr.bf16.mxu0 0
    %3518 = vmatpush1.bf16.msra.mxu0 %v2732
    %3519 = vmatprep.mubr.bf16.mxu0 %v1369
    %3520 = vmatmul.mubr.bf16.gmra.mrb[0].mxu0 %v1368
    %v3521 = vpop.f32.mrb[0].mxu0
    %v3522 = vadd.f32 %v1761, %v3521
    %v3523 = vpop.f32.mrb[0].mxu0
    %v3524 = vpop.f32.mrb[0].mxu0
    %v3525 = vpop.f32.mrb[0].mxu0
    %3526 = vdwg.mxu0
    %3527 = vmatprep.subr.bf16.mxu0 0
    %3528 = vmatpush1.bf16.msra.mxu0 %v2735
    %3529 = vmatprep.subr.bf16.mxu0 0
    %3530 = vmatpush1.bf16.msra.mxu0 %v2738
    %3531 = vmatprep.subr.bf16.mxu0 0
    %3532 = vmatpush1.bf16.msra.mxu0 %v2741
    %3533 = vmatprep.subr.bf16.mxu0 0
    %3534 = vmatpush1.bf16.msra.mxu0 %v2744
    %3535 = vmatprep.subr.bf16.mxu0 0
    %3536 = vmatpush1.bf16.msra.mxu0 %v2747
    %3537 = vmatprep.subr.bf16.mxu0 0
    %3538 = vmatpush1.bf16.msra.mxu0 %v2750
    %3539 = vmatprep.subr.bf16.mxu0 0
    %3540 = vmatpush1.bf16.msra.mxu0 %v2753
    %3541 = vmatprep.subr.bf16.mxu0 0
    %3542 = vmatpush1.bf16.msra.mxu0 %v2756
    %3543 = vmatprep.subr.bf16.mxu0 0
    %3544 = vmatpush1.bf16.msra.mxu0 %v2759
    %3545 = vmatprep.subr.bf16.mxu0 0
    %3546 = vmatpush1.bf16.msra.mxu0 %v2762
    %3547 = vmatprep.subr.bf16.mxu0 0
    %3548 = vmatpush1.bf16.msra.mxu0 %v2765
    %3549 = vmatprep.subr.bf16.mxu0 0
    %3550 = vmatpush1.bf16.msra.mxu0 %v2768
    %3551 = vmatprep.subr.bf16.mxu0 0
    %3552 = vmatpush1.bf16.msra.mxu0 %v2771
    %3553 = vmatprep.subr.bf16.mxu0 0
    %3554 = vmatpush1.bf16.msra.mxu0 %v2774
    %3555 = vmatprep.subr.bf16.mxu0 0
    %3556 = vmatpush1.bf16.msra.mxu0 %v2777
    %3557 = vmatprep.subr.bf16.mxu0 0
    %3558 = vmatpush1.bf16.msra.mxu0 %v2780
    %3559 = vmatprep.mubr.bf16.mxu0 %v1371
    %3560 = vmatmul.mubr.bf16.gmra.mrb[0].mxu0 %v1370
    %v3561 = vpop.f32.mrb[0].mxu0
    %v3562 = vadd.f32 %v3522, %v3561
    %v3563 = vpop.f32.mrb[0].mxu0
    %v3564 = vpop.f32.mrb[0].mxu0
    %v3565 = vpop.f32.mrb[0].mxu0
    %3566 = vdwg.mxu0
    %3567 = vmatprep.subr.bf16.mxu0 0
    %3568 = vmatpush1.bf16.msra.mxu0 %v2783
    %3569 = vmatprep.subr.bf16.mxu0 0
    %3570 = vmatpush1.bf16.msra.mxu0 %v2786
    %3571 = vmatprep.subr.bf16.mxu0 0
    %3572 = vmatpush1.bf16.msra.mxu0 %v2789
    %3573 = vmatprep.subr.bf16.mxu0 0
    %3574 = vmatpush1.bf16.msra.mxu0 %v2792
    %3575 = vmatprep.subr.bf16.mxu0 0
    %3576 = vmatpush1.bf16.msra.mxu0 %v2795
    %3577 = vmatprep.subr.bf16.mxu0 0
    %3578 = vmatpush1.bf16.msra.mxu0 %v2798
    %3579 = vmatprep.subr.bf16.mxu0 0
    %3580 = vmatpush1.bf16.msra.mxu0 %v2801
    %3581 = vmatprep.subr.bf16.mxu0 0
    %3582 = vmatpush1.bf16.msra.mxu0 %v2804
    %3583 = vmatprep.subr.bf16.mxu0 0
    %3584 = vmatpush1.bf16.msra.mxu0 %v2807
    %3585 = vmatprep.subr.bf16.mxu0 0
    %3586 = vmatpush1.bf16.msra.mxu0 %v2810
    %3587 = vmatprep.subr.bf16.mxu0 0
    %3588 = vmatpush1.bf16.msra.mxu0 %v2813
    %3589 = vmatprep.subr.bf16.mxu0 0
    %3590 = vmatpush1.bf16.msra.mxu0 %v2816
    %3591 = vmatprep.subr.bf16.mxu0 0
    %3592 = vmatpush1.bf16.msra.mxu0 %v2819
    %3593 = vmatprep.subr.bf16.mxu0 0
    %3594 = vmatpush1.bf16.msra.mxu0 %v2822
    %3595 = vmatprep.subr.bf16.mxu0 0
    %3596 = vmatpush1.bf16.msra.mxu0 %v2825
    %3597 = vmatprep.subr.bf16.mxu0 0
    %3598 = vmatpush1.bf16.msra.mxu0 %v2828
    %3599 = vmatprep.mubr.bf16.mxu0 %v1373
    %3600 = vmatmul.mubr.bf16.gmra.mrb[0].mxu0 %v1372
    %v3601 = vpop.f32.mrb[0].mxu0
    %v3602 = vadd.f32 %v3562, %v3601
    %v3603 = vpop.f32.mrb[0].mxu0
    %v3604 = vpop.f32.mrb[0].mxu0
    %v3605 = vpop.f32.mrb[0].mxu0
    %3606 = vdwg.mxu0
    %3607 = vmatprep.subr.bf16.mxu0 0
    %3608 = vmatpush1.bf16.msra.mxu0 %v2831
    %3609 = vmatprep.subr.bf16.mxu0 0
    %3610 = vmatpush1.bf16.msra.mxu0 %v2834
    %3611 = vmatprep.subr.bf16.mxu0 0
    %3612 = vmatpush1.bf16.msra.mxu0 %v2837
    %3613 = vmatprep.subr.bf16.mxu0 0
    %3614 = vmatpush1.bf16.msra.mxu0 %v2840
    %3615 = vmatprep.subr.bf16.mxu0 0
    %3616 = vmatpush1.bf16.msra.mxu0 %v2843
    %3617 = vmatprep.subr.bf16.mxu0 0
    %3618 = vmatpush1.bf16.msra.mxu0 %v2846
    %3619 = vmatprep.subr.bf16.mxu0 0
    %3620 = vmatpush1.bf16.msra.mxu0 %v2849
    %3621 = vmatprep.subr.bf16.mxu0 0
    %3622 = vmatpush1.bf16.msra.mxu0 %v2852
    %3623 = vmatprep.subr.bf16.mxu0 0
    %3624 = vmatpush1.bf16.msra.mxu0 %v2855
    %3625 = vmatprep.subr.bf16.mxu0 0
    %3626 = vmatpush1.bf16.msra.mxu0 %v2858
    %3627 = vmatprep.subr.bf16.mxu0 0
    %3628 = vmatpush1.bf16.msra.mxu0 %v2861
    %3629 = vmatprep.subr.bf16.mxu0 0
    %3630 = vmatpush1.bf16.msra.mxu0 %v2864
    %3631 = vmatprep.subr.bf16.mxu0 0
    %3632 = vmatpush1.bf16.msra.mxu0 %v2867
    %3633 = vmatprep.subr.bf16.mxu0 0
    %3634 = vmatpush1.bf16.msra.mxu0 %v2870
    %3635 = vmatprep.subr.bf16.mxu0 0
    %3636 = vmatpush1.bf16.msra.mxu0 %v2873
    %3637 = vmatprep.subr.bf16.mxu0 0
    %3638 = vmatpush1.bf16.msra.mxu0 %v2876
    %3639 = vmatprep.mubr.bf16.mxu0 %v1375
    %3640 = vmatmul.mubr.bf16.gmra.mrb[0].mxu0 %v1374
    %v3641 = vpop.f32.mrb[0].mxu0
    %v3642 = vadd.f32 %v3602, %v3641
    %v3643 = vpop.f32.mrb[0].mxu0
    %v3644 = vpop.f32.mrb[0].mxu0
    %v3645 = vpop.f32.mrb[0].mxu0
    %3646 = vdwg.mxu0
    %3647 = vmatprep.subr.bf16.mxu0 0
    %3648 = vmatpush1.bf16.msra.mxu0 %v2879
    %3649 = vmatprep.subr.bf16.mxu0 0
    %3650 = vmatpush1.bf16.msra.mxu0 %v2882
    %3651 = vmatprep.subr.bf16.mxu0 0
    %3652 = vmatpush1.bf16.msra.mxu0 %v2885
    %3653 = vmatprep.subr.bf16.mxu0 0
    %3654 = vmatpush1.bf16.msra.mxu0 %v2888
    %3655 = vmatprep.subr.bf16.mxu0 0
    %3656 = vmatpush1.bf16.msra.mxu0 %v2891
    %3657 = vmatprep.subr.bf16.mxu0 0
    %3658 = vmatpush1.bf16.msra.mxu0 %v2894
    %3659 = vmatprep.subr.bf16.mxu0 0
    %3660 = vmatpush1.bf16.msra.mxu0 %v2897
    %3661 = vmatprep.subr.bf16.mxu0 0
    %3662 = vmatpush1.bf16.msra.mxu0 %v2900
    %3663 = vmatprep.subr.bf16.mxu0 0
    %3664 = vmatpush1.bf16.msra.mxu0 %v2903
    %3665 = vmatprep.subr.bf16.mxu0 0
    %3666 = vmatpush1.bf16.msra.mxu0 %v2906
    %3667 = vmatprep.subr.bf16.mxu0 0
    %3668 = vmatpush1.bf16.msra.mxu0 %v2909
    %3669 = vmatprep.subr.bf16.mxu0 0
    %3670 = vmatpush1.bf16.msra.mxu0 %v2912
    %3671 = vmatprep.subr.bf16.mxu0 0
    %3672 = vmatpush1.bf16.msra.mxu0 %v2915
    %3673 = vmatprep.subr.bf16.mxu0 0
    %3674 = vmatpush1.bf16.msra.mxu0 %v2918
    %3675 = vmatprep.subr.bf16.mxu0 0
    %3676 = vmatpush1.bf16.msra.mxu0 %v2921
    %3677 = vmatprep.subr.bf16.mxu0 0
    %3678 = vmatpush1.bf16.msra.mxu0 %v2924
    %3679 = vmatprep.mubr.bf16.mxu0 %v1377
    %3680 = vmatmul.mubr.bf16.gmra.mrb[0].mxu0 %v1376
    %v3681 = vpop.f32.mrb[0].mxu0
    %v3682 = vadd.f32 %v3642, %v3681
    %v3683 = vpop.f32.mrb[0].mxu0
    %v3684 = vpop.f32.mrb[0].mxu0
    %v3685 = vpop.f32.mrb[0].mxu0
    %3686 = vdwg.mxu0
    %3687 = vmatprep.subr.bf16.mxu0 0
    %3688 = vmatpush1.bf16.msra.mxu0 %v2927
    %3689 = vmatprep.subr.bf16.mxu0 0
    %3690 = vmatpush1.bf16.msra.mxu0 %v2930
    %3691 = vmatprep.subr.bf16.mxu0 0
    %3692 = vmatpush1.bf16.msra.mxu0 %v2933
    %3693 = vmatprep.subr.bf16.mxu0 0
    %3694 = vmatpush1.bf16.msra.mxu0 %v2936
    %3695 = vmatprep.subr.bf16.mxu0 0
    %3696 = vmatpush1.bf16.msra.mxu0 %v2939
    %3697 = vmatprep.subr.bf16.mxu0 0
    %3698 = vmatpush1.bf16.msra.mxu0 %v2942
    %3699 = vmatprep.subr.bf16.mxu0 0
    %3700 = vmatpush1.bf16.msra.mxu0 %v2945
    %3701 = vmatprep.subr.bf16.mxu0 0
    %3702 = vmatpush1.bf16.msra.mxu0 %v2948
    %3703 = vmatprep.subr.bf16.mxu0 0
    %3704 = vmatpush1.bf16.msra.mxu0 %v2951
    %3705 = vmatprep.subr.bf16.mxu0 0
    %3706 = vmatpush1.bf16.msra.mxu0 %v2954
    %3707 = vmatprep.subr.bf16.mxu0 0
    %3708 = vmatpush1.bf16.msra.mxu0 %v2957
    %3709 = vmatprep.subr.bf16.mxu0 0
    %3710 = vmatpush1.bf16.msra.mxu0 %v2960
    %3711 = vmatprep.subr.bf16.mxu0 0
    %3712 = vmatpush1.bf16.msra.mxu0 0
    %3713 = vmatprep.subr.bf16.mxu0 0
    %3714 = vmatpush1.bf16.msra.mxu0 0
    %3715 = vmatprep.subr.bf16.mxu0 0
    %3716 = vmatpush1.bf16.msra.mxu0 0
    %3717 = vmatprep.subr.bf16.mxu0 0
    %3718 = vmatpush1.bf16.msra.mxu0 0
    %3719 = vmatprep.mubr.bf16.mxu0 %v3239
    %3720 = vmatmul.mubr.bf16.gmra.mrb[0].mxu0 %v1378
    %v3721 = vpop.f32.mrb[0].mxu0
    %v3722 = vadd.f32 %v3682, %v3721
    %v3723 = vpop.f32.mrb[0].mxu0
    %v3724 = vpop.f32.mrb[0].mxu0
    %v3725 = vpop.f32.mrb[0].mxu0
    %3726 = vdwg.mxu0
    %v3727 = vmax.f32 %v3481, 0.0
    %v3728 = vmax.f32 %v3483, 0.0
    %v3729 = vmax.f32 %v3722, 0.0
    %v3730 = vpack.c.bf16 %v3727, %v3727
    %v3731 = vpack.c.bf16 %v3728, %v3728
    %v3732 = vpack.c.bf16 %v3729, %v3729
    %v3733 = vld [vmem:[%s5] sm:$0xf]
    %v3734 = vld [vmem:[%s5 + $0x4] sm:$0xf]
    %v3735 = vld [vmem:[%s5 + $0x8] sm:$0xf]
    %v3736 = vld [vmem:[%s5 + $0xc] sm:$0xf]
    %v3737 = vld [vmem:[%s5 + $0x10] sm:$0xf]
    %v3738 = vld [vmem:[%s5 + $0x14] sm:$0xf]
    %v3739 = vld [vmem:[%s5 + $0x18] sm:$0xf]
    %v3740 = vld [vmem:[%s5 + $0x1c] sm:$0xf]
    %v3741 = vld [vmem:[%s5 + $0x20] sm:$0xf]
    %v3742 = vld [vmem:[%s5 + $0x24] sm:$0xf]
    %v3743 = vld [vmem:[%s5 + $0x28] sm:$0xf]
    %v3744 = vld [vmem:[%s5 + $0x2c] sm:$0xf]
    %v3745 = vld [vmem:[%s5 + $0x30] sm:$0xf]
    %v3746 = vld [vmem:[%s5 + $0x34] sm:$0xf]
    %v3747 = vld [vmem:[%s5 + $0x38] sm:$0xf]
    %v3748 = vld [vmem:[%s5 + $0x3c] sm:$0xf]
    %v3749 = vld [vmem:[%s5 + $0x40] sm:$0xf]
    %v3750 = vld [vmem:[%s5 + $0x44] sm:$0xf]
    %v3751 = vld [vmem:[%s5 + $0x48] sm:$0xf]
    %v3752 = vld [vmem:[%s5 + $0x4c] sm:$0xf]
    %v3753 = vld [vmem:[%s5 + $0x50] sm:$0xf]
    %v3754 = vld [vmem:[%s5 + $0x54] sm:$0xf]
    %v3755 = vld [vmem:[%s5 + $0x58] sm:$0xf]
    %v3756 = vld [vmem:[%s5 + $0x5c] sm:$0xf]
    %v3757 = vld [vmem:[%s5 + $0x60] sm:$0xf]
    %v3758 = vld [vmem:[%s5 + $0x64] sm:$0xf]
    %v3759 = vld [vmem:[%s5 + $0x68] sm:$0xf]
    %v3760 = vld [vmem:[%s5 + $0x6c] sm:$0xf]
    %v3761 = vld [vmem:[%s5 + $0x70] sm:$0xf]
    %v3762 = vld [vmem:[%s5 + $0x74] sm:$0xf]
    %v3763 = vld [vmem:[%s5 + $0x78] sm:$0xf]
    %v3764 = vld [vmem:[%s5 + $0x7c] sm:$0xf]
    %v3765 = vld [vmem:[%s5 + $0x80] sm:$0xf]
    %v3766 = vld [vmem:[%s5 + $0x84] sm:$0xf]
    %v3767 = vld [vmem:[%s5 + $0x88] sm:$0xf]
    %v3768 = vld [vmem:[%s5 + $0x8c] sm:$0xf]
    %v3769 = vld [vmem:[%s5 + $0x90] sm:$0xf]
    %v3770 = vld [vmem:[%s5 + $0x94] sm:$0xf]
    %v3771 = vld [vmem:[%s5 + $0x98] sm:$0xf]
    %v3772 = vld [vmem:[%s5 + $0x9c] sm:$0xf]
    %v3773 = vld [vmem:[%s5 + $0xa0] sm:$0xf]
    %v3774 = vld [vmem:[%s5 + $0xa4] sm:$0xf]
    %v3775 = vld [vmem:[%s5 + $0xa8] sm:$0xf]
    %v3776 = vld [vmem:[%s5 + $0xac] sm:$0xf]
    %v3777 = vld [vmem:[%s5 + $0xb0] sm:$0xf]
    %v3778 = vld [vmem:[%s5 + $0xb4] sm:$0xf]
    %v3779 = vld [vmem:[#allocation12] sm:$0x1]
    %v3781 = vlaneseq
    %v3782 = vshrl.u32 %v3781, 7
    %v3783 = vsub.s32 0, %v3782
    %v3784 = vrot.slane %v3779, %v3783
    %v3832 = vunpack.c.l.b16 %v3733
    %v3833 = vunpack.c.l.b16 %v3734
    %v3834 = vunpack.c.l.b16 %v3735
    %v3835 = vunpack.c.l.b16 %v3736
    %v3836 = vunpack.c.l.b16 %v3737
    %v3837 = vunpack.c.l.b16 %v3738
    %v3838 = vunpack.c.l.b16 %v3739
    %v3839 = vunpack.c.l.b16 %v3740
    %v3840 = vunpack.c.l.b16 %v3741
    %v3841 = vunpack.c.l.b16 %v3742
    %v3842 = vunpack.c.l.b16 %v3743
    %v3843 = vunpack.c.l.b16 %v3744
    %v3844 = vunpack.c.l.b16 %v3745
    %v3845 = vunpack.c.l.b16 %v3746
    %v3846 = vunpack.c.l.b16 %v3747
    %v3847 = vunpack.c.l.b16 %v3748
    %v3848 = vunpack.c.l.b16 %v3749
    %v3849 = vunpack.c.l.b16 %v3750
    %v3850 = vunpack.c.l.b16 %v3751
    %v3851 = vunpack.c.l.b16 %v3752
    %v3852 = vunpack.c.l.b16 %v3753
    %v3853 = vunpack.c.l.b16 %v3754
    %v3854 = vunpack.c.l.b16 %v3755
    %v3855 = vunpack.c.l.b16 %v3756
    %v3856 = vunpack.c.l.b16 %v3757
    %v3857 = vunpack.c.l.b16 %v3758
    %v3858 = vunpack.c.l.b16 %v3759
    %v3859 = vunpack.c.l.b16 %v3760
    %v3860 = vunpack.c.l.b16 %v3761
    %v3861 = vunpack.c.l.b16 %v3762
    %v3862 = vunpack.c.l.b16 %v3763
    %v3863 = vunpack.c.l.b16 %v3764
    %v3864 = vunpack.c.l.b16 %v3765
    %v3865 = vunpack.c.l.b16 %v3766
    %v3866 = vunpack.c.l.b16 %v3767
    %v3867 = vunpack.c.l.b16 %v3768
    %v3868 = vunpack.c.l.b16 %v3769
    %v3869 = vunpack.c.l.b16 %v3770
    %v3870 = vunpack.c.l.b16 %v3771
    %v3871 = vunpack.c.l.b16 %v3772
    %v3872 = vunpack.c.l.b16 %v3773
    %v3873 = vunpack.c.l.b16 %v3774
    %v3874 = vunpack.c.l.b16 %v3775
    %v3875 = vunpack.c.l.b16 %v3776
    %v3876 = vunpack.c.l.b16 %v3777
    %v3877 = vunpack.c.l.b16 %v3778
    %v3878 = vpack.c.b16 %v3833, %v3832
    %v3879 = vpack.c.b16 %v3835, %v3834
    %v3880 = vpack.c.b16 %v3837, %v3836
    %v3881 = vpack.c.b16 %v3839, %v3838
    %v3882 = vpack.c.b16 %v3841, %v3840
    %v3883 = vpack.c.b16 %v3843, %v3842
    %v3884 = vpack.c.b16 %v3845, %v3844
    %v3885 = vpack.c.b16 %v3847, %v3846
    %v3886 = vpack.c.b16 %v3849, %v3848
    %v3887 = vpack.c.b16 %v3851, %v3850
    %v3888 = vpack.c.b16 %v3853, %v3852
    %v3889 = vpack.c.b16 %v3855, %v3854
    %v3890 = vpack.c.b16 %v3857, %v3856
    %v3891 = vpack.c.b16 %v3859, %v3858
    %v3892 = vpack.c.b16 %v3861, %v3860
    %v3893 = vpack.c.b16 %v3863, %v3862
    %v3894 = vpack.c.b16 %v3865, %v3864
    %v3895 = vpack.c.b16 %v3867, %v3866
    %v3896 = vpack.c.b16 %v3869, %v3868
    %v3897 = vpack.c.b16 %v3871, %v3870
    %v3898 = vpack.c.b16 %v3873, %v3872
    %v3899 = vpack.c.b16 %v3875, %v3874
    %v3900 = vpack.c.b16 %v3877, %v3876
    %vm3924 = vcmask 916480
    %v3926 = vsel %vm3924, %v3732, 0
    %3928 = vmatprep.subr.bf16.mxu0 0
    %3929 = vmatpush1.bf16.msra.mxu0 %v3878
    %3930 = vmatprep.subr.bf16.mxu0 0
    %3931 = vmatpush1.bf16.msra.mxu0 %v3879
    %3932 = vmatprep.subr.bf16.mxu0 0
    %3933 = vmatpush1.bf16.msra.mxu0 %v3880
    %3934 = vmatprep.subr.bf16.mxu0 0
    %3935 = vmatpush1.bf16.msra.mxu0 %v3881
    %3936 = vmatprep.subr.bf16.mxu0 0
    %3937 = vmatpush1.bf16.msra.mxu0 %v3882
    %3938 = vmatprep.subr.bf16.mxu0 0
    %3939 = vmatpush1.bf16.msra.mxu0 %v3883
    %3940 = vmatprep.subr.bf16.mxu0 0
    %3941 = vmatpush1.bf16.msra.mxu0 %v3884
    %3942 = vmatprep.subr.bf16.mxu0 0
    %3943 = vmatpush1.bf16.msra.mxu0 %v3885
    %3944 = vmatprep.subr.bf16.mxu0 0
    %3945 = vmatpush1.bf16.msra.mxu0 %v3886
    %3946 = vmatprep.subr.bf16.mxu0 0
    %3947 = vmatpush1.bf16.msra.mxu0 %v3887
    %3948 = vmatprep.subr.bf16.mxu0 0
    %3949 = vmatpush1.bf16.msra.mxu0 %v3888
    %3950 = vmatprep.subr.bf16.mxu0 0
    %3951 = vmatpush1.bf16.msra.mxu0 %v3889
    %3952 = vmatprep.subr.bf16.mxu0 0
    %3953 = vmatpush1.bf16.msra.mxu0 %v3890
    %3954 = vmatprep.subr.bf16.mxu0 0
    %3955 = vmatpush1.bf16.msra.mxu0 %v3891
    %3956 = vmatprep.subr.bf16.mxu0 0
    %3957 = vmatpush1.bf16.msra.mxu0 %v3892
    %3958 = vmatprep.subr.bf16.mxu0 0
    %3959 = vmatpush1.bf16.msra.mxu0 %v3893
    %3960 = vmatprep.mubr.bf16.mxu0 %v3731
    %3961 = vmatmul.mubr.bf16.gmra.mrb[0].mxu0 %v3730
    %v3962 = vpop.f32.mrb[0].mxu0
    %v3963 = vadd.f32 %v3784, %v3962
    %v3964 = vpop.f32.mrb[0].mxu0
    %v3965 = vpop.f32.mrb[0].mxu0
    %v3966 = vpop.f32.mrb[0].mxu0
    %3967 = vdwg.mxu0
    %3968 = vmatprep.subr.bf16.mxu0 0
    %3969 = vmatpush1.bf16.msra.mxu0 %v3894
    %3970 = vmatprep.subr.bf16.mxu0 0
    %3971 = vmatpush1.bf16.msra.mxu0 %v3895
    %3972 = vmatprep.subr.bf16.mxu0 0
    %3973 = vmatpush1.bf16.msra.mxu0 %v3896
    %3974 = vmatprep.subr.bf16.mxu0 0
    %3975 = vmatpush1.bf16.msra.mxu0 %v3897
    %3976 = vmatprep.subr.bf16.mxu0 0
    %3977 = vmatpush1.bf16.msra.mxu0 %v3898
    %3978 = vmatprep.subr.bf16.mxu0 0
    %3979 = vmatpush1.bf16.msra.mxu0 %v3899
    %3980 = vmatprep.subr.bf16.mxu0 0
    %3981 = vmatpush1.bf16.msra.mxu0 %v3900
    %3982 = vmatprep.subr.bf16.mxu0 0
    %3983 = vmatpush1.bf16.msra.mxu0 0
    %3984 = vmatprep.subr.bf16.mxu0 0
    %3985 = vmatpush1.bf16.msra.mxu0 0
    %3986 = vmatprep.subr.bf16.mxu0 0
    %3987 = vmatpush1.bf16.msra.mxu0 0
    %3988 = vmatprep.subr.bf16.mxu0 0
    %3989 = vmatpush1.bf16.msra.mxu0 0
    %3990 = vmatprep.subr.bf16.mxu0 0
    %3991 = vmatpush1.bf16.msra.mxu0 0
    %3992 = vmatprep.subr.bf16.mxu0 0
    %3993 = vmatpush1.bf16.msra.mxu0 0
    %3994 = vmatprep.subr.bf16.mxu0 0
    %3995 = vmatpush1.bf16.msra.mxu0 0
    %3996 = vmatprep.subr.bf16.mxu0 0
    %3997 = vmatpush1.bf16.msra.mxu0 0
    %3998 = vmatprep.subr.bf16.mxu0 0
    %3999 = vmatpush1.bf16.msra.mxu0 0
    %4000 = vmatprep.mubr.bf16.mxu0 0
    %4001 = vmatmul.mubr.bf16.gmra.mrb[0].mxu0 %v3926
    %v4002 = vpop.f32.mrb[0].mxu0
    %v4003 = vadd.f32 %v3963, %v4002
    %v4004 = vpop.f32.mrb[0].mxu0
    %v4005 = vpop.f32.mrb[0].mxu0
    %v4006 = vpop.f32.mrb[0].mxu0
    %4007 = vdwg.mxu0
    %v4008 = vmax.f32 %v4003, 0.0
    %v4009 = vpack.c.bf16 %v4008, %v4008
    %v4010 = vld [vmem:[%s7] sm:$0xf]
    %v4011 = vld [vmem:[%s7 + $0x4] sm:$0xf]
    %v4012 = vld [vmem:[%s7 + $0x8] sm:$0xf]
    %v4013 = vld [vmem:[%s7 + $0xc] sm:$0xf]
    %v4014 = vld [vmem:[%s7 + $0x10] sm:$0xf]
    %v4015 = vld [vmem:[%s7 + $0x14] sm:$0x3]
    %v4016 = vld [vmem:[#allocation14] sm:$0x1]
    %v4018 = vlaneseq
    %v4019 = vshrl.u32 %v4018, 7
    %v4020 = vsub.s32 0, %v4019
    %v4021 = vrot.slane %v4016, %v4020
    %v4029 = vunpack.c.l.b16 %v4010
    %v4030 = vunpack.c.l.b16 %v4011
    %v4031 = vunpack.c.l.b16 %v4012
    %v4032 = vunpack.c.l.b16 %v4013
    %v4033 = vunpack.c.l.b16 %v4014
    %v4034 = vunpack.c.l.b16 %v4015
    %v4035 = vpack.c.b16 %v4030, %v4029
    %v4036 = vpack.c.b16 %v4032, %v4031
    %v4037 = vpack.c.b16 %v4034, %v4033
    %vm4040 = vcmask 359424
    %v4042 = vsel %vm4040, %v4009, 0
    %vm4044 = vcmask 1045504
    %v4046 = vsel %vm4044, %v4037, 0
    %4048 = vmatprep.subr.bf16.mxu0 0
    %4049 = vmatpush1.bf16.msra.mxu0 %v4035
    %4050 = vmatprep.subr.bf16.mxu0 0
    %4051 = vmatpush1.bf16.msra.mxu0 %v4036
    %4052 = vmatprep.subr.bf16.mxu0 0
    %4053 = vmatpush1.bf16.msra.mxu0 %v4046
    %4054 = vmatprep.subr.bf16.mxu0 0
    %4055 = vmatpush1.bf16.msra.mxu0 0
    %4056 = vmatprep.subr.bf16.mxu0 0
    %4057 = vmatpush1.bf16.msra.mxu0 0
    %4058 = vmatprep.subr.bf16.mxu0 0
    %4059 = vmatpush1.bf16.msra.mxu0 0
    %4060 = vmatprep.subr.bf16.mxu0 0
    %4061 = vmatpush1.bf16.msra.mxu0 0
    %4062 = vmatprep.subr.bf16.mxu0 0
    %4063 = vmatpush1.bf16.msra.mxu0 0
    %4064 = vmatprep.subr.bf16.mxu0 0
    %4065 = vmatpush1.bf16.msra.mxu0 0
    %4066 = vmatprep.subr.bf16.mxu0 0
    %4067 = vmatpush1.bf16.msra.mxu0 0
    %4068 = vmatprep.subr.bf16.mxu0 0
    %4069 = vmatpush1.bf16.msra.mxu0 0
    %4070 = vmatprep.subr.bf16.mxu0 0
    %4071 = vmatpush1.bf16.msra.mxu0 0
    %4072 = vmatprep.subr.bf16.mxu0 0
    %4073 = vmatpush1.bf16.msra.mxu0 0
    %4074 = vmatprep.subr.bf16.mxu0 0
    %4075 = vmatpush1.bf16.msra.mxu0 0
    %4076 = vmatprep.subr.bf16.mxu0 0
    %4077 = vmatpush1.bf16.msra.mxu0 0
    %4078 = vmatprep.subr.bf16.mxu0 0
    %4079 = vmatpush1.bf16.msra.mxu0 0
    %4080 = vmatprep.mubr.bf16.mxu0 0
    %4081 = vmatmul.mubr.bf16.gmra.mrb[0].mxu0 %v4042
    %v4082 = vpop.f32.mrb[0].mxu0
    %v4083 = vadd.f32 %v4021, %v4082
    %v4084 = vpop.f32.mrb[0].mxu0
    %v4085 = vpop.f32.mrb[0].mxu0
    %v4086 = vpop.f32.mrb[0].mxu0
    %4087 = vdwg.mxu0
    %v4088 = vld [vmem:[#allocation15] sm:$0x1]
    %v4090 = vlaneseq
    %v4091 = vshrl.u32 %v4090, 7
    %v4092 = vsub.s32 0, %v4091
    %v4093 = vrot.slane %v4088, %v4092
    %v4095 = vmul.f32 %v356, %v4093
    %v4096 = vld [vmem:[#allocation17] sm:$0x1]
    %v4098 = vlaneseq
    %v4099 = vshrl.u32 %v4098, 7
    %v4100 = vsub.s32 0, %v4099
    %v4101 = vrot.slane %v4096, %v4100
    %v4103 = vadd.f32 %v4095, %v4101
    %4105 = vrot.lane.b32.xlu0 %v4103, 64
    %v4106 = vpop.permute.xlu0 %4105
    %4109 = vrot.lane.b32.xlu0 %v4083, 82
    %v4110 = vpop.permute.xlu0 %4109
    %v4112 = vsel %vm3237, 0.0, %v4106
    %vm4113 = vcmask 670720
    %v4114 = vsel %vm4113, %v4112, %v4110
    %vm4115 = vcmask 769024
    %v4116 = vsel %vm4115, %v4114, 0.0
    %4117 = vst [vmem:[#allocation2] sm:$0xff] %v4116
    %v4118 = vld [vmem:[#allocation2] sm:$0xff]
    %v4119 = vpack.c.bf16 %v4118, %v4118
    %v4120 = vld [vmem:[%s11] sm:$0xf]
    %v4121 = vld [vmem:[%s11 + $0x4] sm:$0xf]
    %v4122 = vld [vmem:[%s11 + $0x8] sm:$0xf]
    %v4123 = vld [vmem:[%s11 + $0xc] sm:$0xf]
    %v4124 = vld [vmem:[%s11 + $0x10] sm:$0xf]
    %v4125 = vld [vmem:[%s11 + $0x14] sm:$0xf]
    %v4126 = vld [vmem:[%s11 + $0x18] sm:$0xf]
    %v4127 = vld [vmem:[%s11 + $0x1c] sm:$0xf]
    %v4128 = vld [vmem:[%s11 + $0x20] sm:$0xf]
    %v4129 = vld [vmem:[%s11 + $0x24] sm:$0xf]
    %v4130 = vld [vmem:[%s11 + $0x28] sm:$0xf]
    %v4131 = vld [vmem:[%s11 + $0x2c] sm:$0xf]
    %v4132 = vld [vmem:[%s11 + $0x30] sm:$0xf]
    %v4133 = vld [vmem:[%s11 + $0x34] sm:$0xf]
    %v4134 = vld [vmem:[%s11 + $0x38] sm:$0xf]
    %v4135 = vld [vmem:[%s11 + $0x3c] sm:$0xf]
    %v4136 = vld [vmem:[#allocation18] sm:$0x1]
    %v4138 = vlaneseq
    %v4139 = vshrl.u32 %v4138, 7
    %v4140 = vsub.s32 0, %v4139
    %v4141 = vrot.slane %v4136, %v4140
    %v4159 = vunpack.c.l.b16 %v4120
    %v4160 = vunpack.c.l.b16 %v4121
    %v4161 = vunpack.c.l.b16 %v4122
    %v4162 = vunpack.c.l.b16 %v4123
    %v4163 = vunpack.c.l.b16 %v4124
    %v4164 = vunpack.c.l.b16 %v4125
    %v4165 = vunpack.c.l.b16 %v4126
    %v4166 = vunpack.c.l.b16 %v4127
    %v4167 = vunpack.c.l.b16 %v4128
    %v4168 = vunpack.c.l.b16 %v4129
    %v4169 = vunpack.c.l.b16 %v4130
    %v4170 = vunpack.c.l.b16 %v4131
    %v4171 = vunpack.c.l.b16 %v4132
    %v4172 = vunpack.c.l.b16 %v4133
    %v4173 = vunpack.c.l.b16 %v4134
    %v4174 = vunpack.c.l.b16 %v4135
    %v4175 = vpack.c.b16 %v4160, %v4159
    %v4176 = vpack.c.b16 %v4162, %v4161
    %v4177 = vpack.c.b16 %v4164, %v4163
    %v4178 = vpack.c.b16 %v4166, %v4165
    %v4179 = vpack.c.b16 %v4168, %v4167
    %v4180 = vpack.c.b16 %v4170, %v4169
    %v4181 = vpack.c.b16 %v4172, %v4171
    %v4182 = vpack.c.b16 %v4174, %v4173
    %4191 = vmatprep.subr.bf16.mxu0 0
    %4192 = vmatpush1.bf16.msra.mxu0 %v4175
    %4193 = vmatprep.subr.bf16.mxu0 0
    %4194 = vmatpush1.bf16.msra.mxu0 %v4176
    %4195 = vmatprep.subr.bf16.mxu0 0
    %4196 = vmatpush1.bf16.msra.mxu0 %v4177
    %4197 = vmatprep.subr.bf16.mxu0 0
    %4198 = vmatpush1.bf16.msra.mxu0 %v4178
    %4199 = vmatprep.subr.bf16.mxu0 0
    %4200 = vmatpush1.bf16.msra.mxu0 %v4179
    %4201 = vmatprep.subr.bf16.mxu0 0
    %4202 = vmatpush1.bf16.msra.mxu0 %v4180
    %4203 = vmatprep.subr.bf16.mxu0 0
    %4204 = vmatpush1.bf16.msra.mxu0 %v4181
    %4205 = vmatprep.subr.bf16.mxu0 0
    %4206 = vmatpush1.bf16.msra.mxu0 %v4182
    %4207 = vmatprep.subr.bf16.mxu0 0
    %4208 = vmatpush1.bf16.msra.mxu0 0
    %4209 = vmatprep.subr.bf16.mxu0 0
    %4210 = vmatpush1.bf16.msra.mxu0 0
    %4211 = vmatprep.subr.bf16.mxu0 0
    %4212 = vmatpush1.bf16.msra.mxu0 0
    %4213 = vmatprep.subr.bf16.mxu0 0
    %4214 = vmatpush1.bf16.msra.mxu0 0
    %4215 = vmatprep.subr.bf16.mxu0 0
    %4216 = vmatpush1.bf16.msra.mxu0 0
    %4217 = vmatprep.subr.bf16.mxu0 0
    %4218 = vmatpush1.bf16.msra.mxu0 0
    %4219 = vmatprep.subr.bf16.mxu0 0
    %4220 = vmatpush1.bf16.msra.mxu0 0
    %4221 = vmatprep.subr.bf16.mxu0 0
    %4222 = vmatpush1.bf16.msra.mxu0 0
    %4223 = vmatprep.mubr.bf16.mxu0 0
    %4224 = vmatmul.mubr.bf16.gmra.mrb[0].mxu0 %v4119
    %v4225 = vpop.f32.mrb[0].mxu0
    %v4226 = vadd.f32 %v4141, %v4225
    %v4227 = vpop.f32.mrb[0].mxu0
    %v4228 = vpop.f32.mrb[0].mxu0
    %v4229 = vpop.f32.mrb[0].mxu0
    %4230 = vdwg.mxu0
    %v4231 = vmax.f32 %v4226, 0.0
    %v4232 = vpack.c.bf16 %v4231, %v4231
    %v4233 = vld [vmem:[#allocation20] sm:$0xf]
    %v4234 = vld [vmem:[#allocation20 + $0x4] sm:$0xf]
    %v4235 = vld [vmem:[#allocation20 + $0x8] sm:$0xf]
    %v4236 = vld [vmem:[#allocation20 + $0xc] sm:$0xf]
    %v4237 = vld [vmem:[#allocation21] sm:$0x1]
    %v4239 = vlaneseq
    %v4240 = vshrl.u32 %v4239, 7
    %v4241 = vsub.s32 0, %v4240
    %v4242 = vrot.slane %v4237, %v4241
    %v4248 = vunpack.c.l.b16 %v4233
    %v4249 = vunpack.c.l.b16 %v4234
    %v4250 = vunpack.c.l.b16 %v4235
    %v4251 = vunpack.c.l.b16 %v4236
    %v4252 = vpack.c.b16 %v4249, %v4248
    %v4253 = vpack.c.b16 %v4251, %v4250
    %vm4256 = vcmask 261120
    %v4258 = vsel %vm4256, %v4232, 0
    %4260 = vmatprep.subr.bf16.mxu0 0
    %4261 = vmatpush1.bf16.msra.mxu0 %v4252
    %4262 = vmatprep.subr.bf16.mxu0 0
    %4263 = vmatpush1.bf16.msra.mxu0 %v4253
    %4264 = vmatprep.subr.bf16.mxu0 0
    %4265 = vmatpush1.bf16.msra.mxu0 0
    %4266 = vmatprep.subr.bf16.mxu0 0
    %4267 = vmatpush1.bf16.msra.mxu0 0
    %4268 = vmatprep.subr.bf16.mxu0 0
    %4269 = vmatpush1.bf16.msra.mxu0 0
    %4270 = vmatprep.subr.bf16.mxu0 0
    %4271 = vmatpush1.bf16.msra.mxu0 0
    %4272 = vmatprep.subr.bf16.mxu0 0
    %4273 = vmatpush1.bf16.msra.mxu0 0
    %4274 = vmatprep.subr.bf16.mxu0 0
    %4275 = vmatpush1.bf16.msra.mxu0 0
    %4276 = vmatprep.subr.bf16.mxu0 0
    %4277 = vmatpush1.bf16.msra.mxu0 0
    %4278 = vmatprep.subr.bf16.mxu0 0
    %4279 = vmatpush1.bf16.msra.mxu0 0
    %4280 = vmatprep.subr.bf16.mxu0 0
    %4281 = vmatpush1.bf16.msra.mxu0 0
    %4282 = vmatprep.subr.bf16.mxu0 0
    %4283 = vmatpush1.bf16.msra.mxu0 0
    %4284 = vmatprep.subr.bf16.mxu0 0
    %4285 = vmatpush1.bf16.msra.mxu0 0
    %4286 = vmatprep.subr.bf16.mxu0 0
    %4287 = vmatpush1.bf16.msra.mxu0 0
    %4288 = vmatprep.subr.bf16.mxu0 0
    %4289 = vmatpush1.bf16.msra.mxu0 0
    %4290 = vmatprep.subr.bf16.mxu0 0
    %4291 = vmatpush1.bf16.msra.mxu0 0
    %4292 = vmatprep.mubr.bf16.mxu0 0
    %4293 = vmatmul.mubr.bf16.gmra.mrb[0].mxu0 %v4258
    %v4294 = vpop.f32.mrb[0].mxu0
    %v4295 = vadd.f32 %v4242, %v4294
    %v4296 = vpop.f32.mrb[0].mxu0
    %v4297 = vpop.f32.mrb[0].mxu0
    %v4298 = vpop.f32.mrb[0].mxu0
    %4299 = vdwg.mxu0
    %v4300 = vmax.f32 %v4295, 0.0
    %v4301 = vpack.c.bf16 %v4300, %v4300
    %v4302 = vld [vmem:[#allocation23] sm:$0xf]
    %v4303 = vld [vmem:[#allocation23 + $0x4] sm:$0xf]
    %v4304 = vld [vmem:[#allocation23 + $0x8] sm:$0xf]
    %v4305 = vld [vmem:[#allocation23 + $0xc] sm:$0xf]
    %v4306 = vld [vmem:[#allocation24] sm:$0x1]
    %v4308 = vlaneseq
    %v4309 = vshrl.u32 %v4308, 7
    %v4310 = vsub.s32 0, %v4309
    %v4311 = vrot.slane %v4306, %v4310
    %v4317 = vunpack.c.l.b16 %v4302
    %v4318 = vunpack.c.l.b16 %v4303
    %v4319 = vunpack.c.l.b16 %v4304
    %v4320 = vunpack.c.l.b16 %v4305
    %v4321 = vpack.c.b16 %v4318, %v4317
    %v4322 = vpack.c.b16 %v4320, %v4319
    %v4326 = vsel %vm4256, %v4301, 0
    %4328 = vmatprep.subr.bf16.mxu0 0
    %4329 = vmatpush1.bf16.msra.mxu0 %v4321
    %4330 = vmatprep.subr.bf16.mxu0 0
    %4331 = vmatpush1.bf16.msra.mxu0 %v4322
    %4332 = vmatprep.subr.bf16.mxu0 0
    %4333 = vmatpush1.bf16.msra.mxu0 0
    %4334 = vmatprep.subr.bf16.mxu0 0
    %4335 = vmatpush1.bf16.msra.mxu0 0
    %4336 = vmatprep.subr.bf16.mxu0 0
    %4337 = vmatpush1.bf16.msra.mxu0 0
    %4338 = vmatprep.subr.bf16.mxu0 0
    %4339 = vmatpush1.bf16.msra.mxu0 0
    %4340 = vmatprep.subr.bf16.mxu0 0
    %4341 = vmatpush1.bf16.msra.mxu0 0
    %4342 = vmatprep.subr.bf16.mxu0 0
    %4343 = vmatpush1.bf16.msra.mxu0 0
    %4344 = vmatprep.subr.bf16.mxu0 0
    %4345 = vmatpush1.bf16.msra.mxu0 0
    %4346 = vmatprep.subr.bf16.mxu0 0
    %4347 = vmatpush1.bf16.msra.mxu0 0
    %4348 = vmatprep.subr.bf16.mxu0 0
    %4349 = vmatpush1.bf16.msra.mxu0 0
    %4350 = vmatprep.subr.bf16.mxu0 0
    %4351 = vmatpush1.bf16.msra.mxu0 0
    %4352 = vmatprep.subr.bf16.mxu0 0
    %4353 = vmatpush1.bf16.msra.mxu0 0
    %4354 = vmatprep.subr.bf16.mxu0 0
    %4355 = vmatpush1.bf16.msra.mxu0 0
    %4356 = vmatprep.subr.bf16.mxu0 0
    %4357 = vmatpush1.bf16.msra.mxu0 0
    %4358 = vmatprep.subr.bf16.mxu0 0
    %4359 = vmatpush1.bf16.msra.mxu0 0
    %4360 = vmatprep.mubr.bf16.mxu0 0
    %4361 = vmatmul.mubr.bf16.gmra.mrb[0].mxu0 %v4326
    %v4362 = vpop.f32.mrb[0].mxu0
    %v4363 = vadd.f32 %v4311, %v4362
    %v4364 = vpop.f32.mrb[0].mxu0
    %v4365 = vpop.f32.mrb[0].mxu0
    %v4366 = vpop.f32.mrb[0].mxu0
    %4367 = vdwg.mxu0
    %v4368 = vmax.f32 %v4363, 0.0
    %4370 = vrot.lane.b32.xlu0 %v4368, 32
    %v4371 = vpop.permute.xlu0 %4370
    %vm4373 = vcmask 523520
    %4374 = vst.msk [vmem:[#allocation2] sm:$0xff] %vm4373, %v4371
    %v4375 = vld [vmem:[#allocation2] sm:$0xff]
    %v4376 = vpack.c.bf16 %v4375, %v4375
    %v4377 = vld [vmem:[%s17] sm:$0xf]
    %v4378 = vld [vmem:[%s17 + $0x4] sm:$0xf]
    %v4379 = vld [vmem:[%s17 + $0x8] sm:$0xf]
    %v4380 = vld [vmem:[%s17 + $0xc] sm:$0xf]
    %v4381 = vld [vmem:[%s17 + $0x10] sm:$0xf]
    %v4382 = vld [vmem:[%s17 + $0x14] sm:$0xf]
    %v4383 = vld [vmem:[%s17 + $0x18] sm:$0xf]
    %v4384 = vld [vmem:[%s17 + $0x1c] sm:$0xf]
    %v4385 = vld [vmem:[%s17 + $0x20] sm:$0xf]
    %v4386 = vld [vmem:[%s17 + $0x24] sm:$0xf]
    %v4387 = vld [vmem:[%s17 + $0x28] sm:$0xf]
    %v4388 = vld [vmem:[%s17 + $0x2c] sm:$0xf]
    %v4389 = vld [vmem:[%s17 + $0x30] sm:$0xf]
    %v4390 = vld [vmem:[%s17 + $0x34] sm:$0xf]
    %v4391 = vld [vmem:[%s17 + $0x38] sm:$0xf]
    %v4392 = vld [vmem:[%s17 + $0x3c] sm:$0xf]
    %v4393 = vld [vmem:[#allocation26] sm:$0x1]
    %v4395 = vlaneseq
    %v4396 = vshrl.u32 %v4395, 7
    %v4397 = vsub.s32 0, %v4396
    %v4398 = vrot.slane %v4393, %v4397
    %v4416 = vunpack.c.l.b16 %v4377
    %v4417 = vunpack.c.l.b16 %v4378
    %v4418 = vunpack.c.l.b16 %v4379
    %v4419 = vunpack.c.l.b16 %v4380
    %v4420 = vunpack.c.l.b16 %v4381
    %v4421 = vunpack.c.l.b16 %v4382
    %v4422 = vunpack.c.l.b16 %v4383
    %v4423 = vunpack.c.l.b16 %v4384
    %v4424 = vunpack.c.l.b16 %v4385
    %v4425 = vunpack.c.l.b16 %v4386
    %v4426 = vunpack.c.l.b16 %v4387
    %v4427 = vunpack.c.l.b16 %v4388
    %v4428 = vunpack.c.l.b16 %v4389
    %v4429 = vunpack.c.l.b16 %v4390
    %v4430 = vunpack.c.l.b16 %v4391
    %v4431 = vunpack.c.l.b16 %v4392
    %v4432 = vpack.c.b16 %v4417, %v4416
    %v4433 = vpack.c.b16 %v4419, %v4418
    %v4434 = vpack.c.b16 %v4421, %v4420
    %v4435 = vpack.c.b16 %v4423, %v4422
    %v4436 = vpack.c.b16 %v4425, %v4424
    %v4437 = vpack.c.b16 %v4427, %v4426
    %v4438 = vpack.c.b16 %v4429, %v4428
    %v4439 = vpack.c.b16 %v4431, %v4430
    %4448 = vmatprep.subr.bf16.mxu0 0
    %4449 = vmatpush1.bf16.msra.mxu0 %v4432
    %4450 = vmatprep.subr.bf16.mxu0 0
    %4451 = vmatpush1.bf16.msra.mxu0 %v4433
    %4452 = vmatprep.subr.bf16.mxu0 0
    %4453 = vmatpush1.bf16.msra.mxu0 %v4434
    %4454 = vmatprep.subr.bf16.mxu0 0
    %4455 = vmatpush1.bf16.msra.mxu0 %v4435
    %4456 = vmatprep.subr.bf16.mxu0 0
    %4457 = vmatpush1.bf16.msra.mxu0 %v4436
    %4458 = vmatprep.subr.bf16.mxu0 0
    %4459 = vmatpush1.bf16.msra.mxu0 %v4437
    %4460 = vmatprep.subr.bf16.mxu0 0
    %4461 = vmatpush1.bf16.msra.mxu0 %v4438
    %4462 = vmatprep.subr.bf16.mxu0 0
    %4463 = vmatpush1.bf16.msra.mxu0 %v4439
    %4464 = vmatprep.subr.bf16.mxu0 0
    %4465 = vmatpush1.bf16.msra.mxu0 0
    %4466 = vmatprep.subr.bf16.mxu0 0
    %4467 = vmatpush1.bf16.msra.mxu0 0
    %4468 = vmatprep.subr.bf16.mxu0 0
    %4469 = vmatpush1.bf16.msra.mxu0 0
    %4470 = vmatprep.subr.bf16.mxu0 0
    %4471 = vmatpush1.bf16.msra.mxu0 0
    %4472 = vmatprep.subr.bf16.mxu0 0
    %4473 = vmatpush1.bf16.msra.mxu0 0
    %4474 = vmatprep.subr.bf16.mxu0 0
    %4475 = vmatpush1.bf16.msra.mxu0 0
    %4476 = vmatprep.subr.bf16.mxu0 0
    %4477 = vmatpush1.bf16.msra.mxu0 0
    %4478 = vmatprep.subr.bf16.mxu0 0
    %4479 = vmatpush1.bf16.msra.mxu0 0
    %4480 = vmatprep.mubr.bf16.mxu0 0
    %4481 = vmatmul.mubr.bf16.gmra.mrb[0].mxu0 %v4376
    %v4482 = vpop.f32.mrb[0].mxu0
    %v4483 = vadd.f32 %v4398, %v4482
    %v4484 = vpop.f32.mrb[0].mxu0
    %v4485 = vpop.f32.mrb[0].mxu0
    %v4486 = vpop.f32.mrb[0].mxu0
    %4487 = vdwg.mxu0
    %v4488 = vmax.f32 %v4483, 0.0
    %v4489 = vpack.c.bf16 %v4488, %v4488
    %v4490 = vld [vmem:[#allocation27] sm:$0xf]
    %v4491 = vld [vmem:[#allocation27 + $0x4] sm:$0xf]
    %v4492 = vld [vmem:[#allocation27 + $0x8] sm:$0xf]
    %v4493 = vld [vmem:[#allocation27 + $0xc] sm:$0xf]
    %v4494 = vld [vmem:[#allocation29] sm:$0x1]
    %v4496 = vlaneseq
    %v4497 = vshrl.u32 %v4496, 7
    %v4498 = vsub.s32 0, %v4497
    %v4499 = vrot.slane %v4494, %v4498
    %v4505 = vunpack.c.l.b16 %v4490
    %v4506 = vunpack.c.l.b16 %v4491
    %v4507 = vunpack.c.l.b16 %v4492
    %v4508 = vunpack.c.l.b16 %v4493
    %v4509 = vpack.c.b16 %v4506, %v4505
    %v4510 = vpack.c.b16 %v4508, %v4507
    %v4514 = vsel %vm4256, %v4489, 0
    %4516 = vmatprep.subr.bf16.mxu0 0
    %4517 = vmatpush1.bf16.msra.mxu0 %v4509
    %4518 = vmatprep.subr.bf16.mxu0 0
    %4519 = vmatpush1.bf16.msra.mxu0 %v4510
    %4520 = vmatprep.subr.bf16.mxu0 0
    %4521 = vmatpush1.bf16.msra.mxu0 0
    %4522 = vmatprep.subr.bf16.mxu0 0
    %4523 = vmatpush1.bf16.msra.mxu0 0
    %4524 = vmatprep.subr.bf16.mxu0 0
    %4525 = vmatpush1.bf16.msra.mxu0 0
    %4526 = vmatprep.subr.bf16.mxu0 0
    %4527 = vmatpush1.bf16.msra.mxu0 0
    %4528 = vmatprep.subr.bf16.mxu0 0
    %4529 = vmatpush1.bf16.msra.mxu0 0
    %4530 = vmatprep.subr.bf16.mxu0 0
    %4531 = vmatpush1.bf16.msra.mxu0 0
    %4532 = vmatprep.subr.bf16.mxu0 0
    %4533 = vmatpush1.bf16.msra.mxu0 0
    %4534 = vmatprep.subr.bf16.mxu0 0
    %4535 = vmatpush1.bf16.msra.mxu0 0
    %4536 = vmatprep.subr.bf16.mxu0 0
    %4537 = vmatpush1.bf16.msra.mxu0 0
    %4538 = vmatprep.subr.bf16.mxu0 0
    %4539 = vmatpush1.bf16.msra.mxu0 0
    %4540 = vmatprep.subr.bf16.mxu0 0
    %4541 = vmatpush1.bf16.msra.mxu0 0
    %4542 = vmatprep.subr.bf16.mxu0 0
    %4543 = vmatpush1.bf16.msra.mxu0 0
    %4544 = vmatprep.subr.bf16.mxu0 0
    %4545 = vmatpush1.bf16.msra.mxu0 0
    %4546 = vmatprep.subr.bf16.mxu0 0
    %4547 = vmatpush1.bf16.msra.mxu0 0
    %4548 = vmatprep.mubr.bf16.mxu0 0
    %4549 = vmatmul.mubr.bf16.gmra.mrb[0].mxu0 %v4514
    %v4550 = vpop.f32.mrb[0].mxu0
    %v4551 = vadd.f32 %v4499, %v4550
    %v4552 = vpop.f32.mrb[0].mxu0
    %v4553 = vpop.f32.mrb[0].mxu0
    %v4554 = vpop.f32.mrb[0].mxu0
    %4555 = vdwg.mxu0
    %v4556 = vmax.f32 %v4551, 0.0
    %v4557 = vpack.c.bf16 %v4556, %v4556
    %v4558 = vld [vmem:[#allocation30] sm:$0xf]
    %v4559 = vld [vmem:[#allocation30 + $0x4] sm:$0xf]
    %v4560 = vld [vmem:[#allocation30 + $0x8] sm:$0xf]
    %v4561 = vld [vmem:[#allocation30 + $0xc] sm:$0xf]
    %v4562 = vld [vmem:[#allocation32] sm:$0x1]
    %v4564 = vlaneseq
    %v4565 = vshrl.u32 %v4564, 7
    %v4566 = vsub.s32 0, %v4565
    %v4567 = vrot.slane %v4562, %v4566
    %v4573 = vunpack.c.l.b16 %v4558
    %v4574 = vunpack.c.l.b16 %v4559
    %v4575 = vunpack.c.l.b16 %v4560
    %v4576 = vunpack.c.l.b16 %v4561
    %v4577 = vpack.c.b16 %v4574, %v4573
    %v4578 = vpack.c.b16 %v4576, %v4575
    %v4582 = vsel %vm4256, %v4557, 0
    %4584 = vmatprep.subr.bf16.mxu0 0
    %4585 = vmatpush1.bf16.msra.mxu0 %v4577
    %4586 = vmatprep.subr.bf16.mxu0 0
    %4587 = vmatpush1.bf16.msra.mxu0 %v4578
    %4588 = vmatprep.subr.bf16.mxu0 0
    %4589 = vmatpush1.bf16.msra.mxu0 0
    %4590 = vmatprep.subr.bf16.mxu0 0
    %4591 = vmatpush1.bf16.msra.mxu0 0
    %4592 = vmatprep.subr.bf16.mxu0 0
    %4593 = vmatpush1.bf16.msra.mxu0 0
    %4594 = vmatprep.subr.bf16.mxu0 0
    %4595 = vmatpush1.bf16.msra.mxu0 0
    %4596 = vmatprep.subr.bf16.mxu0 0
    %4597 = vmatpush1.bf16.msra.mxu0 0
    %4598 = vmatprep.subr.bf16.mxu0 0
    %4599 = vmatpush1.bf16.msra.mxu0 0
    %4600 = vmatprep.subr.bf16.mxu0 0
    %4601 = vmatpush1.bf16.msra.mxu0 0
    %4602 = vmatprep.subr.bf16.mxu0 0
    %4603 = vmatpush1.bf16.msra.mxu0 0
    %4604 = vmatprep.subr.bf16.mxu0 0
    %4605 = vmatpush1.bf16.msra.mxu0 0
    %4606 = vmatprep.subr.bf16.mxu0 0
    %4607 = vmatpush1.bf16.msra.mxu0 0
    %4608 = vmatprep.subr.bf16.mxu0 0
    %4609 = vmatpush1.bf16.msra.mxu0 0
    %4610 = vmatprep.subr.bf16.mxu0 0
    %4611 = vmatpush1.bf16.msra.mxu0 0
    %4612 = vmatprep.subr.bf16.mxu0 0
    %4613 = vmatpush1.bf16.msra.mxu0 0
    %4614 = vmatprep.subr.bf16.mxu0 0
    %4615 = vmatpush1.bf16.msra.mxu0 0
    %4616 = vmatprep.mubr.bf16.mxu0 0
    %4617 = vmatmul.mubr.bf16.gmra.mrb[0].mxu0 %v4582
    %v4618 = vpop.f32.mrb[0].mxu0
    %v4619 = vadd.f32 %v4567, %v4618
    %v4620 = vpop.f32.mrb[0].mxu0
    %v4621 = vpop.f32.mrb[0].mxu0
    %v4622 = vpop.f32.mrb[0].mxu0
    %4623 = vdwg.mxu0
    %v4624 = vmax.f32 %v4619, 0.0
    %4625 = vst.msk [vmem:[#allocation2] sm:$0xff] %vm4256, %v4624
    %v4626 = vld [vmem:[#allocation2] sm:$0xff]
    %v4627 = vpack.c.bf16 %v4626, %v4626
    %v4628 = vld [vmem:[%s23] sm:$0xf]
    %v4629 = vld [vmem:[%s23 + $0x4] sm:$0xf]
    %v4630 = vld [vmem:[%s23 + $0x8] sm:$0xf]
    %v4631 = vld [vmem:[%s23 + $0xc] sm:$0xf]
    %v4632 = vld [vmem:[%s23 + $0x10] sm:$0xf]
    %v4633 = vld [vmem:[%s23 + $0x14] sm:$0xf]
    %v4634 = vld [vmem:[%s23 + $0x18] sm:$0xf]
    %v4635 = vld [vmem:[%s23 + $0x1c] sm:$0xf]
    %v4636 = vld [vmem:[%s23 + $0x20] sm:$0xf]
    %v4637 = vld [vmem:[%s23 + $0x24] sm:$0xf]
    %v4638 = vld [vmem:[%s23 + $0x28] sm:$0xf]
    %v4639 = vld [vmem:[%s23 + $0x2c] sm:$0xf]
    %v4640 = vld [vmem:[%s23 + $0x30] sm:$0xf]
    %v4641 = vld [vmem:[%s23 + $0x34] sm:$0xf]
    %v4642 = vld [vmem:[%s23 + $0x38] sm:$0xf]
    %v4643 = vld [vmem:[%s23 + $0x3c] sm:$0xf]
    %v4644 = vld [vmem:[#allocation33] sm:$0x1]
    %v4646 = vlaneseq
    %v4647 = vshrl.u32 %v4646, 7
    %v4648 = vsub.s32 0, %v4647
    %v4649 = vrot.slane %v4644, %v4648
    %v4667 = vunpack.c.l.b16 %v4628
    %v4668 = vunpack.c.l.b16 %v4629
    %v4669 = vunpack.c.l.b16 %v4630
    %v4670 = vunpack.c.l.b16 %v4631
    %v4671 = vunpack.c.l.b16 %v4632
    %v4672 = vunpack.c.l.b16 %v4633
    %v4673 = vunpack.c.l.b16 %v4634
    %v4674 = vunpack.c.l.b16 %v4635
    %v4675 = vunpack.c.l.b16 %v4636
    %v4676 = vunpack.c.l.b16 %v4637
    %v4677 = vunpack.c.l.b16 %v4638
    %v4678 = vunpack.c.l.b16 %v4639
    %v4679 = vunpack.c.l.b16 %v4640
    %v4680 = vunpack.c.l.b16 %v4641
    %v4681 = vunpack.c.l.b16 %v4642
    %v4682 = vunpack.c.l.b16 %v4643
    %v4683 = vpack.c.b16 %v4668, %v4667
    %v4684 = vpack.c.b16 %v4670, %v4669
    %v4685 = vpack.c.b16 %v4672, %v4671
    %v4686 = vpack.c.b16 %v4674, %v4673
    %v4687 = vpack.c.b16 %v4676, %v4675
    %v4688 = vpack.c.b16 %v4678, %v4677
    %v4689 = vpack.c.b16 %v4680, %v4679
    %v4690 = vpack.c.b16 %v4682, %v4681
    %4699 = vmatprep.subr.bf16.mxu0 0
    %4700 = vmatpush1.bf16.msra.mxu0 %v4683
    %4701 = vmatprep.subr.bf16.mxu0 0
    %4702 = vmatpush1.bf16.msra.mxu0 %v4684
    %4703 = vmatprep.subr.bf16.mxu0 0
    %4704 = vmatpush1.bf16.msra.mxu0 %v4685
    %4705 = vmatprep.subr.bf16.mxu0 0
    %4706 = vmatpush1.bf16.msra.mxu0 %v4686
    %4707 = vmatprep.subr.bf16.mxu0 0
    %4708 = vmatpush1.bf16.msra.mxu0 %v4687
    %4709 = vmatprep.subr.bf16.mxu0 0
    %4710 = vmatpush1.bf16.msra.mxu0 %v4688
    %4711 = vmatprep.subr.bf16.mxu0 0
    %4712 = vmatpush1.bf16.msra.mxu0 %v4689
    %4713 = vmatprep.subr.bf16.mxu0 0
    %4714 = vmatpush1.bf16.msra.mxu0 %v4690
    %4715 = vmatprep.subr.bf16.mxu0 0
    %4716 = vmatpush1.bf16.msra.mxu0 0
    %4717 = vmatprep.subr.bf16.mxu0 0
    %4718 = vmatpush1.bf16.msra.mxu0 0
    %4719 = vmatprep.subr.bf16.mxu0 0
    %4720 = vmatpush1.bf16.msra.mxu0 0
    %4721 = vmatprep.subr.bf16.mxu0 0
    %4722 = vmatpush1.bf16.msra.mxu0 0
    %4723 = vmatprep.subr.bf16.mxu0 0
    %4724 = vmatpush1.bf16.msra.mxu0 0
    %4725 = vmatprep.subr.bf16.mxu0 0
    %4726 = vmatpush1.bf16.msra.mxu0 0
    %4727 = vmatprep.subr.bf16.mxu0 0
    %4728 = vmatpush1.bf16.msra.mxu0 0
    %4729 = vmatprep.subr.bf16.mxu0 0
    %4730 = vmatpush1.bf16.msra.mxu0 0
    %4731 = vmatprep.mubr.bf16.mxu0 0
    %4732 = vmatmul.mubr.bf16.gmra.mrb[0].mxu0 %v4627
    %v4733 = vpop.f32.mrb[0].mxu0
    %v4734 = vadd.f32 %v4649, %v4733
    %v4735 = vpop.f32.mrb[0].mxu0
    %v4736 = vpop.f32.mrb[0].mxu0
    %v4737 = vpop.f32.mrb[0].mxu0
    %4738 = vdwg.mxu0
    %v4739 = vmax.f32 %v4734, 0.0
    %v4740 = vpack.c.bf16 %v4739, %v4739
    %v4741 = vld [vmem:[#allocation35] sm:$0xf]
    %v4742 = vld [vmem:[#allocation35 + $0x4] sm:$0xf]
    %v4743 = vld [vmem:[#allocation35 + $0x8] sm:$0xf]
    %v4744 = vld [vmem:[#allocation35 + $0xc] sm:$0xf]
    %v4745 = vld [vmem:[#allocation36] sm:$0x1]
    %v4747 = vlaneseq
    %v4748 = vshrl.u32 %v4747, 7
    %v4749 = vsub.s32 0, %v4748
    %v4750 = vrot.slane %v4745, %v4749
    %v4756 = vunpack.c.l.b16 %v4741
    %v4757 = vunpack.c.l.b16 %v4742
    %v4758 = vunpack.c.l.b16 %v4743
    %v4759 = vunpack.c.l.b16 %v4744
    %v4760 = vpack.c.b16 %v4757, %v4756
    %v4761 = vpack.c.b16 %v4759, %v4758
    %v4765 = vsel %vm4256, %v4740, 0
    %4767 = vmatprep.subr.bf16.mxu0 0
    %4768 = vmatpush1.bf16.msra.mxu0 %v4760
    %4769 = vmatprep.subr.bf16.mxu0 0
    %4770 = vmatpush1.bf16.msra.mxu0 %v4761
    %4771 = vmatprep.subr.bf16.mxu0 0
    %4772 = vmatpush1.bf16.msra.mxu0 0
    %4773 = vmatprep.subr.bf16.mxu0 0
    %4774 = vmatpush1.bf16.msra.mxu0 0
    %4775 = vmatprep.subr.bf16.mxu0 0
    %4776 = vmatpush1.bf16.msra.mxu0 0
    %4777 = vmatprep.subr.bf16.mxu0 0
    %4778 = vmatpush1.bf16.msra.mxu0 0
    %4779 = vmatprep.subr.bf16.mxu0 0
    %4780 = vmatpush1.bf16.msra.mxu0 0
    %4781 = vmatprep.subr.bf16.mxu0 0
    %4782 = vmatpush1.bf16.msra.mxu0 0
    %4783 = vmatprep.subr.bf16.mxu0 0
    %4784 = vmatpush1.bf16.msra.mxu0 0
    %4785 = vmatprep.subr.bf16.mxu0 0
    %4786 = vmatpush1.bf16.msra.mxu0 0
    %4787 = vmatprep.subr.bf16.mxu0 0
    %4788 = vmatpush1.bf16.msra.mxu0 0
    %4789 = vmatprep.subr.bf16.mxu0 0
    %4790 = vmatpush1.bf16.msra.mxu0 0
    %4791 = vmatprep.subr.bf16.mxu0 0
    %4792 = vmatpush1.bf16.msra.mxu0 0
    %4793 = vmatprep.subr.bf16.mxu0 0
    %4794 = vmatpush1.bf16.msra.mxu0 0
    %4795 = vmatprep.subr.bf16.mxu0 0
    %4796 = vmatpush1.bf16.msra.mxu0 0
    %4797 = vmatprep.subr.bf16.mxu0 0
    %4798 = vmatpush1.bf16.msra.mxu0 0
    %4799 = vmatprep.mubr.bf16.mxu0 0
    %4800 = vmatmul.mubr.bf16.gmra.mrb[0].mxu0 %v4765
    %v4801 = vpop.f32.mrb[0].mxu0
    %v4802 = vadd.f32 %v4750, %v4801
    %v4803 = vpop.f32.mrb[0].mxu0
    %v4804 = vpop.f32.mrb[0].mxu0
    %v4805 = vpop.f32.mrb[0].mxu0
    %4806 = vdwg.mxu0
    %4807 = vst [vmem:[#allocation38] sm:$0xff] %v4802
    // Predicated region
    $region198: #{tpu_custom_call.1} parent=1 // pred_check
      _
    $region199: #{tpu_custom_call.1} parent=1 // pred_check_branch
      %4809 = sbr.rel (0) target = $region201
    $region200: #{tpu_custom_call.1} parent=1 // pred_region
      %s4811 = ssub.s32 128, 128
      %4812 = vsyncadd [#allocation5], %s4811
      %s4814 = sshll.u32 [#allocation38], 4
      %s4815 = int_to_ptr.vmem [resolvable:$true] %s4814
      %4817 = dma.vmem_to_hbm [thread:$0]  %s4815, 128, %s27, [#allocation5]
    $region201: #{tpu_custom_call.1} parent=1 // pred_fallthru
      _
    // Predicated region
    $region202: #{tpu_custom_call.1} parent=1 // pred_check
      _
    $region203: #{tpu_custom_call.1} parent=1 // pred_check_branch
      %4819 = sbr.rel (0) target = $region205
    $region204: #{tpu_custom_call.1} parent=1 // pred_region
      %4820 = dma.done [#allocation5], 128
    $region205: #{tpu_custom_call.1} parent=1 // pred_fallthru
      _
    %4821 = vsyncpa [#allocation4], 1
    %4822 = vsyncpa [#allocation7], 1
    %4823 = vsyncpa [#allocation10], 1
    %4824 = vsyncpa [#allocation13], 1
    %4825 = vsyncpa [#allocation16], 1
    %4826 = vsyncpa [#allocation19], 1
    %4827 = vsyncpa [#allocation22], 1
    %4828 = vsyncpa [#allocation25], 1
    %4829 = vsyncpa [#allocation28], 1
    %4830 = vsyncpa [#allocation31], 1
    %4831 = vsyncpa [#allocation34], 1
    %4832 = vsyncpa [#allocation37], 1
    %4833 = vsyncpa [#allocation5], 1

</llo_original>
